<compile_context>
chip_gen: v5e
topology: v5e:2x2
jax: 0.10.0
libtpu: 0.0.40
codegen_flags: <defaults>
</compile_context>

<pallas_src>
import numpy as np

import jax
import jax.numpy as jnp
from jax.experimental import pallas as pl
from jax.experimental.pallas import tpu as pltpu


# ----------------------------------------------------------------------------
# Fused Pallas kernel: entire Encoder forward, single grid step, VMEM-resident
# ----------------------------------------------------------------------------
def _encoder_fused_kernel(xcol_ref, gd_ref, avg_ref,
                          w0_ref, b0_ref, w1_ref, b1_ref, w2_ref, b2_ref,
                          gamma_ref, beta_ref,
                          o_ref,
                          zcat_ref, t0_ref, t1_ref):
    f32 = jnp.float32
    bf16 = jnp.bfloat16
    n_tap = gd_ref.shape[0]                  # 9
    c0 = w0_ref.shape[1]                     # stem channels (16)
    c1 = w1_ref.shape[1]                     # dense-layer-1 growth (8)
    c2 = w2_ref.shape[1]                     # dense-layer-2 growth (8)
    ctot = zcat_ref.shape[1]                 # c0 + c1 + c2 (32)

    def mm(a, b):
        return jnp.dot(a, b, preferred_element_type=f32)

    # ---- stem conv: 3x3, stride 2, pad 1, via wrapper-side im2col ----------
    y0 = jnp.maximum(mm(xcol_ref[...], w0_ref[...]) + b0_ref[...], 0.0)   # (m, c0)

    # zcat accumulates [y0 | y1 | y2] lane-dense; zero-init so the not-yet-
    # written y2 columns are exact zeros for the layer-2 gather below.
    zcat_ref[...] = jnp.zeros_like(zcat_ref)
    zcat_ref[:, 0:c0] = y0

    # ---- dense layer 1: gather 9 taps of y0, stack along K, one fat dot ----
    y0_bf = y0.astype(bf16)
    for t in range(n_tap):
        t0_ref[:, t * c0:(t + 1) * c0] = mm(gd_ref[t], y0_bf)
    y1 = jnp.maximum(mm(t0_ref[...], w1_ref[...]) + b1_ref[...], 0.0)     # (m, c1)
    zcat_ref[:, c0:c0 + c1] = y1

    # ---- dense layer 2: gather concat(y0, y1) (zero-padded to ctot lanes)
    # once per tap, stack along K, one fat dot (weight rows for the pad/y2
    # slots are zero, so the result equals the conv over concat([y0, y1])).
    y01_bf = zcat_ref[...].astype(bf16)                                   # (m, ctot)
    for t in range(n_tap):
        t1_ref[:, t * ctot:(t + 1) * ctot] = mm(gd_ref[t], y01_bf)
    y2 = jnp.maximum(mm(t1_ref[...], w2_ref[...]) + b2_ref[...], 0.0)     # (m, c2)
    zcat_ref[:, c0 + c1:c0 + c1 + c2] = y2

    # ---- norm5 affine + F.relu + avg_pool2d(7) + view(B, -1): one dot,
    # ---- one lane-dense store --------------------------------------------
    z = jnp.maximum(zcat_ref[...] * gamma_ref[...] + beta_ref[...], 0.0)  # (m, ctot)
    o_ref[...] = mm(avg_ref[...], z).astype(o_ref.dtype)                  # (B, ctot)


# ----------------------------------------------------------------------------
# Trace-time constants: per-tap shift matrices and the average-pool matrix
# ----------------------------------------------------------------------------
def _shift_matrices(batch, h_in, w_in, h_out, w_out, stride, pad):
    """(9, B*h_out*w_out, B*h_in*w_in) 0/1 gather matrices, one per 3x3 tap.

    Row r=(b,ho,wo) of tap t=(i,j) picks input (b, ho*stride-pad+i,
    wo*stride-pad+j), or is all-zero when that element lies in the zero pad.
    Block-diagonal over the batch.  Tap order is (kh, kw) row-major.
    """
    n_in = batch * h_in * w_in
    n_out = batch * h_out * w_out
    g = np.zeros((9, n_out, n_in), np.float32)
    for t in range(9):
        i, j = divmod(t, 3)
        for b in range(batch):
            for ho in range(h_out):
                hi = ho * stride - pad + i
                if hi < 0 or hi >= h_in:
                    continue
                for wo in range(w_out):
                    wi = wo * stride - pad + j
                    if wi < 0 or wi >= w_in:
                        continue
                    g[t, (b * h_out + ho) * w_out + wo,
                         (b * h_in + hi) * w_in + wi] = 1.0
    return g


def _avg_pool_matrix(batch, hw):
    """(B, B*hw) matrix whose matmul computes the per-sample spatial mean."""
    a = np.zeros((batch, batch * hw), np.float32)
    for b in range(batch):
        a[b, b * hw:(b + 1) * hw] = 1.0 / hw
    return a


def _stem_im2col(x_nchw, h_out, w_out):
    """Wrapper-side im2col for the 3x3 / stride-2 / pad-1 stem conv.

    Returns (B*h_out*w_out, 9*Cin) with column order (tap row-major, cin),
    matching the (3,3,cin,cout)->(9*cin,cout) weight reshape.
    """
    B = x_nchw.shape[0]
    x_nhwc = jnp.transpose(x_nchw, (0, 2, 3, 1)).astype(jnp.float32)
    xp = jnp.pad(x_nhwc, ((0, 0), (1, 1), (1, 1), (0, 0)))
    cols = []
    for i in range(3):
        for j in range(3):
            cols.append(xp[:, i:i + 2 * h_out - 1:2, j:j + 2 * w_out - 1:2, :])
    cat = jnp.concatenate(cols, axis=-1)                 # (B, Ho, Wo, 9*Cin)
    return cat.reshape(B * h_out * w_out, cat.shape[-1])


# ----------------------------------------------------------------------------
# Wrapper
# ----------------------------------------------------------------------------
def _vmem_full(shape):
    """Whole-array VMEM block (the grid has a single step)."""
    nd = len(shape)

    def idx(i):
        return (0,) * nd

    return pl.BlockSpec(shape, idx)


@jax.jit
def encoder_forward(x_nchw, params):
    B, Cin, H, W = x_nchw.shape
    # stem conv geometry: 3x3, stride 2, pad 1
    Ho = (H + 2 - 3) // 2 + 1
    Wo = (W + 2 - 3) // 2 + 1
    m = B * Ho * Wo

    # Tiny wrapper-side im2col replaces the former (9, m, B*H*W) shift matrices.
    xcol = _stem_im2col(x_nchw, Ho, Wo)                                   # (m, 9*Cin)

    # Constants baked at trace time.  The 0/1 gather matrices are exact in bf16.
    gd = jnp.asarray(_shift_matrices(B, Ho, Wo, Ho, Wo, stride=1, pad=1),
                     dtype=jnp.bfloat16)                                  # (9, m, m)
    avg = jnp.asarray(_avg_pool_matrix(B, Ho * Wo))                       # (B, m)

    c0 = params["w_stem"].shape[1]
    c1 = params["w_d1"].shape[1]
    c2 = params["w_d2"].shape[1]
    ctot = params["gamma"].shape[1]          # c0 + c1 + c2

    inputs = (xcol, gd, avg,
              params["w_stem"], params["b_stem"],
              params["w_d1"], params["b_d1"],
              params["w_d2"], params["b_d2"],
              params["gamma"], params["beta"])

    # Advisory scheduling hint for XLA around the custom call.
    flops = (2 * m * xcol.shape[1] * c0
             + 9 * 2 * m * m * c0 + 2 * m * 9 * c0 * c1
             + 9 * 2 * m * m * ctot + 2 * m * 9 * ctot * c2
             + 2 * B * m * ctot)
    bytes_accessed = sum(int(a.size) * jnp.dtype(a.dtype).itemsize for a in inputs) \
        + B * ctot * 4
    cost = pl.CostEstimate(flops=int(flops), transcendentals=0,
                           bytes_accessed=int(bytes_accessed))

    return pl.pallas_call(
        _encoder_fused_kernel,
        out_shape=jax.ShapeDtypeStruct((B, ctot), jnp.float32),
        grid=(1,),                                   # whole network in one grid step
        in_specs=[_vmem_full(a.shape) for a in inputs],
        out_specs=pl.BlockSpec((B, ctot), lambda i: (0, 0)),
        scratch_shapes=[
            pltpu.VMEM((m, ctot), jnp.float32),      # zcat: [y0 | y1 | y2]
            pltpu.VMEM((m, 9 * c0), jnp.float32),    # stacked layer-1 taps
            pltpu.VMEM((m, 9 * ctot), jnp.float32),  # stacked layer-2 taps (padded)
        ],
        compiler_params=pltpu.CompilerParams(dimension_semantics=("arbitrary",)),
        cost_estimate=cost,
    )(*inputs)


# ----------------------------------------------------------------------------
# Pure-JAX f32 reference (same math, unstacked) for a tolerance check.
# ----------------------------------------------------------------------------
def encoder_reference(x_nchw, params):
    B, Cin, H, W = x_nchw.shape
    Ho = (H + 2 - 3) // 2 + 1
    Wo = (W + 2 - 3) // 2 + 1
    m = B * Ho * Wo
    relu = lambda v: jnp.maximum(v, 0.0)

    xcol = _stem_im2col(x_nchw, Ho, Wo)
    gd = jnp.asarray(_shift_matrices(B, Ho, Wo, Ho, Wo, stride=1, pad=1))   # f32
    avg = jnp.asarray(_avg_pool_matrix(B, Ho * Wo))

    c0 = params["w_stem"].shape[1]
    c1 = params["w_d1"].shape[1]
    ctot = params["gamma"].shape[1]

    y0 = relu(xcol @ params["w_stem"] + params["b_stem"])
    t0 = jnp.concatenate([gd[t] @ y0 for t in range(9)], axis=1)
    y1 = relu(t0 @ params["w_d1"] + params["b_d1"])
    y01p = jnp.concatenate(
        [y0, y1, jnp.zeros((m, ctot - c0 - c1), jnp.float32)], axis=1)
    t1 = jnp.concatenate([gd[t] @ y01p for t in range(9)], axis=1)
    y2 = relu(t1 @ params["w_d2"] + params["b_d2"])
    z = relu(jnp.concatenate([y0, y1, y2], axis=1) * params["gamma"] + params["beta"])
    return avg @ z


# ----------------------------------------------------------------------------
# Parameters (deterministic, synthetic — no checkpoint load), kernel-ready
# layout: conv weights flattened to (9*cin, cout); biases / affine as (1, C).
# ----------------------------------------------------------------------------
def init_params(key):
    ks = jax.random.split(key, 8)
    growth, c_stem = 8, 16
    c_total = c_stem + 2 * growth            # 32

    def conv_w(k, kh, kw, cin, cout):
        scale = 1.0 / jnp.sqrt(kh * kw * cin)
        return jax.random.normal(k, (kh, kw, cin, cout), jnp.float32) * scale

    w_stem = conv_w(ks[0], 3, 3, 3, c_stem).reshape(9 * 3, c_stem)              # (27, 16)
    w_d1 = conv_w(ks[2], 3, 3, c_stem, growth).reshape(9 * c_stem, growth)      # (144, 8)
    # layer-2 conv over concat([stem, layer1]); pad per-tap cin to c_total so
    # the stacked slab matches the kernel's ctot-wide gathered taps exactly.
    w_d2 = conv_w(ks[4], 3, 3, c_stem + growth, growth).reshape(9, c_stem + growth, growth)
    w_d2 = jnp.pad(w_d2, ((0, 0), (0, c_total - (c_stem + growth)), (0, 0)))
    w_d2 = w_d2.reshape(9 * c_total, growth)                                    # (288, 8)

    gamma = 1.0 + 0.1 * jax.random.normal(ks[6], (c_total,), jnp.float32)
    beta = 0.1 * jax.random.normal(ks[7], (c_total,), jnp.float32)

    return {
        "w_stem": w_stem,
        "b_stem": (jax.random.normal(ks[1], (c_stem,), jnp.float32) * 0.01).reshape(1, c_stem),
        "w_d1": w_d1,
        "b_d1": (jax.random.normal(ks[3], (growth,), jnp.float32) * 0.01).reshape(1, growth),
        "w_d2": w_d2,
        "b_d2": (jax.random.normal(ks[5], (growth,), jnp.float32) * 0.01).reshape(1, growth),
        # final BatchNorm ("norm5") folded to a per-channel affine
        "gamma": gamma.reshape(1, -1),
        "beta": beta.reshape(1, -1),
    }


# ----------------------------------------------------------------------------
if __name__ == "__main__":
    key = jax.random.PRNGKey(0)
    k_x, k_p = jax.random.split(key)

    # small ImageNet-like input: (batch=2, channels=3, spatial=14x14)
    x = jax.random.normal(k_x, (2, 3, 14, 14), jnp.float32)
    params = init_params(k_p)

    out = jax.block_until_ready(encoder_forward(x, params))

    assert out.shape == (2, 32), out.shape
    assert bool(jnp.all(jnp.isfinite(out)))

    # tolerance check vs the f32 reference (bf16 is only used for the exact
    # 0/1 gather matrices and the activations fed into those gather dots)
    ref = jax.block_until_ready(encoder_reference(x, params))
    np.testing.assert_allclose(np.asarray(out), np.asarray(ref), rtol=0.05, atol=0.02)

    print("KERNEL_OK")
</pallas_src>

<mosaic_0001>
module attributes {stable_mosaic.version = 11 : i64} {
  func.func @_encoder_fused_kernel(%arg0: i32, %arg1: memref<98x27xf32, #tpu.memory_space<vmem>>, %arg2: memref<9x98x98xbf16, #tpu.memory_space<vmem>>, %arg3: memref<2x98xf32, #tpu.memory_space<vmem>>, %arg4: memref<27x16xf32, #tpu.memory_space<vmem>>, %arg5: memref<1x16xf32, #tpu.memory_space<vmem>>, %arg6: memref<144x8xf32, #tpu.memory_space<vmem>>, %arg7: memref<1x8xf32, #tpu.memory_space<vmem>>, %arg8: memref<288x8xf32, #tpu.memory_space<vmem>>, %arg9: memref<1x8xf32, #tpu.memory_space<vmem>>, %arg10: memref<1x32xf32, #tpu.memory_space<vmem>>, %arg11: memref<1x32xf32, #tpu.memory_space<vmem>>, %arg12: memref<2x32xf32, #tpu.memory_space<vmem>>, %arg13: memref<98x32xf32, #tpu.memory_space<vmem>>, %arg14: memref<98x144xf32, #tpu.memory_space<vmem>>, %arg15: memref<98x288xf32, #tpu.memory_space<vmem>>) attributes {dimension_semantics = [#tpu.dimension_semantics<arbitrary>], iteration_bounds = array<i64: 1>, scalar_prefetch = 0 : i64, scratch_operands = 3 : i64, tpu.core_type = #tpu.core_type<tc>, window_params = [{pipeline_mode = #tpu.pipeline_mode<synchronous>, transform_indices = @transform_0, window_bounds = array<i64: 98, 27>}, {pipeline_mode = #tpu.pipeline_mode<synchronous>, transform_indices = @transform_1, window_bounds = array<i64: 9, 98, 98>}, {pipeline_mode = #tpu.pipeline_mode<synchronous>, transform_indices = @transform_2, window_bounds = array<i64: 2, 98>}, {pipeline_mode = #tpu.pipeline_mode<synchronous>, transform_indices = @transform_3, window_bounds = array<i64: 27, 16>}, {pipeline_mode = #tpu.pipeline_mode<synchronous>, transform_indices = @transform_4, window_bounds = array<i64: 1, 16>}, {pipeline_mode = #tpu.pipeline_mode<synchronous>, transform_indices = @transform_5, window_bounds = array<i64: 144, 8>}, {pipeline_mode = #tpu.pipeline_mode<synchronous>, transform_indices = @transform_6, window_bounds = array<i64: 1, 8>}, {pipeline_mode = #tpu.pipeline_mode<synchronous>, transform_indices = @transform_7, window_bounds = array<i64: 288, 8>}, {pipeline_mode = #tpu.pipeline_mode<synchronous>, transform_indices = @transform_8, window_bounds = array<i64: 1, 8>}, {pipeline_mode = #tpu.pipeline_mode<synchronous>, transform_indices = @transform_9, window_bounds = array<i64: 1, 32>}, {pipeline_mode = #tpu.pipeline_mode<synchronous>, transform_indices = @transform_10, window_bounds = array<i64: 1, 32>}, {pipeline_mode = #tpu.pipeline_mode<synchronous>, transform_indices = @transform_11, window_bounds = array<i64: 2, 32>}]} {
    %c0 = arith.constant 0 : index
    %c0_0 = arith.constant 0 : index
    %0 = vector.load %arg1[%c0, %c0_0] : memref<98x27xf32, #tpu.memory_space<vmem>>, vector<98x27xf32>
    %c0_1 = arith.constant 0 : index
    %c0_2 = arith.constant 0 : index
    %1 = vector.load %arg4[%c0_1, %c0_2] : memref<27x16xf32, #tpu.memory_space<vmem>>, vector<27x16xf32>
    %cst = arith.constant dense<0.000000e+00> : vector<98x16xf32>
    %2 = tpu.matmul %0, %1, %cst {dimension_numbers = #tpu.dot_dimension_numbers<[1], [0], [0], [1], [0, 0, 1, 1], [], []>} : vector<98x27xf32>, vector<27x16xf32>, vector<98x16xf32> -> vector<98x16xf32>
    %c0_3 = arith.constant 0 : index
    %c0_4 = arith.constant 0 : index
    %3 = vector.load %arg5[%c0_3, %c0_4] : memref<1x16xf32, #tpu.memory_space<vmem>>, vector<1x16xf32>
    %4 = vector.broadcast %3 : vector<1x16xf32> to vector<98x16xf32>
    %5 = arith.addf %2, %4 : vector<98x16xf32>
    %cst_5 = arith.constant 0.000000e+00 : f32
    %6 = vector.broadcast %cst_5 : f32 to vector<98x16xf32>
    %7 = arith.maximumf %5, %6 : vector<98x16xf32>
    %cst_6 = arith.constant 0.000000e+00 : f32
    %8 = vector.broadcast %cst_6 : f32 to vector<98x32xf32>
    %c0_7 = arith.constant 0 : index
    %c0_8 = arith.constant 0 : index
    %9 = vector.load %arg13[%c0_7, %c0_8] : memref<98x32xf32, #tpu.memory_space<vmem>>, vector<98x32xf32>
    tpu.vector_store %arg13[%c0_7, %c0_8], %8 {strides = array<i32>} : memref<98x32xf32, #tpu.memory_space<vmem>>, vector<98x32xf32>,
    %c0_9 = arith.constant 0 : index
    %c0_10 = arith.constant 0 : index
    %10 = vector.load %arg13[%c0_9, %c0_10] : memref<98x32xf32, #tpu.memory_space<vmem>>, vector<98x16xf32>
    tpu.vector_store %arg13[%c0_9, %c0_10], %7 {strides = array<i32>} : memref<98x32xf32, #tpu.memory_space<vmem>>, vector<98x16xf32>,
    %11 = arith.truncf %7 : vector<98x16xf32> to vector<98x16xbf16>
    %c0_11 = arith.constant 0 : index
    %c0_12 = arith.constant 0 : index
    %c0_13 = arith.constant 0 : index
    %12 = vector.load %arg2[%c0_11, %c0_12, %c0_13] : memref<9x98x98xbf16, #tpu.memory_space<vmem>>, vector<1x98x98xbf16>
    %13 = vector.shape_cast %12 : vector<1x98x98xbf16> to vector<98x98xbf16>
    %cst_14 = arith.constant dense<0.000000e+00> : vector<98x16xf32>
    %14 = tpu.matmul %13, %11, %cst_14 {dimension_numbers = #tpu.dot_dimension_numbers<[1], [0], [0], [1], [0, 0, 1, 1], [], []>} : vector<98x98xbf16>, vector<98x16xbf16>, vector<98x16xf32> -> vector<98x16xf32>
    %c0_15 = arith.constant 0 : index
    %c0_16 = arith.constant 0 : index
    %15 = vector.load %arg14[%c0_15, %c0_16] : memref<98x144xf32, #tpu.memory_space<vmem>>, vector<98x16xf32>
    tpu.vector_store %arg14[%c0_15, %c0_16], %14 {strides = array<i32>} : memref<98x144xf32, #tpu.memory_space<vmem>>, vector<98x16xf32>,
    %c1 = arith.constant 1 : index
    %c0_17 = arith.constant 0 : index
    %c0_18 = arith.constant 0 : index
    %16 = vector.load %arg2[%c1, %c0_17, %c0_18] : memref<9x98x98xbf16, #tpu.memory_space<vmem>>, vector<1x98x98xbf16>
    %17 = vector.shape_cast %16 : vector<1x98x98xbf16> to vector<98x98xbf16>
    %cst_19 = arith.constant dense<0.000000e+00> : vector<98x16xf32>
    %18 = tpu.matmul %17, %11, %cst_19 {dimension_numbers = #tpu.dot_dimension_numbers<[1], [0], [0], [1], [0, 0, 1, 1], [], []>} : vector<98x98xbf16>, vector<98x16xbf16>, vector<98x16xf32> -> vector<98x16xf32>
    %c0_20 = arith.constant 0 : index
    %c16 = arith.constant 16 : index
    %19 = vector.load %arg14[%c0_20, %c16] : memref<98x144xf32, #tpu.memory_space<vmem>>, vector<98x16xf32>
    tpu.vector_store %arg14[%c0_20, %c16], %18 {strides = array<i32>} : memref<98x144xf32, #tpu.memory_space<vmem>>, vector<98x16xf32>,
    %c2 = arith.constant 2 : index
    %c0_21 = arith.constant 0 : index
    %c0_22 = arith.constant 0 : index
    %20 = vector.load %arg2[%c2, %c0_21, %c0_22] : memref<9x98x98xbf16, #tpu.memory_space<vmem>>, vector<1x98x98xbf16>
    %21 = vector.shape_cast %20 : vector<1x98x98xbf16> to vector<98x98xbf16>
    %cst_23 = arith.constant dense<0.000000e+00> : vector<98x16xf32>
    %22 = tpu.matmul %21, %11, %cst_23 {dimension_numbers = #tpu.dot_dimension_numbers<[1], [0], [0], [1], [0, 0, 1, 1], [], []>} : vector<98x98xbf16>, vector<98x16xbf16>, vector<98x16xf32> -> vector<98x16xf32>
    %c0_24 = arith.constant 0 : index
    %c32 = arith.constant 32 : index
    %23 = vector.load %arg14[%c0_24, %c32] : memref<98x144xf32, #tpu.memory_space<vmem>>, vector<98x16xf32>
    tpu.vector_store %arg14[%c0_24, %c32], %22 {strides = array<i32>} : memref<98x144xf32, #tpu.memory_space<vmem>>, vector<98x16xf32>,
    %c3 = arith.constant 3 : index
    %c0_25 = arith.constant 0 : index
    %c0_26 = arith.constant 0 : index
    %24 = vector.load %arg2[%c3, %c0_25, %c0_26] : memref<9x98x98xbf16, #tpu.memory_space<vmem>>, vector<1x98x98xbf16>
    %25 = vector.shape_cast %24 : vector<1x98x98xbf16> to vector<98x98xbf16>
    %cst_27 = arith.constant dense<0.000000e+00> : vector<98x16xf32>
    %26 = tpu.matmul %25, %11, %cst_27 {dimension_numbers = #tpu.dot_dimension_numbers<[1], [0], [0], [1], [0, 0, 1, 1], [], []>} : vector<98x98xbf16>, vector<98x16xbf16>, vector<98x16xf32> -> vector<98x16xf32>
    %c0_28 = arith.constant 0 : index
    %c48 = arith.constant 48 : index
    %27 = vector.load %arg14[%c0_28, %c48] : memref<98x144xf32, #tpu.memory_space<vmem>>, vector<98x16xf32>
    tpu.vector_store %arg14[%c0_28, %c48], %26 {strides = array<i32>} : memref<98x144xf32, #tpu.memory_space<vmem>>, vector<98x16xf32>,
    %c4 = arith.constant 4 : index
    %c0_29 = arith.constant 0 : index
    %c0_30 = arith.constant 0 : index
    %28 = vector.load %arg2[%c4, %c0_29, %c0_30] : memref<9x98x98xbf16, #tpu.memory_space<vmem>>, vector<1x98x98xbf16>
    %29 = vector.shape_cast %28 : vector<1x98x98xbf16> to vector<98x98xbf16>
    %cst_31 = arith.constant dense<0.000000e+00> : vector<98x16xf32>
    %30 = tpu.matmul %29, %11, %cst_31 {dimension_numbers = #tpu.dot_dimension_numbers<[1], [0], [0], [1], [0, 0, 1, 1], [], []>} : vector<98x98xbf16>, vector<98x16xbf16>, vector<98x16xf32> -> vector<98x16xf32>
    %c0_32 = arith.constant 0 : index
    %c64 = arith.constant 64 : index
    %31 = vector.load %arg14[%c0_32, %c64] : memref<98x144xf32, #tpu.memory_space<vmem>>, vector<98x16xf32>
    tpu.vector_store %arg14[%c0_32, %c64], %30 {strides = array<i32>} : memref<98x144xf32, #tpu.memory_space<vmem>>, vector<98x16xf32>,
    %c5 = arith.constant 5 : index
    %c0_33 = arith.constant 0 : index
    %c0_34 = arith.constant 0 : index
    %32 = vector.load %arg2[%c5, %c0_33, %c0_34] : memref<9x98x98xbf16, #tpu.memory_space<vmem>>, vector<1x98x98xbf16>
    %33 = vector.shape_cast %32 : vector<1x98x98xbf16> to vector<98x98xbf16>
    %cst_35 = arith.constant dense<0.000000e+00> : vector<98x16xf32>
    %34 = tpu.matmul %33, %11, %cst_35 {dimension_numbers = #tpu.dot_dimension_numbers<[1], [0], [0], [1], [0, 0, 1, 1], [], []>} : vector<98x98xbf16>, vector<98x16xbf16>, vector<98x16xf32> -> vector<98x16xf32>
    %c0_36 = arith.constant 0 : index
    %c80 = arith.constant 80 : index
    %35 = vector.load %arg14[%c0_36, %c80] : memref<98x144xf32, #tpu.memory_space<vmem>>, vector<98x16xf32>
    tpu.vector_store %arg14[%c0_36, %c80], %34 {strides = array<i32>} : memref<98x144xf32, #tpu.memory_space<vmem>>, vector<98x16xf32>,
    %c6 = arith.constant 6 : index
    %c0_37 = arith.constant 0 : index
    %c0_38 = arith.constant 0 : index
    %36 = vector.load %arg2[%c6, %c0_37, %c0_38] : memref<9x98x98xbf16, #tpu.memory_space<vmem>>, vector<1x98x98xbf16>
    %37 = vector.shape_cast %36 : vector<1x98x98xbf16> to vector<98x98xbf16>
    %cst_39 = arith.constant dense<0.000000e+00> : vector<98x16xf32>
    %38 = tpu.matmul %37, %11, %cst_39 {dimension_numbers = #tpu.dot_dimension_numbers<[1], [0], [0], [1], [0, 0, 1, 1], [], []>} : vector<98x98xbf16>, vector<98x16xbf16>, vector<98x16xf32> -> vector<98x16xf32>
    %c0_40 = arith.constant 0 : index
    %c96 = arith.constant 96 : index
    %39 = vector.load %arg14[%c0_40, %c96] : memref<98x144xf32, #tpu.memory_space<vmem>>, vector<98x16xf32>
    tpu.vector_store %arg14[%c0_40, %c96], %38 {strides = array<i32>} : memref<98x144xf32, #tpu.memory_space<vmem>>, vector<98x16xf32>,
    %c7 = arith.constant 7 : index
    %c0_41 = arith.constant 0 : index
    %c0_42 = arith.constant 0 : index
    %40 = vector.load %arg2[%c7, %c0_41, %c0_42] : memref<9x98x98xbf16, #tpu.memory_space<vmem>>, vector<1x98x98xbf16>
    %41 = vector.shape_cast %40 : vector<1x98x98xbf16> to vector<98x98xbf16>
    %cst_43 = arith.constant dense<0.000000e+00> : vector<98x16xf32>
    %42 = tpu.matmul %41, %11, %cst_43 {dimension_numbers = #tpu.dot_dimension_numbers<[1], [0], [0], [1], [0, 0, 1, 1], [], []>} : vector<98x98xbf16>, vector<98x16xbf16>, vector<98x16xf32> -> vector<98x16xf32>
    %c0_44 = arith.constant 0 : index
    %c112 = arith.constant 112 : index
    %43 = vector.load %arg14[%c0_44, %c112] : memref<98x144xf32, #tpu.memory_space<vmem>>, vector<98x16xf32>
    tpu.vector_store %arg14[%c0_44, %c112], %42 {strides = array<i32>} : memref<98x144xf32, #tpu.memory_space<vmem>>, vector<98x16xf32>,
    %c8 = arith.constant 8 : index
    %c0_45 = arith.constant 0 : index
    %c0_46 = arith.constant 0 : index
    %44 = vector.load %arg2[%c8, %c0_45, %c0_46] : memref<9x98x98xbf16, #tpu.memory_space<vmem>>, vector<1x98x98xbf16>
    %45 = vector.shape_cast %44 : vector<1x98x98xbf16> to vector<98x98xbf16>
    %cst_47 = arith.constant dense<0.000000e+00> : vector<98x16xf32>
    %46 = tpu.matmul %45, %11, %cst_47 {dimension_numbers = #tpu.dot_dimension_numbers<[1], [0], [0], [1], [0, 0, 1, 1], [], []>} : vector<98x98xbf16>, vector<98x16xbf16>, vector<98x16xf32> -> vector<98x16xf32>
    %c0_48 = arith.constant 0 : index
    %c128 = arith.constant 128 : index
    %47 = vector.load %arg14[%c0_48, %c128] : memref<98x144xf32, #tpu.memory_space<vmem>>, vector<98x16xf32>
    tpu.vector_store %arg14[%c0_48, %c128], %46 {strides = array<i32>} : memref<98x144xf32, #tpu.memory_space<vmem>>, vector<98x16xf32>,
    %c0_49 = arith.constant 0 : index
    %c0_50 = arith.constant 0 : index
    %48 = vector.load %arg14[%c0_49, %c0_50] : memref<98x144xf32, #tpu.memory_space<vmem>>, vector<98x144xf32>
    %c0_51 = arith.constant 0 : index
    %c0_52 = arith.constant 0 : index
    %49 = vector.load %arg6[%c0_51, %c0_52] : memref<144x8xf32, #tpu.memory_space<vmem>>, vector<144x8xf32>
    %cst_53 = arith.constant dense<0.000000e+00> : vector<98x8xf32>
    %50 = tpu.matmul %48, %49, %cst_53 {dimension_numbers = #tpu.dot_dimension_numbers<[1], [0], [0], [1], [0, 0, 1, 1], [], []>} : vector<98x144xf32>, vector<144x8xf32>, vector<98x8xf32> -> vector<98x8xf32>
    %c0_54 = arith.constant 0 : index
    %c0_55 = arith.constant 0 : index
    %51 = vector.load %arg7[%c0_54, %c0_55] : memref<1x8xf32, #tpu.memory_space<vmem>>, vector<1x8xf32>
    %52 = vector.broadcast %51 : vector<1x8xf32> to vector<98x8xf32>
    %53 = arith.addf %50, %52 : vector<98x8xf32>
    %cst_56 = arith.constant 0.000000e+00 : f32
    %54 = vector.broadcast %cst_56 : f32 to vector<98x8xf32>
    %55 = arith.maximumf %53, %54 : vector<98x8xf32>
    %c0_57 = arith.constant 0 : index
    %c16_58 = arith.constant 16 : index
    %56 = vector.load %arg13[%c0_57, %c16_58] : memref<98x32xf32, #tpu.memory_space<vmem>>, vector<98x8xf32>
    tpu.vector_store %arg13[%c0_57, %c16_58], %55 {strides = array<i32>} : memref<98x32xf32, #tpu.memory_space<vmem>>, vector<98x8xf32>,
    %c0_59 = arith.constant 0 : index
    %c0_60 = arith.constant 0 : index
    %57 = vector.load %arg13[%c0_59, %c0_60] : memref<98x32xf32, #tpu.memory_space<vmem>>, vector<98x32xf32>
    %58 = arith.truncf %57 : vector<98x32xf32> to vector<98x32xbf16>
    %c0_61 = arith.constant 0 : index
    %c0_62 = arith.constant 0 : index
    %c0_63 = arith.constant 0 : index
    %59 = vector.load %arg2[%c0_61, %c0_62, %c0_63] : memref<9x98x98xbf16, #tpu.memory_space<vmem>>, vector<1x98x98xbf16>
    %60 = vector.shape_cast %59 : vector<1x98x98xbf16> to vector<98x98xbf16>
    %cst_64 = arith.constant dense<0.000000e+00> : vector<98x32xf32>
    %61 = tpu.matmul %60, %58, %cst_64 {dimension_numbers = #tpu.dot_dimension_numbers<[1], [0], [0], [1], [0, 0, 1, 1], [], []>} : vector<98x98xbf16>, vector<98x32xbf16>, vector<98x32xf32> -> vector<98x32xf32>
    %c0_65 = arith.constant 0 : index
    %c0_66 = arith.constant 0 : index
    %62 = vector.load %arg15[%c0_65, %c0_66] : memref<98x288xf32, #tpu.memory_space<vmem>>, vector<98x32xf32>
    tpu.vector_store %arg15[%c0_65, %c0_66], %61 {strides = array<i32>} : memref<98x288xf32, #tpu.memory_space<vmem>>, vector<98x32xf32>,
    %c1_67 = arith.constant 1 : index
    %c0_68 = arith.constant 0 : index
    %c0_69 = arith.constant 0 : index
    %63 = vector.load %arg2[%c1_67, %c0_68, %c0_69] : memref<9x98x98xbf16, #tpu.memory_space<vmem>>, vector<1x98x98xbf16>
    %64 = vector.shape_cast %63 : vector<1x98x98xbf16> to vector<98x98xbf16>
    %cst_70 = arith.constant dense<0.000000e+00> : vector<98x32xf32>
    %65 = tpu.matmul %64, %58, %cst_70 {dimension_numbers = #tpu.dot_dimension_numbers<[1], [0], [0], [1], [0, 0, 1, 1], [], []>} : vector<98x98xbf16>, vector<98x32xbf16>, vector<98x32xf32> -> vector<98x32xf32>
    %c0_71 = arith.constant 0 : index
    %c32_72 = arith.constant 32 : index
    %66 = vector.load %arg15[%c0_71, %c32_72] : memref<98x288xf32, #tpu.memory_space<vmem>>, vector<98x32xf32>
    tpu.vector_store %arg15[%c0_71, %c32_72], %65 {strides = array<i32>} : memref<98x288xf32, #tpu.memory_space<vmem>>, vector<98x32xf32>,
    %c2_73 = arith.constant 2 : index
    %c0_74 = arith.constant 0 : index
    %c0_75 = arith.constant 0 : index
    %67 = vector.load %arg2[%c2_73, %c0_74, %c0_75] : memref<9x98x98xbf16, #tpu.memory_space<vmem>>, vector<1x98x98xbf16>
    %68 = vector.shape_cast %67 : vector<1x98x98xbf16> to vector<98x98xbf16>
    %cst_76 = arith.constant dense<0.000000e+00> : vector<98x32xf32>
    %69 = tpu.matmul %68, %58, %cst_76 {dimension_numbers = #tpu.dot_dimension_numbers<[1], [0], [0], [1], [0, 0, 1, 1], [], []>} : vector<98x98xbf16>, vector<98x32xbf16>, vector<98x32xf32> -> vector<98x32xf32>
    %c0_77 = arith.constant 0 : index
    %c64_78 = arith.constant 64 : index
    %70 = vector.load %arg15[%c0_77, %c64_78] : memref<98x288xf32, #tpu.memory_space<vmem>>, vector<98x32xf32>
    tpu.vector_store %arg15[%c0_77, %c64_78], %69 {strides = array<i32>} : memref<98x288xf32, #tpu.memory_space<vmem>>, vector<98x32xf32>,
    %c3_79 = arith.constant 3 : index
    %c0_80 = arith.constant 0 : index
    %c0_81 = arith.constant 0 : index
    %71 = vector.load %arg2[%c3_79, %c0_80, %c0_81] : memref<9x98x98xbf16, #tpu.memory_space<vmem>>, vector<1x98x98xbf16>
    %72 = vector.shape_cast %71 : vector<1x98x98xbf16> to vector<98x98xbf16>
    %cst_82 = arith.constant dense<0.000000e+00> : vector<98x32xf32>
    %73 = tpu.matmul %72, %58, %cst_82 {dimension_numbers = #tpu.dot_dimension_numbers<[1], [0], [0], [1], [0, 0, 1, 1], [], []>} : vector<98x98xbf16>, vector<98x32xbf16>, vector<98x32xf32> -> vector<98x32xf32>
    %c0_83 = arith.constant 0 : index
    %c96_84 = arith.constant 96 : index
    %74 = vector.load %arg15[%c0_83, %c96_84] : memref<98x288xf32, #tpu.memory_space<vmem>>, vector<98x32xf32>
    tpu.vector_store %arg15[%c0_83, %c96_84], %73 {strides = array<i32>} : memref<98x288xf32, #tpu.memory_space<vmem>>, vector<98x32xf32>,
    %c4_85 = arith.constant 4 : index
    %c0_86 = arith.constant 0 : index
    %c0_87 = arith.constant 0 : index
    %75 = vector.load %arg2[%c4_85, %c0_86, %c0_87] : memref<9x98x98xbf16, #tpu.memory_space<vmem>>, vector<1x98x98xbf16>
    %76 = vector.shape_cast %75 : vector<1x98x98xbf16> to vector<98x98xbf16>
    %cst_88 = arith.constant dense<0.000000e+00> : vector<98x32xf32>
    %77 = tpu.matmul %76, %58, %cst_88 {dimension_numbers = #tpu.dot_dimension_numbers<[1], [0], [0], [1], [0, 0, 1, 1], [], []>} : vector<98x98xbf16>, vector<98x32xbf16>, vector<98x32xf32> -> vector<98x32xf32>
    %c0_89 = arith.constant 0 : index
    %c128_90 = arith.constant 128 : index
    %78 = vector.load %arg15[%c0_89, %c128_90] : memref<98x288xf32, #tpu.memory_space<vmem>>, vector<98x32xf32>
    tpu.vector_store %arg15[%c0_89, %c128_90], %77 {strides = array<i32>} : memref<98x288xf32, #tpu.memory_space<vmem>>, vector<98x32xf32>,
    %c5_91 = arith.constant 5 : index
    %c0_92 = arith.constant 0 : index
    %c0_93 = arith.constant 0 : index
    %79 = vector.load %arg2[%c5_91, %c0_92, %c0_93] : memref<9x98x98xbf16, #tpu.memory_space<vmem>>, vector<1x98x98xbf16>
    %80 = vector.shape_cast %79 : vector<1x98x98xbf16> to vector<98x98xbf16>
    %cst_94 = arith.constant dense<0.000000e+00> : vector<98x32xf32>
    %81 = tpu.matmul %80, %58, %cst_94 {dimension_numbers = #tpu.dot_dimension_numbers<[1], [0], [0], [1], [0, 0, 1, 1], [], []>} : vector<98x98xbf16>, vector<98x32xbf16>, vector<98x32xf32> -> vector<98x32xf32>
    %c0_95 = arith.constant 0 : index
    %c160 = arith.constant 160 : index
    %82 = vector.load %arg15[%c0_95, %c160] : memref<98x288xf32, #tpu.memory_space<vmem>>, vector<98x32xf32>
    tpu.vector_store %arg15[%c0_95, %c160], %81 {strides = array<i32>} : memref<98x288xf32, #tpu.memory_space<vmem>>, vector<98x32xf32>,
    %c6_96 = arith.constant 6 : index
    %c0_97 = arith.constant 0 : index
    %c0_98 = arith.constant 0 : index
    %83 = vector.load %arg2[%c6_96, %c0_97, %c0_98] : memref<9x98x98xbf16, #tpu.memory_space<vmem>>, vector<1x98x98xbf16>
    %84 = vector.shape_cast %83 : vector<1x98x98xbf16> to vector<98x98xbf16>
    %cst_99 = arith.constant dense<0.000000e+00> : vector<98x32xf32>
    %85 = tpu.matmul %84, %58, %cst_99 {dimension_numbers = #tpu.dot_dimension_numbers<[1], [0], [0], [1], [0, 0, 1, 1], [], []>} : vector<98x98xbf16>, vector<98x32xbf16>, vector<98x32xf32> -> vector<98x32xf32>
    %c0_100 = arith.constant 0 : index
    %c192 = arith.constant 192 : index
    %86 = vector.load %arg15[%c0_100, %c192] : memref<98x288xf32, #tpu.memory_space<vmem>>, vector<98x32xf32>
    tpu.vector_store %arg15[%c0_100, %c192], %85 {strides = array<i32>} : memref<98x288xf32, #tpu.memory_space<vmem>>, vector<98x32xf32>,
    %c7_101 = arith.constant 7 : index
    %c0_102 = arith.constant 0 : index
    %c0_103 = arith.constant 0 : index
    %87 = vector.load %arg2[%c7_101, %c0_102, %c0_103] : memref<9x98x98xbf16, #tpu.memory_space<vmem>>, vector<1x98x98xbf16>
    %88 = vector.shape_cast %87 : vector<1x98x98xbf16> to vector<98x98xbf16>
    %cst_104 = arith.constant dense<0.000000e+00> : vector<98x32xf32>
    %89 = tpu.matmul %88, %58, %cst_104 {dimension_numbers = #tpu.dot_dimension_numbers<[1], [0], [0], [1], [0, 0, 1, 1], [], []>} : vector<98x98xbf16>, vector<98x32xbf16>, vector<98x32xf32> -> vector<98x32xf32>
    %c0_105 = arith.constant 0 : index
    %c224 = arith.constant 224 : index
    %90 = vector.load %arg15[%c0_105, %c224] : memref<98x288xf32, #tpu.memory_space<vmem>>, vector<98x32xf32>
    tpu.vector_store %arg15[%c0_105, %c224], %89 {strides = array<i32>} : memref<98x288xf32, #tpu.memory_space<vmem>>, vector<98x32xf32>,
    %c8_106 = arith.constant 8 : index
    %c0_107 = arith.constant 0 : index
    %c0_108 = arith.constant 0 : index
    %91 = vector.load %arg2[%c8_106, %c0_107, %c0_108] : memref<9x98x98xbf16, #tpu.memory_space<vmem>>, vector<1x98x98xbf16>
    %92 = vector.shape_cast %91 : vector<1x98x98xbf16> to vector<98x98xbf16>
    %cst_109 = arith.constant dense<0.000000e+00> : vector<98x32xf32>
    %93 = tpu.matmul %92, %58, %cst_109 {dimension_numbers = #tpu.dot_dimension_numbers<[1], [0], [0], [1], [0, 0, 1, 1], [], []>} : vector<98x98xbf16>, vector<98x32xbf16>, vector<98x32xf32> -> vector<98x32xf32>
    %c0_110 = arith.constant 0 : index
    %c256 = arith.constant 256 : index
    %94 = vector.load %arg15[%c0_110, %c256] : memref<98x288xf32, #tpu.memory_space<vmem>>, vector<98x32xf32>
    tpu.vector_store %arg15[%c0_110, %c256], %93 {strides = array<i32>} : memref<98x288xf32, #tpu.memory_space<vmem>>, vector<98x32xf32>,
    %c0_111 = arith.constant 0 : index
    %c0_112 = arith.constant 0 : index
    %95 = vector.load %arg15[%c0_111, %c0_112] : memref<98x288xf32, #tpu.memory_space<vmem>>, vector<98x288xf32>
    %c0_113 = arith.constant 0 : index
    %c0_114 = arith.constant 0 : index
    %96 = vector.load %arg8[%c0_113, %c0_114] : memref<288x8xf32, #tpu.memory_space<vmem>>, vector<288x8xf32>
    %cst_115 = arith.constant dense<0.000000e+00> : vector<98x8xf32>
    %97 = tpu.matmul %95, %96, %cst_115 {dimension_numbers = #tpu.dot_dimension_numbers<[1], [0], [0], [1], [0, 0, 1, 1], [], []>} : vector<98x288xf32>, vector<288x8xf32>, vector<98x8xf32> -> vector<98x8xf32>
    %c0_116 = arith.constant 0 : index
    %c0_117 = arith.constant 0 : index
    %98 = vector.load %arg9[%c0_116, %c0_117] : memref<1x8xf32, #tpu.memory_space<vmem>>, vector<1x8xf32>
    %99 = vector.broadcast %98 : vector<1x8xf32> to vector<98x8xf32>
    %100 = arith.addf %97, %99 : vector<98x8xf32>
    %cst_118 = arith.constant 0.000000e+00 : f32
    %101 = vector.broadcast %cst_118 : f32 to vector<98x8xf32>
    %102 = arith.maximumf %100, %101 : vector<98x8xf32>
    %c0_119 = arith.constant 0 : index
    %c24 = arith.constant 24 : index
    %103 = vector.load %arg13[%c0_119, %c24] : memref<98x32xf32, #tpu.memory_space<vmem>>, vector<98x8xf32>
    tpu.vector_store %arg13[%c0_119, %c24], %102 {strides = array<i32>} : memref<98x32xf32, #tpu.memory_space<vmem>>, vector<98x8xf32>,
    %c0_120 = arith.constant 0 : index
    %c0_121 = arith.constant 0 : index
    %104 = vector.load %arg13[%c0_120, %c0_121] : memref<98x32xf32, #tpu.memory_space<vmem>>, vector<98x32xf32>
    %c0_122 = arith.constant 0 : index
    %c0_123 = arith.constant 0 : index
    %105 = vector.load %arg10[%c0_122, %c0_123] : memref<1x32xf32, #tpu.memory_space<vmem>>, vector<1x32xf32>
    %106 = vector.broadcast %105 : vector<1x32xf32> to vector<98x32xf32>
    %107 = arith.mulf %104, %106 : vector<98x32xf32>
    %c0_124 = arith.constant 0 : index
    %c0_125 = arith.constant 0 : index
    %108 = vector.load %arg11[%c0_124, %c0_125] : memref<1x32xf32, #tpu.memory_space<vmem>>, vector<1x32xf32>
    %109 = vector.broadcast %108 : vector<1x32xf32> to vector<98x32xf32>
    %110 = arith.addf %107, %109 : vector<98x32xf32>
    %cst_126 = arith.constant 0.000000e+00 : f32
    %111 = vector.broadcast %cst_126 : f32 to vector<98x32xf32>
    %112 = arith.maximumf %110, %111 : vector<98x32xf32>
    %c0_127 = arith.constant 0 : index
    %c0_128 = arith.constant 0 : index
    %113 = vector.load %arg3[%c0_127, %c0_128] : memref<2x98xf32, #tpu.memory_space<vmem>>, vector<2x98xf32>
    %cst_129 = arith.constant dense<0.000000e+00> : vector<2x32xf32>
    %114 = tpu.matmul %113, %112, %cst_129 {dimension_numbers = #tpu.dot_dimension_numbers<[1], [0], [0], [1], [0, 0, 1, 1], [], []>} : vector<2x98xf32>, vector<98x32xf32>, vector<2x32xf32> -> vector<2x32xf32>
    %c0_130 = arith.constant 0 : index
    %c0_131 = arith.constant 0 : index
    %115 = vector.load %arg12[%c0_130, %c0_131] : memref<2x32xf32, #tpu.memory_space<vmem>>, vector<2x32xf32>
    tpu.vector_store %arg12[%c0_130, %c0_131], %114 {strides = array<i32>} : memref<2x32xf32, #tpu.memory_space<vmem>>, vector<2x32xf32>,
    return
  }
  func.func @transform_0(%arg0: i32) -> (i32, i32) {
    %c0_i32 = arith.constant 0 : i32
    %c0_i32_0 = arith.constant 0 : i32
    %c0_i32_1 = arith.constant 0 : i32
    return %c0_i32, %c0_i32_0 : i32, i32
  }
  func.func @transform_1(%arg0: i32) -> (i32, i32, i32) {
    %c0_i32 = arith.constant 0 : i32
    %c0_i32_0 = arith.constant 0 : i32
    %c0_i32_1 = arith.constant 0 : i32
    %c0_i32_2 = arith.constant 0 : i32
    return %c0_i32, %c0_i32_0, %c0_i32_1 : i32, i32, i32
  }
  func.func @transform_2(%arg0: i32) -> (i32, i32) {
    %c0_i32 = arith.constant 0 : i32
    %c0_i32_0 = arith.constant 0 : i32
    %c0_i32_1 = arith.constant 0 : i32
    return %c0_i32, %c0_i32_0 : i32, i32
  }
  func.func @transform_3(%arg0: i32) -> (i32, i32) {
    %c0_i32 = arith.constant 0 : i32
    %c0_i32_0 = arith.constant 0 : i32
    %c0_i32_1 = arith.constant 0 : i32
    return %c0_i32, %c0_i32_0 : i32, i32
  }
  func.func @transform_4(%arg0: i32) -> (i32, i32) {
    %c0_i32 = arith.constant 0 : i32
    %c0_i32_0 = arith.constant 0 : i32
    %c0_i32_1 = arith.constant 0 : i32
    return %c0_i32, %c0_i32_0 : i32, i32
  }
  func.func @transform_5(%arg0: i32) -> (i32, i32) {
    %c0_i32 = arith.constant 0 : i32
    %c0_i32_0 = arith.constant 0 : i32
    %c0_i32_1 = arith.constant 0 : i32
    return %c0_i32, %c0_i32_0 : i32, i32
  }
  func.func @transform_6(%arg0: i32) -> (i32, i32) {
    %c0_i32 = arith.constant 0 : i32
    %c0_i32_0 = arith.constant 0 : i32
    %c0_i32_1 = arith.constant 0 : i32
    return %c0_i32, %c0_i32_0 : i32, i32
  }
  func.func @transform_7(%arg0: i32) -> (i32, i32) {
    %c0_i32 = arith.constant 0 : i32
    %c0_i32_0 = arith.constant 0 : i32
    %c0_i32_1 = arith.constant 0 : i32
    return %c0_i32, %c0_i32_0 : i32, i32
  }
  func.func @transform_8(%arg0: i32) -> (i32, i32) {
    %c0_i32 = arith.constant 0 : i32
    %c0_i32_0 = arith.constant 0 : i32
    %c0_i32_1 = arith.constant 0 : i32
    return %c0_i32, %c0_i32_0 : i32, i32
  }
  func.func @transform_9(%arg0: i32) -> (i32, i32) {
    %c0_i32 = arith.constant 0 : i32
    %c0_i32_0 = arith.constant 0 : i32
    %c0_i32_1 = arith.constant 0 : i32
    return %c0_i32, %c0_i32_0 : i32, i32
  }
  func.func @transform_10(%arg0: i32) -> (i32, i32) {
    %c0_i32 = arith.constant 0 : i32
    %c0_i32_0 = arith.constant 0 : i32
    %c0_i32_1 = arith.constant 0 : i32
    return %c0_i32, %c0_i32_0 : i32, i32
  }
  func.func @transform_11(%arg0: i32) -> (i32, i32) {
    %c0_i32 = arith.constant 0 : i32
    %c0_i32_0 = arith.constant 0 : i32
    %c0_i32_1 = arith.constant 0 : i32
    return %c0_i32, %c0_i32_0 : i32, i32
  }
}

</mosaic_0001>

<llo_original>
// kernel: encoder_forward.1
$region0: #{encoder_forward.1}
  #allocation0 [shape = 'u32[]', space=smem, size = 0x4, offset = 0x4, fixed_abs, tag = 'smem constant byte address 0x4 - core index']
  #allocation1 [shape = 'u32[72,128]{1,0:T(1,128)}', space=vmem, size = 0x9000, scoped, tag = 'internal scratch']
  #allocation2 [shape = 'f32[98,32]{1,0:T(8,128)}', space=vmem, size = 0xd000, scoped, tag = 'scratch operand']
  #allocation3 [shape = 'f32[98,144]{1,0:T(8,128)}', space=vmem, size = 0x1a000, scoped, tag = 'scratch operand']
  #allocation4 [shape = 'f32[98,288]{1,0:T(8,128)}', space=vmem, size = 0x27000, scoped, tag = 'scratch operand']
  %s0 = inlined_call_operand.vmem [shape: f32[98,27], index: 0, kind: input, shape index: {}]
  %s1 = inlined_call_operand.vmem [shape: bf16[9,98,98], index: 1, kind: input, shape index: {}]
  %s2 = inlined_call_operand.vmem [shape: f32[2,98], index: 2, kind: input, shape index: {}]
  %s3 = inlined_call_operand.vmem [shape: f32[27,16], index: 3, kind: input, shape index: {}]
  %s4 = inlined_call_operand.vmem [shape: f32[1,16], index: 4, kind: input, shape index: {}]
  %s5 = inlined_call_operand.vmem [shape: f32[144,8], index: 5, kind: input, shape index: {}]
  %s6 = inlined_call_operand.vmem [shape: f32[1,8], index: 6, kind: input, shape index: {}]
  %s7 = inlined_call_operand.vmem [shape: f32[288,8], index: 7, kind: input, shape index: {}]
  %s8 = inlined_call_operand.vmem [shape: f32[1,8], index: 8, kind: input, shape index: {}]
  %s9 = inlined_call_operand.vmem [shape: f32[1,32], index: 9, kind: input, shape index: {}]
  %s10 = inlined_call_operand.vmem [shape: f32[1,32], index: 10, kind: input, shape index: {}]
  %s11 = inlined_call_operand.hbm [shape: f32[2,32], index: 11, kind: output, shape index: {}]
  %s12 = sld [smem:[#allocation0]]
  $region54: #{encoder_forward.1} parent=0
    _
  %s14 = ssub.s32 1, %s12
  %s15 = scalar_select 0, %s14, %s12
  $region1: #{encoder_forward.1} parent=0
    #allocation5 [shape = 'u8[1024]{0}', space=vmem, size = 0x400, scoped, tag = 'output window, operand 0, single buffered']
    #allocation6 [shape = 's32[1]{0}', space=sflag, size = 0x4, scoped, tag = 'scoped memory for encoder_forward.1']
    %16 = vsyncpa [#allocation6], 0
    // Predicated region
    $region2: #{encoder_forward.1} parent=1 // pred_check
      _
    $region3: #{encoder_forward.1} parent=1 // pred_check_branch
      %18 = sbr.rel (0) target = $region5
    $region4: #{encoder_forward.1} parent=1 // pred_region
      _
    $region5: #{encoder_forward.1} parent=1 // pred_fallthru
      _
    // Predicated region
    $region6: #{encoder_forward.1} parent=1 // pred_check
      _
    $region7: #{encoder_forward.1} parent=1 // pred_check_branch
      %20 = sbr.rel (0) target = $region9
    $region8: #{encoder_forward.1} parent=1 // pred_region
      _
    $region9: #{encoder_forward.1} parent=1 // pred_fallthru
      _
    // Predicated region
    $region10: #{encoder_forward.1} parent=1 // pred_check
      _
    $region11: #{encoder_forward.1} parent=1 // pred_check_branch
      %22 = sbr.rel (0) target = $region13
    $region12: #{encoder_forward.1} parent=1 // pred_region
      _
    $region13: #{encoder_forward.1} parent=1 // pred_fallthru
      _
    // Predicated region
    $region14: #{encoder_forward.1} parent=1 // pred_check
      _
    $region15: #{encoder_forward.1} parent=1 // pred_check_branch
      %24 = sbr.rel (0) target = $region17
    $region16: #{encoder_forward.1} parent=1 // pred_region
      _
    $region17: #{encoder_forward.1} parent=1 // pred_fallthru
      _
    // Predicated region
    $region18: #{encoder_forward.1} parent=1 // pred_check
      _
    $region19: #{encoder_forward.1} parent=1 // pred_check_branch
      %26 = sbr.rel (0) target = $region21
    $region20: #{encoder_forward.1} parent=1 // pred_region
      _
    $region21: #{encoder_forward.1} parent=1 // pred_fallthru
      _
    // Predicated region
    $region22: #{encoder_forward.1} parent=1 // pred_check
      _
    $region23: #{encoder_forward.1} parent=1 // pred_check_branch
      %28 = sbr.rel (0) target = $region25
    $region24: #{encoder_forward.1} parent=1 // pred_region
      _
    $region25: #{encoder_forward.1} parent=1 // pred_fallthru
      _
    // Predicated region
    $region26: #{encoder_forward.1} parent=1 // pred_check
      _
    $region27: #{encoder_forward.1} parent=1 // pred_check_branch
      %30 = sbr.rel (0) target = $region29
    $region28: #{encoder_forward.1} parent=1 // pred_region
      _
    $region29: #{encoder_forward.1} parent=1 // pred_fallthru
      _
    // Predicated region
    $region30: #{encoder_forward.1} parent=1 // pred_check
      _
    $region31: #{encoder_forward.1} parent=1 // pred_check_branch
      %32 = sbr.rel (0) target = $region33
    $region32: #{encoder_forward.1} parent=1 // pred_region
      _
    $region33: #{encoder_forward.1} parent=1 // pred_fallthru
      _
    // Predicated region
    $region34: #{encoder_forward.1} parent=1 // pred_check
      _
    $region35: #{encoder_forward.1} parent=1 // pred_check_branch
      %34 = sbr.rel (0) target = $region37
    $region36: #{encoder_forward.1} parent=1 // pred_region
      _
    $region37: #{encoder_forward.1} parent=1 // pred_fallthru
      _
    // Predicated region
    $region38: #{encoder_forward.1} parent=1 // pred_check
      _
    $region39: #{encoder_forward.1} parent=1 // pred_check_branch
      %36 = sbr.rel (0) target = $region41
    $region40: #{encoder_forward.1} parent=1 // pred_region
      _
    $region41: #{encoder_forward.1} parent=1 // pred_fallthru
      _
    // Predicated region
    $region42: #{encoder_forward.1} parent=1 // pred_check
      _
    $region43: #{encoder_forward.1} parent=1 // pred_check_branch
      %38 = sbr.rel (0) target = $region45
    $region44: #{encoder_forward.1} parent=1 // pred_region
      _
    $region45: #{encoder_forward.1} parent=1 // pred_fallthru
      _
    %v40 = vld [vmem:[%s0] sm:$0xff]
    %v41 = vld [vmem:[%s0 + $0x8] sm:$0xff]
    %v42 = vld [vmem:[%s0 + $0x10] sm:$0xff]
    %v43 = vld [vmem:[%s0 + $0x18] sm:$0xff]
    %v44 = vld [vmem:[%s0 + $0x20] sm:$0xff]
    %v45 = vld [vmem:[%s0 + $0x28] sm:$0xff]
    %v46 = vld [vmem:[%s0 + $0x30] sm:$0xff]
    %v47 = vld [vmem:[%s0 + $0x38] sm:$0xff]
    %v48 = vld [vmem:[%s0 + $0x40] sm:$0xff]
    %v49 = vld [vmem:[%s0 + $0x48] sm:$0xff]
    %v50 = vld [vmem:[%s0 + $0x50] sm:$0xff]
    %v51 = vld [vmem:[%s0 + $0x58] sm:$0xff]
    %v52 = vld [vmem:[%s0 + $0x60] sm:$0x3]
    %v53 = vld [vmem:[%s3] sm:$0xff]
    %v54 = vld [vmem:[%s3 + $0x8] sm:$0xff]
    %v55 = vld [vmem:[%s3 + $0x10] sm:$0xff]
    %v56 = vld [vmem:[%s3 + $0x18] sm:$0x7]
    %v57 = vld [vmem:[%s4] sm:$0x1]
    %v59 = vperm.slane %v57, 0
    %vm61 = vcmask 220160
    %v63 = vsel %vm61, %v40, 0
    %v66 = vsel %vm61, %v41, 0
    %v69 = vsel %vm61, %v42, 0
    %v72 = vsel %vm61, %v43, 0
    %v75 = vsel %vm61, %v44, 0
    %v78 = vsel %vm61, %v45, 0
    %v81 = vsel %vm61, %v46, 0
    %v84 = vsel %vm61, %v47, 0
    %v87 = vsel %vm61, %v48, 0
    %v90 = vsel %vm61, %v49, 0
    %v93 = vsel %vm61, %v50, 0
    %v96 = vsel %vm61, %v51, 0
    %v99 = vsel %vm61, %v52, 0
    %vm101 = vcmask 1042432
    %v103 = vsel %vm101, %v56, 0
    %105 = vmatpush.msra.mxu0 0.0
    %106 = vmatpush.msra.mxu0 0.0
    %107 = vmatpush.msra.mxu0 0.0
    %108 = vmatpush.msra.mxu0 0.0
    %109 = vmatpush.msra.mxu0 0.0
    %110 = vmatpush.msra.mxu0 0.0
    %111 = vmatpush.msra.mxu0 0.0
    %112 = vmatpush.msra.mxu0 0.0
    %113 = vmatpush.msra.mxu0 0.0
    %114 = vmatpush.msra.mxu0 0.0
    %115 = vmatpush.msra.mxu0 0.0
    %116 = vmatpush.msra.mxu0 0.0
    %117 = vmatpush.msra.mxu0 %v103
    %118 = vmatpush.msra.mxu0 %v55
    %119 = vmatpush.msra.mxu0 %v54
    %120 = vmatpush.msra.mxu0 %v53
    %121 = vmatmul.f32.gmra.mxu0 %v63
    %v122 = vpop.f32.mrf.mxu0
    %v123 = vadd.f32 %v59, %v122
    %124 = vmatmul.f32.gmra.mxu0 %v66
    %v125 = vpop.f32.mrf.mxu0
    %v126 = vadd.f32 %v59, %v125
    %127 = vmatmul.f32.gmra.mxu0 %v69
    %v128 = vpop.f32.mrf.mxu0
    %v129 = vadd.f32 %v59, %v128
    %130 = vmatmul.f32.gmra.mxu0 %v72
    %v131 = vpop.f32.mrf.mxu0
    %v132 = vadd.f32 %v59, %v131
    %133 = vmatmul.f32.gmra.mxu0 %v75
    %v134 = vpop.f32.mrf.mxu0
    %v135 = vadd.f32 %v59, %v134
    %136 = vmatmul.f32.gmra.mxu0 %v78
    %v137 = vpop.f32.mrf.mxu0
    %v138 = vadd.f32 %v59, %v137
    %139 = vmatmul.f32.gmra.mxu0 %v81
    %v140 = vpop.f32.mrf.mxu0
    %v141 = vadd.f32 %v59, %v140
    %142 = vmatmul.f32.gmra.mxu0 %v84
    %v143 = vpop.f32.mrf.mxu0
    %v144 = vadd.f32 %v59, %v143
    %145 = vmatmul.f32.gmra.mxu0 %v87
    %v146 = vpop.f32.mrf.mxu0
    %v147 = vadd.f32 %v59, %v146
    %148 = vmatmul.f32.gmra.mxu0 %v90
    %v149 = vpop.f32.mrf.mxu0
    %v150 = vadd.f32 %v59, %v149
    %151 = vmatmul.f32.gmra.mxu0 %v93
    %v152 = vpop.f32.mrf.mxu0
    %v153 = vadd.f32 %v59, %v152
    %154 = vmatmul.f32.gmra.mxu0 %v96
    %v155 = vpop.f32.mrf.mxu0
    %v156 = vadd.f32 %v59, %v155
    %157 = vmatmul.f32.gmra.mxu0 %v99
    %v158 = vpop.f32.mrf.mxu0
    %v159 = vadd.f32 %v59, %v158
    %160 = vdwg.mxu0
    %v161 = vmax.f32 %v123, 0.0
    %v162 = vmax.f32 %v126, 0.0
    %v163 = vmax.f32 %v129, 0.0
    %v164 = vmax.f32 %v132, 0.0
    %v165 = vmax.f32 %v135, 0.0
    %v166 = vmax.f32 %v138, 0.0
    %v167 = vmax.f32 %v141, 0.0
    %v168 = vmax.f32 %v144, 0.0
    %v169 = vmax.f32 %v147, 0.0
    %v170 = vmax.f32 %v150, 0.0
    %v171 = vmax.f32 %v153, 0.0
    %v172 = vmax.f32 %v156, 0.0
    %v173 = vmax.f32 %v159, 0.0
    %vm174 = vcmask 261120
    %175 = vst.msk [vmem:[#allocation2] sm:$0xff] %vm174, 0.0
    %176 = vst.msk [vmem:[#allocation2 + $0x8] sm:$0xff] %vm174, 0.0
    %177 = vst.msk [vmem:[#allocation2 + $0x10] sm:$0xff] %vm174, 0.0
    %178 = vst.msk [vmem:[#allocation2 + $0x18] sm:$0xff] %vm174, 0.0
    %179 = vst.msk [vmem:[#allocation2 + $0x20] sm:$0xff] %vm174, 0.0
    %180 = vst.msk [vmem:[#allocation2 + $0x28] sm:$0xff] %vm174, 0.0
    %181 = vst.msk [vmem:[#allocation2 + $0x30] sm:$0xff] %vm174, 0.0
    %182 = vst.msk [vmem:[#allocation2 + $0x38] sm:$0xff] %vm174, 0.0
    %183 = vst.msk [vmem:[#allocation2 + $0x40] sm:$0xff] %vm174, 0.0
    %184 = vst.msk [vmem:[#allocation2 + $0x48] sm:$0xff] %vm174, 0.0
    %185 = vst.msk [vmem:[#allocation2 + $0x50] sm:$0xff] %vm174, 0.0
    %186 = vst.msk [vmem:[#allocation2 + $0x58] sm:$0xff] %vm174, 0.0
    %vm187 = vcmask 254976
    %188 = vst.msk [vmem:[#allocation2 + $0x60] sm:$0x3] %vm187, 0.0
    %vm189 = vcmask 130048
    %190 = vst.msk [vmem:[#allocation2] sm:$0xff] %vm189, %v161
    %191 = vst.msk [vmem:[#allocation2 + $0x8] sm:$0xff] %vm189, %v162
    %192 = vst.msk [vmem:[#allocation2 + $0x10] sm:$0xff] %vm189, %v163
    %193 = vst.msk [vmem:[#allocation2 + $0x18] sm:$0xff] %vm189, %v164
    %194 = vst.msk [vmem:[#allocation2 + $0x20] sm:$0xff] %vm189, %v165
    %195 = vst.msk [vmem:[#allocation2 + $0x28] sm:$0xff] %vm189, %v166
    %196 = vst.msk [vmem:[#allocation2 + $0x30] sm:$0xff] %vm189, %v167
    %197 = vst.msk [vmem:[#allocation2 + $0x38] sm:$0xff] %vm189, %v168
    %198 = vst.msk [vmem:[#allocation2 + $0x40] sm:$0xff] %vm189, %v169
    %199 = vst.msk [vmem:[#allocation2 + $0x48] sm:$0xff] %vm189, %v170
    %200 = vst.msk [vmem:[#allocation2 + $0x50] sm:$0xff] %vm189, %v171
    %201 = vst.msk [vmem:[#allocation2 + $0x58] sm:$0xff] %vm189, %v172
    %vm202 = vcmask 123904
    %203 = vst.msk [vmem:[#allocation2 + $0x60] sm:$0x3] %vm202, %v173
    %v204 = vpack.c.bf16 %v162, %v161
    %v205 = vpack.c.bf16 %v164, %v163
    %v206 = vpack.c.bf16 %v166, %v165
    %v207 = vpack.c.bf16 %v168, %v167
    %v208 = vpack.c.bf16 %v170, %v169
    %v209 = vpack.c.bf16 %v172, %v171
    %v210 = vpack.c.bf16 %v173, %v173
    %v211 = vld [vmem:[%s1] sm:$0xf]
    %v212 = vld [vmem:[%s1 + $0x4] sm:$0xf]
    %v213 = vld [vmem:[%s1 + $0x8] sm:$0xf]
    %v214 = vld [vmem:[%s1 + $0xc] sm:$0xf]
    %v215 = vld [vmem:[%s1 + $0x10] sm:$0xf]
    %v216 = vld [vmem:[%s1 + $0x14] sm:$0xf]
    %v217 = vld [vmem:[%s1 + $0x18] sm:$0xf]
    %v218 = vld [vmem:[%s1 + $0x1c] sm:$0xf]
    %v219 = vld [vmem:[%s1 + $0x20] sm:$0xf]
    %v220 = vld [vmem:[%s1 + $0x24] sm:$0xf]
    %v221 = vld [vmem:[%s1 + $0x28] sm:$0xf]
    %v222 = vld [vmem:[%s1 + $0x2c] sm:$0xf]
    %v223 = vld [vmem:[%s1 + $0x30] sm:$0x1]
    %v237 = vunpack.c.l.b16 %v211
    %v238 = vunpack.c.l.b16 %v212
    %v239 = vunpack.c.l.b16 %v213
    %v240 = vunpack.c.l.b16 %v214
    %v241 = vunpack.c.l.b16 %v215
    %v242 = vunpack.c.l.b16 %v216
    %v243 = vunpack.c.l.b16 %v217
    %v244 = vunpack.c.l.b16 %v218
    %v245 = vunpack.c.l.b16 %v219
    %v246 = vunpack.c.l.b16 %v220
    %v247 = vunpack.c.l.b16 %v221
    %v248 = vunpack.c.l.b16 %v222
    %v249 = vunpack.c.l.b16 %v223
    %v250 = vpack.c.b16 %v238, %v237
    %v251 = vpack.c.b16 %v240, %v239
    %v252 = vpack.c.b16 %v242, %v241
    %v253 = vpack.c.b16 %v244, %v243
    %v254 = vpack.c.b16 %v246, %v245
    %v255 = vpack.c.b16 %v248, %v247
    %v256 = vpack.c.b16 %v249, %v249
    %vm257 = vcmask 801792
    %v259 = vsel %vm257, %v250, 0
    %v262 = vsel %vm257, %v251, 0
    %v265 = vsel %vm257, %v252, 0
    %v268 = vsel %vm257, %v253, 0
    %v271 = vsel %vm257, %v254, 0
    %v274 = vsel %vm257, %v255, 0
    %v277 = vsel %vm257, %v256, 0
    %vm279 = vcmask 1040384
    %v281 = vsel %vm279, %v210, 0
    %283 = vmatpush.bf16.msra.mxu0 0
    %284 = vmatpush.bf16.msra.mxu0 %v281
    %285 = vmatpush.bf16.msra.mxu0 %v209
    %286 = vmatpush.bf16.msra.mxu0 %v208
    %287 = vmatpush.bf16.msra.mxu0 %v207
    %288 = vmatpush.bf16.msra.mxu0 %v206
    %289 = vmatpush.bf16.msra.mxu0 %v205
    %290 = vmatpush.bf16.msra.mxu0 %v204
    %291 = vmatmul.bf16.gmra.mxu0 %v259
    %v292 = vpop.f32.mrf.mxu0
    %v293 = vadd.f32 0.0, %v292
    %v294 = vpop.f32.mrf.mxu0
    %v295 = vadd.f32 0.0, %v294
    %296 = vmatmul.bf16.gmra.mxu0 %v262
    %v297 = vpop.f32.mrf.mxu0
    %v298 = vadd.f32 0.0, %v297
    %v299 = vpop.f32.mrf.mxu0
    %v300 = vadd.f32 0.0, %v299
    %301 = vmatmul.bf16.gmra.mxu0 %v265
    %v302 = vpop.f32.mrf.mxu0
    %v303 = vadd.f32 0.0, %v302
    %v304 = vpop.f32.mrf.mxu0
    %v305 = vadd.f32 0.0, %v304
    %306 = vmatmul.bf16.gmra.mxu0 %v268
    %v307 = vpop.f32.mrf.mxu0
    %v308 = vadd.f32 0.0, %v307
    %v309 = vpop.f32.mrf.mxu0
    %v310 = vadd.f32 0.0, %v309
    %311 = vmatmul.bf16.gmra.mxu0 %v271
    %v312 = vpop.f32.mrf.mxu0
    %v313 = vadd.f32 0.0, %v312
    %v314 = vpop.f32.mrf.mxu0
    %v315 = vadd.f32 0.0, %v314
    %316 = vmatmul.bf16.gmra.mxu0 %v274
    %v317 = vpop.f32.mrf.mxu0
    %v318 = vadd.f32 0.0, %v317
    %v319 = vpop.f32.mrf.mxu0
    %v320 = vadd.f32 0.0, %v319
    %321 = vmatmul.bf16.gmra.mxu0 %v277
    %v322 = vpop.f32.mrf.mxu0
    %v323 = vadd.f32 0.0, %v322
    %v324 = vpop.f32.mrf.mxu0
    %325 = vdwg.mxu0
    %326 = vst.msk [vmem:[#allocation3] sm:$0xff] %vm189, %v293
    %327 = vst.msk [vmem:[#allocation3 + $0x10] sm:$0xff] %vm189, %v295
    %328 = vst.msk [vmem:[#allocation3 + $0x20] sm:$0xff] %vm189, %v298
    %329 = vst.msk [vmem:[#allocation3 + $0x30] sm:$0xff] %vm189, %v300
    %330 = vst.msk [vmem:[#allocation3 + $0x40] sm:$0xff] %vm189, %v303
    %331 = vst.msk [vmem:[#allocation3 + $0x50] sm:$0xff] %vm189, %v305
    %332 = vst.msk [vmem:[#allocation3 + $0x60] sm:$0xff] %vm189, %v308
    %333 = vst.msk [vmem:[#allocation3 + $0x70] sm:$0xff] %vm189, %v310
    %334 = vst.msk [vmem:[#allocation3 + $0x80] sm:$0xff] %vm189, %v313
    %335 = vst.msk [vmem:[#allocation3 + $0x90] sm:$0xff] %vm189, %v315
    %336 = vst.msk [vmem:[#allocation3 + $0xa0] sm:$0xff] %vm189, %v318
    %337 = vst.msk [vmem:[#allocation3 + $0xb0] sm:$0xff] %vm189, %v320
    %338 = vst.msk [vmem:[#allocation3 + $0xc0] sm:$0x3] %vm202, %v323
    %s339 = scalar_lea.vmem %s1, 52
    %v340 = vld [vmem:[%s339] sm:$0xf]
    %v341 = vld [vmem:[%s339 + $0x4] sm:$0xf]
    %v342 = vld [vmem:[%s339 + $0x8] sm:$0xf]
    %v343 = vld [vmem:[%s339 + $0xc] sm:$0xf]
    %v344 = vld [vmem:[%s339 + $0x10] sm:$0xf]
    %v345 = vld [vmem:[%s339 + $0x14] sm:$0xf]
    %v346 = vld [vmem:[%s339 + $0x18] sm:$0xf]
    %v347 = vld [vmem:[%s339 + $0x1c] sm:$0xf]
    %v348 = vld [vmem:[%s339 + $0x20] sm:$0xf]
    %v349 = vld [vmem:[%s339 + $0x24] sm:$0xf]
    %v350 = vld [vmem:[%s339 + $0x28] sm:$0xf]
    %v351 = vld [vmem:[%s339 + $0x2c] sm:$0xf]
    %v352 = vld [vmem:[%s339 + $0x30] sm:$0x1]
    %v366 = vunpack.c.l.b16 %v340
    %v367 = vunpack.c.l.b16 %v341
    %v368 = vunpack.c.l.b16 %v342
    %v369 = vunpack.c.l.b16 %v343
    %v370 = vunpack.c.l.b16 %v344
    %v371 = vunpack.c.l.b16 %v345
    %v372 = vunpack.c.l.b16 %v346
    %v373 = vunpack.c.l.b16 %v347
    %v374 = vunpack.c.l.b16 %v348
    %v375 = vunpack.c.l.b16 %v349
    %v376 = vunpack.c.l.b16 %v350
    %v377 = vunpack.c.l.b16 %v351
    %v378 = vunpack.c.l.b16 %v352
    %v379 = vpack.c.b16 %v367, %v366
    %v380 = vpack.c.b16 %v369, %v368
    %v381 = vpack.c.b16 %v371, %v370
    %v382 = vpack.c.b16 %v373, %v372
    %v383 = vpack.c.b16 %v375, %v374
    %v384 = vpack.c.b16 %v377, %v376
    %v385 = vpack.c.b16 %v378, %v378
    %v387 = vsel %vm257, %v379, 0
    %v390 = vsel %vm257, %v380, 0
    %v393 = vsel %vm257, %v381, 0
    %v396 = vsel %vm257, %v382, 0
    %v399 = vsel %vm257, %v383, 0
    %v402 = vsel %vm257, %v384, 0
    %v405 = vsel %vm257, %v385, 0
    %407 = vmatpush.bf16.msra.mxu0 0
    %408 = vmatpush.bf16.msra.mxu0 %v281
    %409 = vmatpush.bf16.msra.mxu0 %v209
    %410 = vmatpush.bf16.msra.mxu0 %v208
    %411 = vmatpush.bf16.msra.mxu0 %v207
    %412 = vmatpush.bf16.msra.mxu0 %v206
    %413 = vmatpush.bf16.msra.mxu0 %v205
    %414 = vmatpush.bf16.msra.mxu0 %v204
    %415 = vmatmul.bf16.gmra.mxu0 %v387
    %v416 = vpop.f32.mrf.mxu0
    %v417 = vadd.f32 0.0, %v416
    %v418 = vpop.f32.mrf.mxu0
    %v419 = vadd.f32 0.0, %v418
    %420 = vmatmul.bf16.gmra.mxu0 %v390
    %v421 = vpop.f32.mrf.mxu0
    %v422 = vadd.f32 0.0, %v421
    %v423 = vpop.f32.mrf.mxu0
    %v424 = vadd.f32 0.0, %v423
    %425 = vmatmul.bf16.gmra.mxu0 %v393
    %v426 = vpop.f32.mrf.mxu0
    %v427 = vadd.f32 0.0, %v426
    %v428 = vpop.f32.mrf.mxu0
    %v429 = vadd.f32 0.0, %v428
    %430 = vmatmul.bf16.gmra.mxu0 %v396
    %v431 = vpop.f32.mrf.mxu0
    %v432 = vadd.f32 0.0, %v431
    %v433 = vpop.f32.mrf.mxu0
    %v434 = vadd.f32 0.0, %v433
    %435 = vmatmul.bf16.gmra.mxu0 %v399
    %v436 = vpop.f32.mrf.mxu0
    %v437 = vadd.f32 0.0, %v436
    %v438 = vpop.f32.mrf.mxu0
    %v439 = vadd.f32 0.0, %v438
    %440 = vmatmul.bf16.gmra.mxu0 %v402
    %v441 = vpop.f32.mrf.mxu0
    %v442 = vadd.f32 0.0, %v441
    %v443 = vpop.f32.mrf.mxu0
    %v444 = vadd.f32 0.0, %v443
    %445 = vmatmul.bf16.gmra.mxu0 %v405
    %v446 = vpop.f32.mrf.mxu0
    %v447 = vadd.f32 0.0, %v446
    %v448 = vpop.f32.mrf.mxu0
    %449 = vdwg.mxu0
    %463 = vrot.lane.b32.xlu0 %v417, 16
    %v464 = vpop.permute.xlu0 %463
    %465 = vrot.lane.b32.xlu0 %v419, 16
    %v466 = vpop.permute.xlu0 %465
    %467 = vrot.lane.b32.xlu0 %v422, 16
    %v468 = vpop.permute.xlu0 %467
    %469 = vrot.lane.b32.xlu0 %v424, 16
    %v470 = vpop.permute.xlu0 %469
    %471 = vrot.lane.b32.xlu0 %v427, 16
    %v472 = vpop.permute.xlu0 %471
    %473 = vrot.lane.b32.xlu0 %v429, 16
    %v474 = vpop.permute.xlu0 %473
    %475 = vrot.lane.b32.xlu0 %v432, 16
    %v476 = vpop.permute.xlu0 %475
    %477 = vrot.lane.b32.xlu0 %v434, 16
    %v478 = vpop.permute.xlu0 %477
    %479 = vrot.lane.b32.xlu0 %v437, 16
    %v480 = vpop.permute.xlu0 %479
    %481 = vrot.lane.b32.xlu0 %v439, 16
    %v482 = vpop.permute.xlu0 %481
    %483 = vrot.lane.b32.xlu0 %v442, 16
    %v484 = vpop.permute.xlu0 %483
    %485 = vrot.lane.b32.xlu0 %v444, 16
    %v486 = vpop.permute.xlu0 %485
    %487 = vrot.lane.b32.xlu0 %v447, 16
    %v488 = vpop.permute.xlu0 %487
    %vm502 = vcmask 261248
    %503 = vst.msk [vmem:[#allocation3] sm:$0xff] %vm502, %v464
    %504 = vst.msk [vmem:[#allocation3 + $0x10] sm:$0xff] %vm502, %v466
    %505 = vst.msk [vmem:[#allocation3 + $0x20] sm:$0xff] %vm502, %v468
    %506 = vst.msk [vmem:[#allocation3 + $0x30] sm:$0xff] %vm502, %v470
    %507 = vst.msk [vmem:[#allocation3 + $0x40] sm:$0xff] %vm502, %v472
    %508 = vst.msk [vmem:[#allocation3 + $0x50] sm:$0xff] %vm502, %v474
    %509 = vst.msk [vmem:[#allocation3 + $0x60] sm:$0xff] %vm502, %v476
    %510 = vst.msk [vmem:[#allocation3 + $0x70] sm:$0xff] %vm502, %v478
    %511 = vst.msk [vmem:[#allocation3 + $0x80] sm:$0xff] %vm502, %v480
    %512 = vst.msk [vmem:[#allocation3 + $0x90] sm:$0xff] %vm502, %v482
    %513 = vst.msk [vmem:[#allocation3 + $0xa0] sm:$0xff] %vm502, %v484
    %514 = vst.msk [vmem:[#allocation3 + $0xb0] sm:$0xff] %vm502, %v486
    %vm515 = vcmask 255104
    %516 = vst.msk [vmem:[#allocation3 + $0xc0] sm:$0x3] %vm515, %v488
    %s517 = scalar_lea.vmem %s1, 104
    %v518 = vld [vmem:[%s517] sm:$0xf]
    %v519 = vld [vmem:[%s517 + $0x4] sm:$0xf]
    %v520 = vld [vmem:[%s517 + $0x8] sm:$0xf]
    %v521 = vld [vmem:[%s517 + $0xc] sm:$0xf]
    %v522 = vld [vmem:[%s517 + $0x10] sm:$0xf]
    %v523 = vld [vmem:[%s517 + $0x14] sm:$0xf]
    %v524 = vld [vmem:[%s517 + $0x18] sm:$0xf]
    %v525 = vld [vmem:[%s517 + $0x1c] sm:$0xf]
    %v526 = vld [vmem:[%s517 + $0x20] sm:$0xf]
    %v527 = vld [vmem:[%s517 + $0x24] sm:$0xf]
    %v528 = vld [vmem:[%s517 + $0x28] sm:$0xf]
    %v529 = vld [vmem:[%s517 + $0x2c] sm:$0xf]
    %v530 = vld [vmem:[%s517 + $0x30] sm:$0x1]
    %v544 = vunpack.c.l.b16 %v518
    %v545 = vunpack.c.l.b16 %v519
    %v546 = vunpack.c.l.b16 %v520
    %v547 = vunpack.c.l.b16 %v521
    %v548 = vunpack.c.l.b16 %v522
    %v549 = vunpack.c.l.b16 %v523
    %v550 = vunpack.c.l.b16 %v524
    %v551 = vunpack.c.l.b16 %v525
    %v552 = vunpack.c.l.b16 %v526
    %v553 = vunpack.c.l.b16 %v527
    %v554 = vunpack.c.l.b16 %v528
    %v555 = vunpack.c.l.b16 %v529
    %v556 = vunpack.c.l.b16 %v530
    %v557 = vpack.c.b16 %v545, %v544
    %v558 = vpack.c.b16 %v547, %v546
    %v559 = vpack.c.b16 %v549, %v548
    %v560 = vpack.c.b16 %v551, %v550
    %v561 = vpack.c.b16 %v553, %v552
    %v562 = vpack.c.b16 %v555, %v554
    %v563 = vpack.c.b16 %v556, %v556
    %v565 = vsel %vm257, %v557, 0
    %v568 = vsel %vm257, %v558, 0
    %v571 = vsel %vm257, %v559, 0
    %v574 = vsel %vm257, %v560, 0
    %v577 = vsel %vm257, %v561, 0
    %v580 = vsel %vm257, %v562, 0
    %v583 = vsel %vm257, %v563, 0
    %585 = vmatpush.bf16.msra.mxu0 0
    %586 = vmatpush.bf16.msra.mxu0 %v281
    %587 = vmatpush.bf16.msra.mxu0 %v209
    %588 = vmatpush.bf16.msra.mxu0 %v208
    %589 = vmatpush.bf16.msra.mxu0 %v207
    %590 = vmatpush.bf16.msra.mxu0 %v206
    %591 = vmatpush.bf16.msra.mxu0 %v205
    %592 = vmatpush.bf16.msra.mxu0 %v204
    %593 = vmatmul.bf16.gmra.mxu0 %v565
    %v594 = vpop.f32.mrf.mxu0
    %v595 = vadd.f32 0.0, %v594
    %v596 = vpop.f32.mrf.mxu0
    %v597 = vadd.f32 0.0, %v596
    %598 = vmatmul.bf16.gmra.mxu0 %v568
    %v599 = vpop.f32.mrf.mxu0
    %v600 = vadd.f32 0.0, %v599
    %v601 = vpop.f32.mrf.mxu0
    %v602 = vadd.f32 0.0, %v601
    %603 = vmatmul.bf16.gmra.mxu0 %v571
    %v604 = vpop.f32.mrf.mxu0
    %v605 = vadd.f32 0.0, %v604
    %v606 = vpop.f32.mrf.mxu0
    %v607 = vadd.f32 0.0, %v606
    %608 = vmatmul.bf16.gmra.mxu0 %v574
    %v609 = vpop.f32.mrf.mxu0
    %v610 = vadd.f32 0.0, %v609
    %v611 = vpop.f32.mrf.mxu0
    %v612 = vadd.f32 0.0, %v611
    %613 = vmatmul.bf16.gmra.mxu0 %v577
    %v614 = vpop.f32.mrf.mxu0
    %v615 = vadd.f32 0.0, %v614
    %v616 = vpop.f32.mrf.mxu0
    %v617 = vadd.f32 0.0, %v616
    %618 = vmatmul.bf16.gmra.mxu0 %v580
    %v619 = vpop.f32.mrf.mxu0
    %v620 = vadd.f32 0.0, %v619
    %v621 = vpop.f32.mrf.mxu0
    %v622 = vadd.f32 0.0, %v621
    %623 = vmatmul.bf16.gmra.mxu0 %v583
    %v624 = vpop.f32.mrf.mxu0
    %v625 = vadd.f32 0.0, %v624
    %v626 = vpop.f32.mrf.mxu0
    %627 = vdwg.mxu0
    %641 = vrot.lane.b32.xlu0 %v595, 32
    %v642 = vpop.permute.xlu0 %641
    %643 = vrot.lane.b32.xlu0 %v597, 32
    %v644 = vpop.permute.xlu0 %643
    %645 = vrot.lane.b32.xlu0 %v600, 32
    %v646 = vpop.permute.xlu0 %645
    %647 = vrot.lane.b32.xlu0 %v602, 32
    %v648 = vpop.permute.xlu0 %647
    %649 = vrot.lane.b32.xlu0 %v605, 32
    %v650 = vpop.permute.xlu0 %649
    %651 = vrot.lane.b32.xlu0 %v607, 32
    %v652 = vpop.permute.xlu0 %651
    %653 = vrot.lane.b32.xlu0 %v610, 32
    %v654 = vpop.permute.xlu0 %653
    %655 = vrot.lane.b32.xlu0 %v612, 32
    %v656 = vpop.permute.xlu0 %655
    %657 = vrot.lane.b32.xlu0 %v615, 32
    %v658 = vpop.permute.xlu0 %657
    %659 = vrot.lane.b32.xlu0 %v617, 32
    %v660 = vpop.permute.xlu0 %659
    %661 = vrot.lane.b32.xlu0 %v620, 32
    %v662 = vpop.permute.xlu0 %661
    %663 = vrot.lane.b32.xlu0 %v622, 32
    %v664 = vpop.permute.xlu0 %663
    %665 = vrot.lane.b32.xlu0 %v625, 32
    %v666 = vpop.permute.xlu0 %665
    %vm680 = vcmask 392448
    %681 = vst.msk [vmem:[#allocation3] sm:$0xff] %vm680, %v642
    %682 = vst.msk [vmem:[#allocation3 + $0x10] sm:$0xff] %vm680, %v644
    %683 = vst.msk [vmem:[#allocation3 + $0x20] sm:$0xff] %vm680, %v646
    %684 = vst.msk [vmem:[#allocation3 + $0x30] sm:$0xff] %vm680, %v648
    %685 = vst.msk [vmem:[#allocation3 + $0x40] sm:$0xff] %vm680, %v650
    %686 = vst.msk [vmem:[#allocation3 + $0x50] sm:$0xff] %vm680, %v652
    %687 = vst.msk [vmem:[#allocation3 + $0x60] sm:$0xff] %vm680, %v654
    %688 = vst.msk [vmem:[#allocation3 + $0x70] sm:$0xff] %vm680, %v656
    %689 = vst.msk [vmem:[#allocation3 + $0x80] sm:$0xff] %vm680, %v658
    %690 = vst.msk [vmem:[#allocation3 + $0x90] sm:$0xff] %vm680, %v660
    %691 = vst.msk [vmem:[#allocation3 + $0xa0] sm:$0xff] %vm680, %v662
    %692 = vst.msk [vmem:[#allocation3 + $0xb0] sm:$0xff] %vm680, %v664
    %vm693 = vcmask 386304
    %694 = vst.msk [vmem:[#allocation3 + $0xc0] sm:$0x3] %vm693, %v666
    %s695 = scalar_lea.vmem %s1, 156
    %v696 = vld [vmem:[%s695] sm:$0xf]
    %v697 = vld [vmem:[%s695 + $0x4] sm:$0xf]
    %v698 = vld [vmem:[%s695 + $0x8] sm:$0xf]
    %v699 = vld [vmem:[%s695 + $0xc] sm:$0xf]
    %v700 = vld [vmem:[%s695 + $0x10] sm:$0xf]
    %v701 = vld [vmem:[%s695 + $0x14] sm:$0xf]
    %v702 = vld [vmem:[%s695 + $0x18] sm:$0xf]
    %v703 = vld [vmem:[%s695 + $0x1c] sm:$0xf]
    %v704 = vld [vmem:[%s695 + $0x20] sm:$0xf]
    %v705 = vld [vmem:[%s695 + $0x24] sm:$0xf]
    %v706 = vld [vmem:[%s695 + $0x28] sm:$0xf]
    %v707 = vld [vmem:[%s695 + $0x2c] sm:$0xf]
    %v708 = vld [vmem:[%s695 + $0x30] sm:$0x1]
    %v722 = vunpack.c.l.b16 %v696
    %v723 = vunpack.c.l.b16 %v697
    %v724 = vunpack.c.l.b16 %v698
    %v725 = vunpack.c.l.b16 %v699
    %v726 = vunpack.c.l.b16 %v700
    %v727 = vunpack.c.l.b16 %v701
    %v728 = vunpack.c.l.b16 %v702
    %v729 = vunpack.c.l.b16 %v703
    %v730 = vunpack.c.l.b16 %v704
    %v731 = vunpack.c.l.b16 %v705
    %v732 = vunpack.c.l.b16 %v706
    %v733 = vunpack.c.l.b16 %v707
    %v734 = vunpack.c.l.b16 %v708
    %v735 = vpack.c.b16 %v723, %v722
    %v736 = vpack.c.b16 %v725, %v724
    %v737 = vpack.c.b16 %v727, %v726
    %v738 = vpack.c.b16 %v729, %v728
    %v739 = vpack.c.b16 %v731, %v730
    %v740 = vpack.c.b16 %v733, %v732
    %v741 = vpack.c.b16 %v734, %v734
    %v743 = vsel %vm257, %v735, 0
    %v746 = vsel %vm257, %v736, 0
    %v749 = vsel %vm257, %v737, 0
    %v752 = vsel %vm257, %v738, 0
    %v755 = vsel %vm257, %v739, 0
    %v758 = vsel %vm257, %v740, 0
    %v761 = vsel %vm257, %v741, 0
    %763 = vmatpush.bf16.msra.mxu0 0
    %764 = vmatpush.bf16.msra.mxu0 %v281
    %765 = vmatpush.bf16.msra.mxu0 %v209
    %766 = vmatpush.bf16.msra.mxu0 %v208
    %767 = vmatpush.bf16.msra.mxu0 %v207
    %768 = vmatpush.bf16.msra.mxu0 %v206
    %769 = vmatpush.bf16.msra.mxu0 %v205
    %770 = vmatpush.bf16.msra.mxu0 %v204
    %771 = vmatmul.bf16.gmra.mxu0 %v743
    %v772 = vpop.f32.mrf.mxu0
    %v773 = vadd.f32 0.0, %v772
    %v774 = vpop.f32.mrf.mxu0
    %v775 = vadd.f32 0.0, %v774
    %776 = vmatmul.bf16.gmra.mxu0 %v746
    %v777 = vpop.f32.mrf.mxu0
    %v778 = vadd.f32 0.0, %v777
    %v779 = vpop.f32.mrf.mxu0
    %v780 = vadd.f32 0.0, %v779
    %781 = vmatmul.bf16.gmra.mxu0 %v749
    %v782 = vpop.f32.mrf.mxu0
    %v783 = vadd.f32 0.0, %v782
    %v784 = vpop.f32.mrf.mxu0
    %v785 = vadd.f32 0.0, %v784
    %786 = vmatmul.bf16.gmra.mxu0 %v752
    %v787 = vpop.f32.mrf.mxu0
    %v788 = vadd.f32 0.0, %v787
    %v789 = vpop.f32.mrf.mxu0
    %v790 = vadd.f32 0.0, %v789
    %791 = vmatmul.bf16.gmra.mxu0 %v755
    %v792 = vpop.f32.mrf.mxu0
    %v793 = vadd.f32 0.0, %v792
    %v794 = vpop.f32.mrf.mxu0
    %v795 = vadd.f32 0.0, %v794
    %796 = vmatmul.bf16.gmra.mxu0 %v758
    %v797 = vpop.f32.mrf.mxu0
    %v798 = vadd.f32 0.0, %v797
    %v799 = vpop.f32.mrf.mxu0
    %v800 = vadd.f32 0.0, %v799
    %801 = vmatmul.bf16.gmra.mxu0 %v761
    %v802 = vpop.f32.mrf.mxu0
    %v803 = vadd.f32 0.0, %v802
    %v804 = vpop.f32.mrf.mxu0
    %805 = vdwg.mxu0
    %819 = vrot.lane.b32.xlu0 %v773, 48
    %v820 = vpop.permute.xlu0 %819
    %821 = vrot.lane.b32.xlu0 %v775, 48
    %v822 = vpop.permute.xlu0 %821
    %823 = vrot.lane.b32.xlu0 %v778, 48
    %v824 = vpop.permute.xlu0 %823
    %825 = vrot.lane.b32.xlu0 %v780, 48
    %v826 = vpop.permute.xlu0 %825
    %827 = vrot.lane.b32.xlu0 %v783, 48
    %v828 = vpop.permute.xlu0 %827
    %829 = vrot.lane.b32.xlu0 %v785, 48
    %v830 = vpop.permute.xlu0 %829
    %831 = vrot.lane.b32.xlu0 %v788, 48
    %v832 = vpop.permute.xlu0 %831
    %833 = vrot.lane.b32.xlu0 %v790, 48
    %v834 = vpop.permute.xlu0 %833
    %835 = vrot.lane.b32.xlu0 %v793, 48
    %v836 = vpop.permute.xlu0 %835
    %837 = vrot.lane.b32.xlu0 %v795, 48
    %v838 = vpop.permute.xlu0 %837
    %839 = vrot.lane.b32.xlu0 %v798, 48
    %v840 = vpop.permute.xlu0 %839
    %841 = vrot.lane.b32.xlu0 %v800, 48
    %v842 = vpop.permute.xlu0 %841
    %843 = vrot.lane.b32.xlu0 %v803, 48
    %v844 = vpop.permute.xlu0 %843
    %vm858 = vcmask 523648
    %859 = vst.msk [vmem:[#allocation3] sm:$0xff] %vm858, %v820
    %860 = vst.msk [vmem:[#allocation3 + $0x10] sm:$0xff] %vm858, %v822
    %861 = vst.msk [vmem:[#allocation3 + $0x20] sm:$0xff] %vm858, %v824
    %862 = vst.msk [vmem:[#allocation3 + $0x30] sm:$0xff] %vm858, %v826
    %863 = vst.msk [vmem:[#allocation3 + $0x40] sm:$0xff] %vm858, %v828
    %864 = vst.msk [vmem:[#allocation3 + $0x50] sm:$0xff] %vm858, %v830
    %865 = vst.msk [vmem:[#allocation3 + $0x60] sm:$0xff] %vm858, %v832
    %866 = vst.msk [vmem:[#allocation3 + $0x70] sm:$0xff] %vm858, %v834
    %867 = vst.msk [vmem:[#allocation3 + $0x80] sm:$0xff] %vm858, %v836
    %868 = vst.msk [vmem:[#allocation3 + $0x90] sm:$0xff] %vm858, %v838
    %869 = vst.msk [vmem:[#allocation3 + $0xa0] sm:$0xff] %vm858, %v840
    %870 = vst.msk [vmem:[#allocation3 + $0xb0] sm:$0xff] %vm858, %v842
    %vm871 = vcmask 517504
    %872 = vst.msk [vmem:[#allocation3 + $0xc0] sm:$0x3] %vm871, %v844
    %s873 = scalar_lea.vmem %s1, 208
    %v874 = vld [vmem:[%s873] sm:$0xf]
    %v875 = vld [vmem:[%s873 + $0x4] sm:$0xf]
    %v876 = vld [vmem:[%s873 + $0x8] sm:$0xf]
    %v877 = vld [vmem:[%s873 + $0xc] sm:$0xf]
    %v878 = vld [vmem:[%s873 + $0x10] sm:$0xf]
    %v879 = vld [vmem:[%s873 + $0x14] sm:$0xf]
    %v880 = vld [vmem:[%s873 + $0x18] sm:$0xf]
    %v881 = vld [vmem:[%s873 + $0x1c] sm:$0xf]
    %v882 = vld [vmem:[%s873 + $0x20] sm:$0xf]
    %v883 = vld [vmem:[%s873 + $0x24] sm:$0xf]
    %v884 = vld [vmem:[%s873 + $0x28] sm:$0xf]
    %v885 = vld [vmem:[%s873 + $0x2c] sm:$0xf]
    %v886 = vld [vmem:[%s873 + $0x30] sm:$0x1]
    %v900 = vunpack.c.l.b16 %v874
    %v901 = vunpack.c.l.b16 %v875
    %v902 = vunpack.c.l.b16 %v876
    %v903 = vunpack.c.l.b16 %v877
    %v904 = vunpack.c.l.b16 %v878
    %v905 = vunpack.c.l.b16 %v879
    %v906 = vunpack.c.l.b16 %v880
    %v907 = vunpack.c.l.b16 %v881
    %v908 = vunpack.c.l.b16 %v882
    %v909 = vunpack.c.l.b16 %v883
    %v910 = vunpack.c.l.b16 %v884
    %v911 = vunpack.c.l.b16 %v885
    %v912 = vunpack.c.l.b16 %v886
    %v913 = vpack.c.b16 %v901, %v900
    %v914 = vpack.c.b16 %v903, %v902
    %v915 = vpack.c.b16 %v905, %v904
    %v916 = vpack.c.b16 %v907, %v906
    %v917 = vpack.c.b16 %v909, %v908
    %v918 = vpack.c.b16 %v911, %v910
    %v919 = vpack.c.b16 %v912, %v912
    %v921 = vsel %vm257, %v913, 0
    %v924 = vsel %vm257, %v914, 0
    %v927 = vsel %vm257, %v915, 0
    %v930 = vsel %vm257, %v916, 0
    %v933 = vsel %vm257, %v917, 0
    %v936 = vsel %vm257, %v918, 0
    %v939 = vsel %vm257, %v919, 0
    %941 = vmatpush.bf16.msra.mxu0 0
    %942 = vmatpush.bf16.msra.mxu0 %v281
    %943 = vmatpush.bf16.msra.mxu0 %v209
    %944 = vmatpush.bf16.msra.mxu0 %v208
    %945 = vmatpush.bf16.msra.mxu0 %v207
    %946 = vmatpush.bf16.msra.mxu0 %v206
    %947 = vmatpush.bf16.msra.mxu0 %v205
    %948 = vmatpush.bf16.msra.mxu0 %v204
    %949 = vmatmul.bf16.gmra.mxu0 %v921
    %v950 = vpop.f32.mrf.mxu0
    %v951 = vadd.f32 0.0, %v950
    %v952 = vpop.f32.mrf.mxu0
    %v953 = vadd.f32 0.0, %v952
    %954 = vmatmul.bf16.gmra.mxu0 %v924
    %v955 = vpop.f32.mrf.mxu0
    %v956 = vadd.f32 0.0, %v955
    %v957 = vpop.f32.mrf.mxu0
    %v958 = vadd.f32 0.0, %v957
    %959 = vmatmul.bf16.gmra.mxu0 %v927
    %v960 = vpop.f32.mrf.mxu0
    %v961 = vadd.f32 0.0, %v960
    %v962 = vpop.f32.mrf.mxu0
    %v963 = vadd.f32 0.0, %v962
    %964 = vmatmul.bf16.gmra.mxu0 %v930
    %v965 = vpop.f32.mrf.mxu0
    %v966 = vadd.f32 0.0, %v965
    %v967 = vpop.f32.mrf.mxu0
    %v968 = vadd.f32 0.0, %v967
    %969 = vmatmul.bf16.gmra.mxu0 %v933
    %v970 = vpop.f32.mrf.mxu0
    %v971 = vadd.f32 0.0, %v970
    %v972 = vpop.f32.mrf.mxu0
    %v973 = vadd.f32 0.0, %v972
    %974 = vmatmul.bf16.gmra.mxu0 %v936
    %v975 = vpop.f32.mrf.mxu0
    %v976 = vadd.f32 0.0, %v975
    %v977 = vpop.f32.mrf.mxu0
    %v978 = vadd.f32 0.0, %v977
    %979 = vmatmul.bf16.gmra.mxu0 %v939
    %v980 = vpop.f32.mrf.mxu0
    %v981 = vadd.f32 0.0, %v980
    %v982 = vpop.f32.mrf.mxu0
    %983 = vdwg.mxu0
    %997 = vrot.lane.b32.xlu0 %v951, 64
    %v998 = vpop.permute.xlu0 %997
    %999 = vrot.lane.b32.xlu0 %v953, 64
    %v1000 = vpop.permute.xlu0 %999
    %1001 = vrot.lane.b32.xlu0 %v956, 64
    %v1002 = vpop.permute.xlu0 %1001
    %1003 = vrot.lane.b32.xlu0 %v958, 64
    %v1004 = vpop.permute.xlu0 %1003
    %1005 = vrot.lane.b32.xlu0 %v961, 64
    %v1006 = vpop.permute.xlu0 %1005
    %1007 = vrot.lane.b32.xlu0 %v963, 64
    %v1008 = vpop.permute.xlu0 %1007
    %1009 = vrot.lane.b32.xlu0 %v966, 64
    %v1010 = vpop.permute.xlu0 %1009
    %1011 = vrot.lane.b32.xlu0 %v968, 64
    %v1012 = vpop.permute.xlu0 %1011
    %1013 = vrot.lane.b32.xlu0 %v971, 64
    %v1014 = vpop.permute.xlu0 %1013
    %1015 = vrot.lane.b32.xlu0 %v973, 64
    %v1016 = vpop.permute.xlu0 %1015
    %1017 = vrot.lane.b32.xlu0 %v976, 64
    %v1018 = vpop.permute.xlu0 %1017
    %1019 = vrot.lane.b32.xlu0 %v978, 64
    %v1020 = vpop.permute.xlu0 %1019
    %1021 = vrot.lane.b32.xlu0 %v981, 64
    %v1022 = vpop.permute.xlu0 %1021
    %vm1036 = vcmask 654848
    %1037 = vst.msk [vmem:[#allocation3] sm:$0xff] %vm1036, %v998
    %1038 = vst.msk [vmem:[#allocation3 + $0x10] sm:$0xff] %vm1036, %v1000
    %1039 = vst.msk [vmem:[#allocation3 + $0x20] sm:$0xff] %vm1036, %v1002
    %1040 = vst.msk [vmem:[#allocation3 + $0x30] sm:$0xff] %vm1036, %v1004
    %1041 = vst.msk [vmem:[#allocation3 + $0x40] sm:$0xff] %vm1036, %v1006
    %1042 = vst.msk [vmem:[#allocation3 + $0x50] sm:$0xff] %vm1036, %v1008
    %1043 = vst.msk [vmem:[#allocation3 + $0x60] sm:$0xff] %vm1036, %v1010
    %1044 = vst.msk [vmem:[#allocation3 + $0x70] sm:$0xff] %vm1036, %v1012
    %1045 = vst.msk [vmem:[#allocation3 + $0x80] sm:$0xff] %vm1036, %v1014
    %1046 = vst.msk [vmem:[#allocation3 + $0x90] sm:$0xff] %vm1036, %v1016
    %1047 = vst.msk [vmem:[#allocation3 + $0xa0] sm:$0xff] %vm1036, %v1018
    %1048 = vst.msk [vmem:[#allocation3 + $0xb0] sm:$0xff] %vm1036, %v1020
    %vm1049 = vcmask 648704
    %1050 = vst.msk [vmem:[#allocation3 + $0xc0] sm:$0x3] %vm1049, %v1022
    %s1051 = scalar_lea.vmem %s1, 260
    %v1052 = vld [vmem:[%s1051] sm:$0xf]
    %v1053 = vld [vmem:[%s1051 + $0x4] sm:$0xf]
    %v1054 = vld [vmem:[%s1051 + $0x8] sm:$0xf]
    %v1055 = vld [vmem:[%s1051 + $0xc] sm:$0xf]
    %v1056 = vld [vmem:[%s1051 + $0x10] sm:$0xf]
    %v1057 = vld [vmem:[%s1051 + $0x14] sm:$0xf]
    %v1058 = vld [vmem:[%s1051 + $0x18] sm:$0xf]
    %v1059 = vld [vmem:[%s1051 + $0x1c] sm:$0xf]
    %v1060 = vld [vmem:[%s1051 + $0x20] sm:$0xf]
    %v1061 = vld [vmem:[%s1051 + $0x24] sm:$0xf]
    %v1062 = vld [vmem:[%s1051 + $0x28] sm:$0xf]
    %v1063 = vld [vmem:[%s1051 + $0x2c] sm:$0xf]
    %v1064 = vld [vmem:[%s1051 + $0x30] sm:$0x1]
    %v1078 = vunpack.c.l.b16 %v1052
    %v1079 = vunpack.c.l.b16 %v1053
    %v1080 = vunpack.c.l.b16 %v1054
    %v1081 = vunpack.c.l.b16 %v1055
    %v1082 = vunpack.c.l.b16 %v1056
    %v1083 = vunpack.c.l.b16 %v1057
    %v1084 = vunpack.c.l.b16 %v1058
    %v1085 = vunpack.c.l.b16 %v1059
    %v1086 = vunpack.c.l.b16 %v1060
    %v1087 = vunpack.c.l.b16 %v1061
    %v1088 = vunpack.c.l.b16 %v1062
    %v1089 = vunpack.c.l.b16 %v1063
    %v1090 = vunpack.c.l.b16 %v1064
    %v1091 = vpack.c.b16 %v1079, %v1078
    %v1092 = vpack.c.b16 %v1081, %v1080
    %v1093 = vpack.c.b16 %v1083, %v1082
    %v1094 = vpack.c.b16 %v1085, %v1084
    %v1095 = vpack.c.b16 %v1087, %v1086
    %v1096 = vpack.c.b16 %v1089, %v1088
    %v1097 = vpack.c.b16 %v1090, %v1090
    %v1099 = vsel %vm257, %v1091, 0
    %v1102 = vsel %vm257, %v1092, 0
    %v1105 = vsel %vm257, %v1093, 0
    %v1108 = vsel %vm257, %v1094, 0
    %v1111 = vsel %vm257, %v1095, 0
    %v1114 = vsel %vm257, %v1096, 0
    %v1117 = vsel %vm257, %v1097, 0
    %1119 = vmatpush.bf16.msra.mxu0 0
    %1120 = vmatpush.bf16.msra.mxu0 %v281
    %1121 = vmatpush.bf16.msra.mxu0 %v209
    %1122 = vmatpush.bf16.msra.mxu0 %v208
    %1123 = vmatpush.bf16.msra.mxu0 %v207
    %1124 = vmatpush.bf16.msra.mxu0 %v206
    %1125 = vmatpush.bf16.msra.mxu0 %v205
    %1126 = vmatpush.bf16.msra.mxu0 %v204
    %1127 = vmatmul.bf16.gmra.mxu0 %v1099
    %v1128 = vpop.f32.mrf.mxu0
    %v1129 = vadd.f32 0.0, %v1128
    %v1130 = vpop.f32.mrf.mxu0
    %v1131 = vadd.f32 0.0, %v1130
    %1132 = vmatmul.bf16.gmra.mxu0 %v1102
    %v1133 = vpop.f32.mrf.mxu0
    %v1134 = vadd.f32 0.0, %v1133
    %v1135 = vpop.f32.mrf.mxu0
    %v1136 = vadd.f32 0.0, %v1135
    %1137 = vmatmul.bf16.gmra.mxu0 %v1105
    %v1138 = vpop.f32.mrf.mxu0
    %v1139 = vadd.f32 0.0, %v1138
    %v1140 = vpop.f32.mrf.mxu0
    %v1141 = vadd.f32 0.0, %v1140
    %1142 = vmatmul.bf16.gmra.mxu0 %v1108
    %v1143 = vpop.f32.mrf.mxu0
    %v1144 = vadd.f32 0.0, %v1143
    %v1145 = vpop.f32.mrf.mxu0
    %v1146 = vadd.f32 0.0, %v1145
    %1147 = vmatmul.bf16.gmra.mxu0 %v1111
    %v1148 = vpop.f32.mrf.mxu0
    %v1149 = vadd.f32 0.0, %v1148
    %v1150 = vpop.f32.mrf.mxu0
    %v1151 = vadd.f32 0.0, %v1150
    %1152 = vmatmul.bf16.gmra.mxu0 %v1114
    %v1153 = vpop.f32.mrf.mxu0
    %v1154 = vadd.f32 0.0, %v1153
    %v1155 = vpop.f32.mrf.mxu0
    %v1156 = vadd.f32 0.0, %v1155
    %1157 = vmatmul.bf16.gmra.mxu0 %v1117
    %v1158 = vpop.f32.mrf.mxu0
    %v1159 = vadd.f32 0.0, %v1158
    %v1160 = vpop.f32.mrf.mxu0
    %1161 = vdwg.mxu0
    %1175 = vrot.lane.b32.xlu0 %v1129, 80
    %v1176 = vpop.permute.xlu0 %1175
    %1177 = vrot.lane.b32.xlu0 %v1131, 80
    %v1178 = vpop.permute.xlu0 %1177
    %1179 = vrot.lane.b32.xlu0 %v1134, 80
    %v1180 = vpop.permute.xlu0 %1179
    %1181 = vrot.lane.b32.xlu0 %v1136, 80
    %v1182 = vpop.permute.xlu0 %1181
    %1183 = vrot.lane.b32.xlu0 %v1139, 80
    %v1184 = vpop.permute.xlu0 %1183
    %1185 = vrot.lane.b32.xlu0 %v1141, 80
    %v1186 = vpop.permute.xlu0 %1185
    %1187 = vrot.lane.b32.xlu0 %v1144, 80
    %v1188 = vpop.permute.xlu0 %1187
    %1189 = vrot.lane.b32.xlu0 %v1146, 80
    %v1190 = vpop.permute.xlu0 %1189
    %1191 = vrot.lane.b32.xlu0 %v1149, 80
    %v1192 = vpop.permute.xlu0 %1191
    %1193 = vrot.lane.b32.xlu0 %v1151, 80
    %v1194 = vpop.permute.xlu0 %1193
    %1195 = vrot.lane.b32.xlu0 %v1154, 80
    %v1196 = vpop.permute.xlu0 %1195
    %1197 = vrot.lane.b32.xlu0 %v1156, 80
    %v1198 = vpop.permute.xlu0 %1197
    %1199 = vrot.lane.b32.xlu0 %v1159, 80
    %v1200 = vpop.permute.xlu0 %1199
    %vm1214 = vcmask 786048
    %1215 = vst.msk [vmem:[#allocation3] sm:$0xff] %vm1214, %v1176
    %1216 = vst.msk [vmem:[#allocation3 + $0x10] sm:$0xff] %vm1214, %v1178
    %1217 = vst.msk [vmem:[#allocation3 + $0x20] sm:$0xff] %vm1214, %v1180
    %1218 = vst.msk [vmem:[#allocation3 + $0x30] sm:$0xff] %vm1214, %v1182
    %1219 = vst.msk [vmem:[#allocation3 + $0x40] sm:$0xff] %vm1214, %v1184
    %1220 = vst.msk [vmem:[#allocation3 + $0x50] sm:$0xff] %vm1214, %v1186
    %1221 = vst.msk [vmem:[#allocation3 + $0x60] sm:$0xff] %vm1214, %v1188
    %1222 = vst.msk [vmem:[#allocation3 + $0x70] sm:$0xff] %vm1214, %v1190
    %1223 = vst.msk [vmem:[#allocation3 + $0x80] sm:$0xff] %vm1214, %v1192
    %1224 = vst.msk [vmem:[#allocation3 + $0x90] sm:$0xff] %vm1214, %v1194
    %1225 = vst.msk [vmem:[#allocation3 + $0xa0] sm:$0xff] %vm1214, %v1196
    %1226 = vst.msk [vmem:[#allocation3 + $0xb0] sm:$0xff] %vm1214, %v1198
    %vm1227 = vcmask 779904
    %1228 = vst.msk [vmem:[#allocation3 + $0xc0] sm:$0x3] %vm1227, %v1200
    %s1229 = scalar_lea.vmem %s1, 312
    %v1230 = vld [vmem:[%s1229] sm:$0xf]
    %v1231 = vld [vmem:[%s1229 + $0x4] sm:$0xf]
    %v1232 = vld [vmem:[%s1229 + $0x8] sm:$0xf]
    %v1233 = vld [vmem:[%s1229 + $0xc] sm:$0xf]
    %v1234 = vld [vmem:[%s1229 + $0x10] sm:$0xf]
    %v1235 = vld [vmem:[%s1229 + $0x14] sm:$0xf]
    %v1236 = vld [vmem:[%s1229 + $0x18] sm:$0xf]
    %v1237 = vld [vmem:[%s1229 + $0x1c] sm:$0xf]
    %v1238 = vld [vmem:[%s1229 + $0x20] sm:$0xf]
    %v1239 = vld [vmem:[%s1229 + $0x24] sm:$0xf]
    %v1240 = vld [vmem:[%s1229 + $0x28] sm:$0xf]
    %v1241 = vld [vmem:[%s1229 + $0x2c] sm:$0xf]
    %v1242 = vld [vmem:[%s1229 + $0x30] sm:$0x1]
    %v1256 = vunpack.c.l.b16 %v1230
    %v1257 = vunpack.c.l.b16 %v1231
    %v1258 = vunpack.c.l.b16 %v1232
    %v1259 = vunpack.c.l.b16 %v1233
    %v1260 = vunpack.c.l.b16 %v1234
    %v1261 = vunpack.c.l.b16 %v1235
    %v1262 = vunpack.c.l.b16 %v1236
    %v1263 = vunpack.c.l.b16 %v1237
    %v1264 = vunpack.c.l.b16 %v1238
    %v1265 = vunpack.c.l.b16 %v1239
    %v1266 = vunpack.c.l.b16 %v1240
    %v1267 = vunpack.c.l.b16 %v1241
    %v1268 = vunpack.c.l.b16 %v1242
    %v1269 = vpack.c.b16 %v1257, %v1256
    %v1270 = vpack.c.b16 %v1259, %v1258
    %v1271 = vpack.c.b16 %v1261, %v1260
    %v1272 = vpack.c.b16 %v1263, %v1262
    %v1273 = vpack.c.b16 %v1265, %v1264
    %v1274 = vpack.c.b16 %v1267, %v1266
    %v1275 = vpack.c.b16 %v1268, %v1268
    %v1277 = vsel %vm257, %v1269, 0
    %v1280 = vsel %vm257, %v1270, 0
    %v1283 = vsel %vm257, %v1271, 0
    %v1286 = vsel %vm257, %v1272, 0
    %v1289 = vsel %vm257, %v1273, 0
    %v1292 = vsel %vm257, %v1274, 0
    %v1295 = vsel %vm257, %v1275, 0
    %1297 = vmatpush.bf16.msra.mxu0 0
    %1298 = vmatpush.bf16.msra.mxu0 %v281
    %1299 = vmatpush.bf16.msra.mxu0 %v209
    %1300 = vmatpush.bf16.msra.mxu0 %v208
    %1301 = vmatpush.bf16.msra.mxu0 %v207
    %1302 = vmatpush.bf16.msra.mxu0 %v206
    %1303 = vmatpush.bf16.msra.mxu0 %v205
    %1304 = vmatpush.bf16.msra.mxu0 %v204
    %1305 = vmatmul.bf16.gmra.mxu0 %v1277
    %v1306 = vpop.f32.mrf.mxu0
    %v1307 = vadd.f32 0.0, %v1306
    %v1308 = vpop.f32.mrf.mxu0
    %v1309 = vadd.f32 0.0, %v1308
    %1310 = vmatmul.bf16.gmra.mxu0 %v1280
    %v1311 = vpop.f32.mrf.mxu0
    %v1312 = vadd.f32 0.0, %v1311
    %v1313 = vpop.f32.mrf.mxu0
    %v1314 = vadd.f32 0.0, %v1313
    %1315 = vmatmul.bf16.gmra.mxu0 %v1283
    %v1316 = vpop.f32.mrf.mxu0
    %v1317 = vadd.f32 0.0, %v1316
    %v1318 = vpop.f32.mrf.mxu0
    %v1319 = vadd.f32 0.0, %v1318
    %1320 = vmatmul.bf16.gmra.mxu0 %v1286
    %v1321 = vpop.f32.mrf.mxu0
    %v1322 = vadd.f32 0.0, %v1321
    %v1323 = vpop.f32.mrf.mxu0
    %v1324 = vadd.f32 0.0, %v1323
    %1325 = vmatmul.bf16.gmra.mxu0 %v1289
    %v1326 = vpop.f32.mrf.mxu0
    %v1327 = vadd.f32 0.0, %v1326
    %v1328 = vpop.f32.mrf.mxu0
    %v1329 = vadd.f32 0.0, %v1328
    %1330 = vmatmul.bf16.gmra.mxu0 %v1292
    %v1331 = vpop.f32.mrf.mxu0
    %v1332 = vadd.f32 0.0, %v1331
    %v1333 = vpop.f32.mrf.mxu0
    %v1334 = vadd.f32 0.0, %v1333
    %1335 = vmatmul.bf16.gmra.mxu0 %v1295
    %v1336 = vpop.f32.mrf.mxu0
    %v1337 = vadd.f32 0.0, %v1336
    %v1338 = vpop.f32.mrf.mxu0
    %1339 = vdwg.mxu0
    %1353 = vrot.lane.b32.xlu0 %v1307, 96
    %v1354 = vpop.permute.xlu0 %1353
    %1355 = vrot.lane.b32.xlu0 %v1309, 96
    %v1356 = vpop.permute.xlu0 %1355
    %1357 = vrot.lane.b32.xlu0 %v1312, 96
    %v1358 = vpop.permute.xlu0 %1357
    %1359 = vrot.lane.b32.xlu0 %v1314, 96
    %v1360 = vpop.permute.xlu0 %1359
    %1361 = vrot.lane.b32.xlu0 %v1317, 96
    %v1362 = vpop.permute.xlu0 %1361
    %1363 = vrot.lane.b32.xlu0 %v1319, 96
    %v1364 = vpop.permute.xlu0 %1363
    %1365 = vrot.lane.b32.xlu0 %v1322, 96
    %v1366 = vpop.permute.xlu0 %1365
    %1367 = vrot.lane.b32.xlu0 %v1324, 96
    %v1368 = vpop.permute.xlu0 %1367
    %1369 = vrot.lane.b32.xlu0 %v1327, 96
    %v1370 = vpop.permute.xlu0 %1369
    %1371 = vrot.lane.b32.xlu0 %v1329, 96
    %v1372 = vpop.permute.xlu0 %1371
    %1373 = vrot.lane.b32.xlu0 %v1332, 96
    %v1374 = vpop.permute.xlu0 %1373
    %1375 = vrot.lane.b32.xlu0 %v1334, 96
    %v1376 = vpop.permute.xlu0 %1375
    %1377 = vrot.lane.b32.xlu0 %v1337, 96
    %v1378 = vpop.permute.xlu0 %1377
    %vm1392 = vcmask 917248
    %1393 = vst.msk [vmem:[#allocation3] sm:$0xff] %vm1392, %v1354
    %1394 = vst.msk [vmem:[#allocation3 + $0x10] sm:$0xff] %vm1392, %v1356
    %1395 = vst.msk [vmem:[#allocation3 + $0x20] sm:$0xff] %vm1392, %v1358
    %1396 = vst.msk [vmem:[#allocation3 + $0x30] sm:$0xff] %vm1392, %v1360
    %1397 = vst.msk [vmem:[#allocation3 + $0x40] sm:$0xff] %vm1392, %v1362
    %1398 = vst.msk [vmem:[#allocation3 + $0x50] sm:$0xff] %vm1392, %v1364
    %1399 = vst.msk [vmem:[#allocation3 + $0x60] sm:$0xff] %vm1392, %v1366
    %1400 = vst.msk [vmem:[#allocation3 + $0x70] sm:$0xff] %vm1392, %v1368
    %1401 = vst.msk [vmem:[#allocation3 + $0x80] sm:$0xff] %vm1392, %v1370
    %1402 = vst.msk [vmem:[#allocation3 + $0x90] sm:$0xff] %vm1392, %v1372
    %1403 = vst.msk [vmem:[#allocation3 + $0xa0] sm:$0xff] %vm1392, %v1374
    %1404 = vst.msk [vmem:[#allocation3 + $0xb0] sm:$0xff] %vm1392, %v1376
    %vm1405 = vcmask 911104
    %1406 = vst.msk [vmem:[#allocation3 + $0xc0] sm:$0x3] %vm1405, %v1378
    %s1407 = scalar_lea.vmem %s1, 364
    %v1408 = vld [vmem:[%s1407] sm:$0xf]
    %v1409 = vld [vmem:[%s1407 + $0x4] sm:$0xf]
    %v1410 = vld [vmem:[%s1407 + $0x8] sm:$0xf]
    %v1411 = vld [vmem:[%s1407 + $0xc] sm:$0xf]
    %v1412 = vld [vmem:[%s1407 + $0x10] sm:$0xf]
    %v1413 = vld [vmem:[%s1407 + $0x14] sm:$0xf]
    %v1414 = vld [vmem:[%s1407 + $0x18] sm:$0xf]
    %v1415 = vld [vmem:[%s1407 + $0x1c] sm:$0xf]
    %v1416 = vld [vmem:[%s1407 + $0x20] sm:$0xf]
    %v1417 = vld [vmem:[%s1407 + $0x24] sm:$0xf]
    %v1418 = vld [vmem:[%s1407 + $0x28] sm:$0xf]
    %v1419 = vld [vmem:[%s1407 + $0x2c] sm:$0xf]
    %v1420 = vld [vmem:[%s1407 + $0x30] sm:$0x1]
    %v1434 = vunpack.c.l.b16 %v1408
    %v1435 = vunpack.c.l.b16 %v1409
    %v1436 = vunpack.c.l.b16 %v1410
    %v1437 = vunpack.c.l.b16 %v1411
    %v1438 = vunpack.c.l.b16 %v1412
    %v1439 = vunpack.c.l.b16 %v1413
    %v1440 = vunpack.c.l.b16 %v1414
    %v1441 = vunpack.c.l.b16 %v1415
    %v1442 = vunpack.c.l.b16 %v1416
    %v1443 = vunpack.c.l.b16 %v1417
    %v1444 = vunpack.c.l.b16 %v1418
    %v1445 = vunpack.c.l.b16 %v1419
    %v1446 = vunpack.c.l.b16 %v1420
    %v1447 = vpack.c.b16 %v1435, %v1434
    %v1448 = vpack.c.b16 %v1437, %v1436
    %v1449 = vpack.c.b16 %v1439, %v1438
    %v1450 = vpack.c.b16 %v1441, %v1440
    %v1451 = vpack.c.b16 %v1443, %v1442
    %v1452 = vpack.c.b16 %v1445, %v1444
    %v1453 = vpack.c.b16 %v1446, %v1446
    %v1455 = vsel %vm257, %v1447, 0
    %v1458 = vsel %vm257, %v1448, 0
    %v1461 = vsel %vm257, %v1449, 0
    %v1464 = vsel %vm257, %v1450, 0
    %v1467 = vsel %vm257, %v1451, 0
    %v1470 = vsel %vm257, %v1452, 0
    %v1473 = vsel %vm257, %v1453, 0
    %1475 = vmatpush.bf16.msra.mxu0 0
    %1476 = vmatpush.bf16.msra.mxu0 %v281
    %1477 = vmatpush.bf16.msra.mxu0 %v209
    %1478 = vmatpush.bf16.msra.mxu0 %v208
    %1479 = vmatpush.bf16.msra.mxu0 %v207
    %1480 = vmatpush.bf16.msra.mxu0 %v206
    %1481 = vmatpush.bf16.msra.mxu0 %v205
    %1482 = vmatpush.bf16.msra.mxu0 %v204
    %1483 = vmatmul.bf16.gmra.mxu0 %v1455
    %v1484 = vpop.f32.mrf.mxu0
    %v1485 = vadd.f32 0.0, %v1484
    %v1486 = vpop.f32.mrf.mxu0
    %v1487 = vadd.f32 0.0, %v1486
    %1488 = vmatmul.bf16.gmra.mxu0 %v1458
    %v1489 = vpop.f32.mrf.mxu0
    %v1490 = vadd.f32 0.0, %v1489
    %v1491 = vpop.f32.mrf.mxu0
    %v1492 = vadd.f32 0.0, %v1491
    %1493 = vmatmul.bf16.gmra.mxu0 %v1461
    %v1494 = vpop.f32.mrf.mxu0
    %v1495 = vadd.f32 0.0, %v1494
    %v1496 = vpop.f32.mrf.mxu0
    %v1497 = vadd.f32 0.0, %v1496
    %1498 = vmatmul.bf16.gmra.mxu0 %v1464
    %v1499 = vpop.f32.mrf.mxu0
    %v1500 = vadd.f32 0.0, %v1499
    %v1501 = vpop.f32.mrf.mxu0
    %v1502 = vadd.f32 0.0, %v1501
    %1503 = vmatmul.bf16.gmra.mxu0 %v1467
    %v1504 = vpop.f32.mrf.mxu0
    %v1505 = vadd.f32 0.0, %v1504
    %v1506 = vpop.f32.mrf.mxu0
    %v1507 = vadd.f32 0.0, %v1506
    %1508 = vmatmul.bf16.gmra.mxu0 %v1470
    %v1509 = vpop.f32.mrf.mxu0
    %v1510 = vadd.f32 0.0, %v1509
    %v1511 = vpop.f32.mrf.mxu0
    %v1512 = vadd.f32 0.0, %v1511
    %1513 = vmatmul.bf16.gmra.mxu0 %v1473
    %v1514 = vpop.f32.mrf.mxu0
    %v1515 = vadd.f32 0.0, %v1514
    %v1516 = vpop.f32.mrf.mxu0
    %1517 = vdwg.mxu0
    %1531 = vrot.lane.b32.xlu0 %v1485, 112
    %v1532 = vpop.permute.xlu0 %1531
    %1533 = vrot.lane.b32.xlu0 %v1487, 112
    %v1534 = vpop.permute.xlu0 %1533
    %1535 = vrot.lane.b32.xlu0 %v1490, 112
    %v1536 = vpop.permute.xlu0 %1535
    %1537 = vrot.lane.b32.xlu0 %v1492, 112
    %v1538 = vpop.permute.xlu0 %1537
    %1539 = vrot.lane.b32.xlu0 %v1495, 112
    %v1540 = vpop.permute.xlu0 %1539
    %1541 = vrot.lane.b32.xlu0 %v1497, 112
    %v1542 = vpop.permute.xlu0 %1541
    %1543 = vrot.lane.b32.xlu0 %v1500, 112
    %v1544 = vpop.permute.xlu0 %1543
    %1545 = vrot.lane.b32.xlu0 %v1502, 112
    %v1546 = vpop.permute.xlu0 %1545
    %1547 = vrot.lane.b32.xlu0 %v1505, 112
    %v1548 = vpop.permute.xlu0 %1547
    %1549 = vrot.lane.b32.xlu0 %v1507, 112
    %v1550 = vpop.permute.xlu0 %1549
    %1551 = vrot.lane.b32.xlu0 %v1510, 112
    %v1552 = vpop.permute.xlu0 %1551
    %1553 = vrot.lane.b32.xlu0 %v1512, 112
    %v1554 = vpop.permute.xlu0 %1553
    %1555 = vrot.lane.b32.xlu0 %v1515, 112
    %v1556 = vpop.permute.xlu0 %1555
    %vm1570 = vcmask 1048448
    %1571 = vst.msk [vmem:[#allocation3] sm:$0xff] %vm1570, %v1532
    %1572 = vst.msk [vmem:[#allocation3 + $0x10] sm:$0xff] %vm1570, %v1534
    %1573 = vst.msk [vmem:[#allocation3 + $0x20] sm:$0xff] %vm1570, %v1536
    %1574 = vst.msk [vmem:[#allocation3 + $0x30] sm:$0xff] %vm1570, %v1538
    %1575 = vst.msk [vmem:[#allocation3 + $0x40] sm:$0xff] %vm1570, %v1540
    %1576 = vst.msk [vmem:[#allocation3 + $0x50] sm:$0xff] %vm1570, %v1542
    %1577 = vst.msk [vmem:[#allocation3 + $0x60] sm:$0xff] %vm1570, %v1544
    %1578 = vst.msk [vmem:[#allocation3 + $0x70] sm:$0xff] %vm1570, %v1546
    %1579 = vst.msk [vmem:[#allocation3 + $0x80] sm:$0xff] %vm1570, %v1548
    %1580 = vst.msk [vmem:[#allocation3 + $0x90] sm:$0xff] %vm1570, %v1550
    %1581 = vst.msk [vmem:[#allocation3 + $0xa0] sm:$0xff] %vm1570, %v1552
    %1582 = vst.msk [vmem:[#allocation3 + $0xb0] sm:$0xff] %vm1570, %v1554
    %vm1583 = vcmask 1042304
    %1584 = vst.msk [vmem:[#allocation3 + $0xc0] sm:$0x3] %vm1583, %v1556
    %s1585 = scalar_lea.vmem %s1, 416
    %v1586 = vld [vmem:[%s1585] sm:$0xf]
    %v1587 = vld [vmem:[%s1585 + $0x4] sm:$0xf]
    %v1588 = vld [vmem:[%s1585 + $0x8] sm:$0xf]
    %v1589 = vld [vmem:[%s1585 + $0xc] sm:$0xf]
    %v1590 = vld [vmem:[%s1585 + $0x10] sm:$0xf]
    %v1591 = vld [vmem:[%s1585 + $0x14] sm:$0xf]
    %v1592 = vld [vmem:[%s1585 + $0x18] sm:$0xf]
    %v1593 = vld [vmem:[%s1585 + $0x1c] sm:$0xf]
    %v1594 = vld [vmem:[%s1585 + $0x20] sm:$0xf]
    %v1595 = vld [vmem:[%s1585 + $0x24] sm:$0xf]
    %v1596 = vld [vmem:[%s1585 + $0x28] sm:$0xf]
    %v1597 = vld [vmem:[%s1585 + $0x2c] sm:$0xf]
    %v1598 = vld [vmem:[%s1585 + $0x30] sm:$0x1]
    %v1612 = vunpack.c.l.b16 %v1586
    %v1613 = vunpack.c.l.b16 %v1587
    %v1614 = vunpack.c.l.b16 %v1588
    %v1615 = vunpack.c.l.b16 %v1589
    %v1616 = vunpack.c.l.b16 %v1590
    %v1617 = vunpack.c.l.b16 %v1591
    %v1618 = vunpack.c.l.b16 %v1592
    %v1619 = vunpack.c.l.b16 %v1593
    %v1620 = vunpack.c.l.b16 %v1594
    %v1621 = vunpack.c.l.b16 %v1595
    %v1622 = vunpack.c.l.b16 %v1596
    %v1623 = vunpack.c.l.b16 %v1597
    %v1624 = vunpack.c.l.b16 %v1598
    %v1625 = vpack.c.b16 %v1613, %v1612
    %v1626 = vpack.c.b16 %v1615, %v1614
    %v1627 = vpack.c.b16 %v1617, %v1616
    %v1628 = vpack.c.b16 %v1619, %v1618
    %v1629 = vpack.c.b16 %v1621, %v1620
    %v1630 = vpack.c.b16 %v1623, %v1622
    %v1631 = vpack.c.b16 %v1624, %v1624
    %v1633 = vsel %vm257, %v1625, 0
    %v1636 = vsel %vm257, %v1626, 0
    %v1639 = vsel %vm257, %v1627, 0
    %v1642 = vsel %vm257, %v1628, 0
    %v1645 = vsel %vm257, %v1629, 0
    %v1648 = vsel %vm257, %v1630, 0
    %v1651 = vsel %vm257, %v1631, 0
    %1653 = vmatpush.bf16.msra.mxu0 0
    %1654 = vmatpush.bf16.msra.mxu0 %v281
    %1655 = vmatpush.bf16.msra.mxu0 %v209
    %1656 = vmatpush.bf16.msra.mxu0 %v208
    %1657 = vmatpush.bf16.msra.mxu0 %v207
    %1658 = vmatpush.bf16.msra.mxu0 %v206
    %1659 = vmatpush.bf16.msra.mxu0 %v205
    %1660 = vmatpush.bf16.msra.mxu0 %v204
    %1661 = vmatmul.bf16.gmra.mxu0 %v1633
    %v1662 = vpop.f32.mrf.mxu0
    %v1663 = vadd.f32 0.0, %v1662
    %v1664 = vpop.f32.mrf.mxu0
    %v1665 = vadd.f32 0.0, %v1664
    %1666 = vmatmul.bf16.gmra.mxu0 %v1636
    %v1667 = vpop.f32.mrf.mxu0
    %v1668 = vadd.f32 0.0, %v1667
    %v1669 = vpop.f32.mrf.mxu0
    %v1670 = vadd.f32 0.0, %v1669
    %1671 = vmatmul.bf16.gmra.mxu0 %v1639
    %v1672 = vpop.f32.mrf.mxu0
    %v1673 = vadd.f32 0.0, %v1672
    %v1674 = vpop.f32.mrf.mxu0
    %v1675 = vadd.f32 0.0, %v1674
    %1676 = vmatmul.bf16.gmra.mxu0 %v1642
    %v1677 = vpop.f32.mrf.mxu0
    %v1678 = vadd.f32 0.0, %v1677
    %v1679 = vpop.f32.mrf.mxu0
    %v1680 = vadd.f32 0.0, %v1679
    %1681 = vmatmul.bf16.gmra.mxu0 %v1645
    %v1682 = vpop.f32.mrf.mxu0
    %v1683 = vadd.f32 0.0, %v1682
    %v1684 = vpop.f32.mrf.mxu0
    %v1685 = vadd.f32 0.0, %v1684
    %1686 = vmatmul.bf16.gmra.mxu0 %v1648
    %v1687 = vpop.f32.mrf.mxu0
    %v1688 = vadd.f32 0.0, %v1687
    %v1689 = vpop.f32.mrf.mxu0
    %v1690 = vadd.f32 0.0, %v1689
    %1691 = vmatmul.bf16.gmra.mxu0 %v1651
    %v1692 = vpop.f32.mrf.mxu0
    %v1693 = vadd.f32 0.0, %v1692
    %v1694 = vpop.f32.mrf.mxu0
    %1695 = vdwg.mxu0
    %1696 = vst.msk [vmem:[#allocation3 + $0x8] sm:$0xff] %vm189, %v1663
    %1697 = vst.msk [vmem:[#allocation3 + $0x18] sm:$0xff] %vm189, %v1665
    %1698 = vst.msk [vmem:[#allocation3 + $0x28] sm:$0xff] %vm189, %v1668
    %1699 = vst.msk [vmem:[#allocation3 + $0x38] sm:$0xff] %vm189, %v1670
    %1700 = vst.msk [vmem:[#allocation3 + $0x48] sm:$0xff] %vm189, %v1673
    %1701 = vst.msk [vmem:[#allocation3 + $0x58] sm:$0xff] %vm189, %v1675
    %1702 = vst.msk [vmem:[#allocation3 + $0x68] sm:$0xff] %vm189, %v1678
    %1703 = vst.msk [vmem:[#allocation3 + $0x78] sm:$0xff] %vm189, %v1680
    %1704 = vst.msk [vmem:[#allocation3 + $0x88] sm:$0xff] %vm189, %v1683
    %1705 = vst.msk [vmem:[#allocation3 + $0x98] sm:$0xff] %vm189, %v1685
    %1706 = vst.msk [vmem:[#allocation3 + $0xa8] sm:$0xff] %vm189, %v1688
    %1707 = vst.msk [vmem:[#allocation3 + $0xb8] sm:$0xff] %vm189, %v1690
    %1708 = vst.msk [vmem:[#allocation3 + $0xc8] sm:$0x3] %vm202, %v1693
    %v1709 = vld [vmem:[#allocation3] sm:$0xff]
    %v1710 = vld [vmem:[#allocation3 + $0x8] sm:$0xff]
    %v1711 = vld [vmem:[#allocation3 + $0x10] sm:$0xff]
    %v1712 = vld [vmem:[#allocation3 + $0x18] sm:$0xff]
    %v1713 = vld [vmem:[#allocation3 + $0x20] sm:$0xff]
    %v1714 = vld [vmem:[#allocation3 + $0x28] sm:$0xff]
    %v1715 = vld [vmem:[#allocation3 + $0x30] sm:$0xff]
    %v1716 = vld [vmem:[#allocation3 + $0x38] sm:$0xff]
    %v1717 = vld [vmem:[#allocation3 + $0x40] sm:$0xff]
    %v1718 = vld [vmem:[#allocation3 + $0x48] sm:$0xff]
    %v1719 = vld [vmem:[#allocation3 + $0x50] sm:$0xff]
    %v1720 = vld [vmem:[#allocation3 + $0x58] sm:$0xff]
    %v1721 = vld [vmem:[#allocation3 + $0x60] sm:$0xff]
    %v1722 = vld [vmem:[#allocation3 + $0x68] sm:$0xff]
    %v1723 = vld [vmem:[#allocation3 + $0x70] sm:$0xff]
    %v1724 = vld [vmem:[#allocation3 + $0x78] sm:$0xff]
    %v1725 = vld [vmem:[#allocation3 + $0x80] sm:$0xff]
    %v1726 = vld [vmem:[#allocation3 + $0x88] sm:$0xff]
    %v1727 = vld [vmem:[#allocation3 + $0x90] sm:$0xff]
    %v1728 = vld [vmem:[#allocation3 + $0x98] sm:$0xff]
    %v1729 = vld [vmem:[#allocation3 + $0xa0] sm:$0xff]
    %v1730 = vld [vmem:[#allocation3 + $0xa8] sm:$0xff]
    %v1731 = vld [vmem:[#allocation3 + $0xb0] sm:$0xff]
    %v1732 = vld [vmem:[#allocation3 + $0xb8] sm:$0xff]
    %v1733 = vld [vmem:[#allocation3 + $0xc0] sm:$0x3]
    %v1734 = vld [vmem:[#allocation3 + $0xc8] sm:$0x3]
    %v1735 = vld [vmem:[%s5] sm:$0xff]
    %v1736 = vld [vmem:[%s5 + $0x8] sm:$0xff]
    %v1737 = vld [vmem:[%s5 + $0x10] sm:$0xff]
    %v1738 = vld [vmem:[%s5 + $0x18] sm:$0xff]
    %v1739 = vld [vmem:[%s5 + $0x20] sm:$0xff]
    %v1740 = vld [vmem:[%s5 + $0x28] sm:$0xff]
    %v1741 = vld [vmem:[%s5 + $0x30] sm:$0xff]
    %v1742 = vld [vmem:[%s5 + $0x38] sm:$0xff]
    %v1743 = vld [vmem:[%s5 + $0x40] sm:$0xff]
    %v1744 = vld [vmem:[%s5 + $0x48] sm:$0xff]
    %v1745 = vld [vmem:[%s5 + $0x50] sm:$0xff]
    %v1746 = vld [vmem:[%s5 + $0x58] sm:$0xff]
    %v1747 = vld [vmem:[%s5 + $0x60] sm:$0xff]
    %v1748 = vld [vmem:[%s5 + $0x68] sm:$0xff]
    %v1749 = vld [vmem:[%s5 + $0x70] sm:$0xff]
    %v1750 = vld [vmem:[%s5 + $0x78] sm:$0xff]
    %v1751 = vld [vmem:[%s5 + $0x80] sm:$0xff]
    %v1752 = vld [vmem:[%s5 + $0x88] sm:$0xff]
    %v1753 = vld [vmem:[%s6] sm:$0x1]
    %v1755 = vperm.slane %v1753, 0
    %v1758 = vsel %vm189, %v1710, 0
    %v1761 = vsel %vm189, %v1712, 0
    %v1764 = vsel %vm189, %v1714, 0
    %v1767 = vsel %vm189, %v1716, 0
    %v1770 = vsel %vm189, %v1718, 0
    %v1773 = vsel %vm189, %v1720, 0
    %v1776 = vsel %vm189, %v1722, 0
    %v1779 = vsel %vm189, %v1724, 0
    %v1782 = vsel %vm189, %v1726, 0
    %v1785 = vsel %vm189, %v1728, 0
    %v1788 = vsel %vm189, %v1730, 0
    %v1791 = vsel %vm189, %v1732, 0
    %v1794 = vsel %vm189, %v1734, 0
    %1796 = vmatpush.msra.mxu0 %v1750
    %1797 = vmatpush.msra.mxu0 %v1749
    %1798 = vmatpush.msra.mxu0 %v1748
    %1799 = vmatpush.msra.mxu0 %v1747
    %1800 = vmatpush.msra.mxu0 %v1746
    %1801 = vmatpush.msra.mxu0 %v1745
    %1802 = vmatpush.msra.mxu0 %v1744
    %1803 = vmatpush.msra.mxu0 %v1743
    %1804 = vmatpush.msra.mxu0 %v1742
    %1805 = vmatpush.msra.mxu0 %v1741
    %1806 = vmatpush.msra.mxu0 %v1740
    %1807 = vmatpush.msra.mxu0 %v1739
    %1808 = vmatpush.msra.mxu0 %v1738
    %1809 = vmatpush.msra.mxu0 %v1737
    %1810 = vmatpush.msra.mxu0 %v1736
    %1811 = vmatpush.msra.mxu0 %v1735
    %1812 = vmatmul.f32.gmra.mxu0 %v1709
    %v1813 = vpop.f32.mrf.mxu0
    %v1814 = vadd.f32 %v1755, %v1813
    %1815 = vmatmul.f32.gmra.mxu0 %v1711
    %v1816 = vpop.f32.mrf.mxu0
    %v1817 = vadd.f32 %v1755, %v1816
    %1818 = vmatmul.f32.gmra.mxu0 %v1713
    %v1819 = vpop.f32.mrf.mxu0
    %v1820 = vadd.f32 %v1755, %v1819
    %1821 = vmatmul.f32.gmra.mxu0 %v1715
    %v1822 = vpop.f32.mrf.mxu0
    %v1823 = vadd.f32 %v1755, %v1822
    %1824 = vmatmul.f32.gmra.mxu0 %v1717
    %v1825 = vpop.f32.mrf.mxu0
    %v1826 = vadd.f32 %v1755, %v1825
    %1827 = vmatmul.f32.gmra.mxu0 %v1719
    %v1828 = vpop.f32.mrf.mxu0
    %v1829 = vadd.f32 %v1755, %v1828
    %1830 = vmatmul.f32.gmra.mxu0 %v1721
    %v1831 = vpop.f32.mrf.mxu0
    %v1832 = vadd.f32 %v1755, %v1831
    %1833 = vmatmul.f32.gmra.mxu0 %v1723
    %v1834 = vpop.f32.mrf.mxu0
    %v1835 = vadd.f32 %v1755, %v1834
    %1836 = vmatmul.f32.gmra.mxu0 %v1725
    %v1837 = vpop.f32.mrf.mxu0
    %v1838 = vadd.f32 %v1755, %v1837
    %1839 = vmatmul.f32.gmra.mxu0 %v1727
    %v1840 = vpop.f32.mrf.mxu0
    %v1841 = vadd.f32 %v1755, %v1840
    %1842 = vmatmul.f32.gmra.mxu0 %v1729
    %v1843 = vpop.f32.mrf.mxu0
    %v1844 = vadd.f32 %v1755, %v1843
    %1845 = vmatmul.f32.gmra.mxu0 %v1731
    %v1846 = vpop.f32.mrf.mxu0
    %v1847 = vadd.f32 %v1755, %v1846
    %1848 = vmatmul.f32.gmra.mxu0 %v1733
    %v1849 = vpop.f32.mrf.mxu0
    %v1850 = vadd.f32 %v1755, %v1849
    %1851 = vdwg.mxu0
    %1852 = vmatpush.msra.mxu0 0.0
    %1853 = vmatpush.msra.mxu0 0.0
    %1854 = vmatpush.msra.mxu0 0.0
    %1855 = vmatpush.msra.mxu0 0.0
    %1856 = vmatpush.msra.mxu0 0.0
    %1857 = vmatpush.msra.mxu0 0.0
    %1858 = vmatpush.msra.mxu0 0.0
    %1859 = vmatpush.msra.mxu0 0.0
    %1860 = vmatpush.msra.mxu0 0.0
    %1861 = vmatpush.msra.mxu0 0.0
    %1862 = vmatpush.msra.mxu0 0.0
    %1863 = vmatpush.msra.mxu0 0.0
    %1864 = vmatpush.msra.mxu0 0.0
    %1865 = vmatpush.msra.mxu0 0.0
    %1866 = vmatpush.msra.mxu0 %v1752
    %1867 = vmatpush.msra.mxu0 %v1751
    %1868 = vmatmul.f32.gmra.mxu0 %v1758
    %v1869 = vpop.f32.mrf.mxu0
    %v1870 = vadd.f32 %v1814, %v1869
    %1871 = vmatmul.f32.gmra.mxu0 %v1761
    %v1872 = vpop.f32.mrf.mxu0
    %v1873 = vadd.f32 %v1817, %v1872
    %1874 = vmatmul.f32.gmra.mxu0 %v1764
    %v1875 = vpop.f32.mrf.mxu0
    %v1876 = vadd.f32 %v1820, %v1875
    %1877 = vmatmul.f32.gmra.mxu0 %v1767
    %v1878 = vpop.f32.mrf.mxu0
    %v1879 = vadd.f32 %v1823, %v1878
    %1880 = vmatmul.f32.gmra.mxu0 %v1770
    %v1881 = vpop.f32.mrf.mxu0
    %v1882 = vadd.f32 %v1826, %v1881
    %1883 = vmatmul.f32.gmra.mxu0 %v1773
    %v1884 = vpop.f32.mrf.mxu0
    %v1885 = vadd.f32 %v1829, %v1884
    %1886 = vmatmul.f32.gmra.mxu0 %v1776
    %v1887 = vpop.f32.mrf.mxu0
    %v1888 = vadd.f32 %v1832, %v1887
    %1889 = vmatmul.f32.gmra.mxu0 %v1779
    %v1890 = vpop.f32.mrf.mxu0
    %v1891 = vadd.f32 %v1835, %v1890
    %1892 = vmatmul.f32.gmra.mxu0 %v1782
    %v1893 = vpop.f32.mrf.mxu0
    %v1894 = vadd.f32 %v1838, %v1893
    %1895 = vmatmul.f32.gmra.mxu0 %v1785
    %v1896 = vpop.f32.mrf.mxu0
    %v1897 = vadd.f32 %v1841, %v1896
    %1898 = vmatmul.f32.gmra.mxu0 %v1788
    %v1899 = vpop.f32.mrf.mxu0
    %v1900 = vadd.f32 %v1844, %v1899
    %1901 = vmatmul.f32.gmra.mxu0 %v1791
    %v1902 = vpop.f32.mrf.mxu0
    %v1903 = vadd.f32 %v1847, %v1902
    %1904 = vmatmul.f32.gmra.mxu0 %v1794
    %v1905 = vpop.f32.mrf.mxu0
    %v1906 = vadd.f32 %v1850, %v1905
    %1907 = vdwg.mxu0
    %v1908 = vmax.f32 %v1870, 0.0
    %v1909 = vmax.f32 %v1873, 0.0
    %v1910 = vmax.f32 %v1876, 0.0
    %v1911 = vmax.f32 %v1879, 0.0
    %v1912 = vmax.f32 %v1882, 0.0
    %v1913 = vmax.f32 %v1885, 0.0
    %v1914 = vmax.f32 %v1888, 0.0
    %v1915 = vmax.f32 %v1891, 0.0
    %v1916 = vmax.f32 %v1894, 0.0
    %v1917 = vmax.f32 %v1897, 0.0
    %v1918 = vmax.f32 %v1900, 0.0
    %v1919 = vmax.f32 %v1903, 0.0
    %v1920 = vmax.f32 %v1906, 0.0
    %1934 = vrot.lane.b32.xlu0 %v1908, 16
    %v1935 = vpop.permute.xlu0 %1934
    %1936 = vrot.lane.b32.xlu0 %v1909, 16
    %v1937 = vpop.permute.xlu0 %1936
    %1938 = vrot.lane.b32.xlu0 %v1910, 16
    %v1939 = vpop.permute.xlu0 %1938
    %1940 = vrot.lane.b32.xlu0 %v1911, 16
    %v1941 = vpop.permute.xlu0 %1940
    %1942 = vrot.lane.b32.xlu0 %v1912, 16
    %v1943 = vpop.permute.xlu0 %1942
    %1944 = vrot.lane.b32.xlu0 %v1913, 16
    %v1945 = vpop.permute.xlu0 %1944
    %1946 = vrot.lane.b32.xlu0 %v1914, 16
    %v1947 = vpop.permute.xlu0 %1946
    %1948 = vrot.lane.b32.xlu0 %v1915, 16
    %v1949 = vpop.permute.xlu0 %1948
    %1950 = vrot.lane.b32.xlu0 %v1916, 16
    %v1951 = vpop.permute.xlu0 %1950
    %1952 = vrot.lane.b32.xlu0 %v1917, 16
    %v1953 = vpop.permute.xlu0 %1952
    %1954 = vrot.lane.b32.xlu0 %v1918, 16
    %v1955 = vpop.permute.xlu0 %1954
    %1956 = vrot.lane.b32.xlu0 %v1919, 16
    %v1957 = vpop.permute.xlu0 %1956
    %1958 = vrot.lane.b32.xlu0 %v1920, 16
    %v1959 = vpop.permute.xlu0 %1958
    %vm1973 = vcmask 195712
    %1974 = vst.msk [vmem:[#allocation2] sm:$0xff] %vm1973, %v1935
    %1975 = vst.msk [vmem:[#allocation2 + $0x8] sm:$0xff] %vm1973, %v1937
    %1976 = vst.msk [vmem:[#allocation2 + $0x10] sm:$0xff] %vm1973, %v1939
    %1977 = vst.msk [vmem:[#allocation2 + $0x18] sm:$0xff] %vm1973, %v1941
    %1978 = vst.msk [vmem:[#allocation2 + $0x20] sm:$0xff] %vm1973, %v1943
    %1979 = vst.msk [vmem:[#allocation2 + $0x28] sm:$0xff] %vm1973, %v1945
    %1980 = vst.msk [vmem:[#allocation2 + $0x30] sm:$0xff] %vm1973, %v1947
    %1981 = vst.msk [vmem:[#allocation2 + $0x38] sm:$0xff] %vm1973, %v1949
    %1982 = vst.msk [vmem:[#allocation2 + $0x40] sm:$0xff] %vm1973, %v1951
    %1983 = vst.msk [vmem:[#allocation2 + $0x48] sm:$0xff] %vm1973, %v1953
    %1984 = vst.msk [vmem:[#allocation2 + $0x50] sm:$0xff] %vm1973, %v1955
    %1985 = vst.msk [vmem:[#allocation2 + $0x58] sm:$0xff] %vm1973, %v1957
    %vm1986 = vcmask 189568
    %1987 = vst.msk [vmem:[#allocation2 + $0x60] sm:$0x3] %vm1986, %v1959
    %v1988 = vld [vmem:[#allocation2] sm:$0xff]
    %v1989 = vld [vmem:[#allocation2 + $0x8] sm:$0xff]
    %v1990 = vld [vmem:[#allocation2 + $0x10] sm:$0xff]
    %v1991 = vld [vmem:[#allocation2 + $0x18] sm:$0xff]
    %v1992 = vld [vmem:[#allocation2 + $0x20] sm:$0xff]
    %v1993 = vld [vmem:[#allocation2 + $0x28] sm:$0xff]
    %v1994 = vld [vmem:[#allocation2 + $0x30] sm:$0xff]
    %v1995 = vld [vmem:[#allocation2 + $0x38] sm:$0xff]
    %v1996 = vld [vmem:[#allocation2 + $0x40] sm:$0xff]
    %v1997 = vld [vmem:[#allocation2 + $0x48] sm:$0xff]
    %v1998 = vld [vmem:[#allocation2 + $0x50] sm:$0xff]
    %v1999 = vld [vmem:[#allocation2 + $0x58] sm:$0xff]
    %v2000 = vld [vmem:[#allocation2 + $0x60] sm:$0x3]
    %v2001 = vpack.c.bf16 %v1989, %v1988
    %v2002 = vpack.c.bf16 %v1991, %v1990
    %v2003 = vpack.c.bf16 %v1993, %v1992
    %v2004 = vpack.c.bf16 %v1995, %v1994
    %v2005 = vpack.c.bf16 %v1997, %v1996
    %v2006 = vpack.c.bf16 %v1999, %v1998
    %v2007 = vpack.c.bf16 %v2000, %v2000
    %v2008 = vld [vmem:[%s1] sm:$0xf]
    %v2009 = vld [vmem:[%s1 + $0x4] sm:$0xf]
    %v2010 = vld [vmem:[%s1 + $0x8] sm:$0xf]
    %v2011 = vld [vmem:[%s1 + $0xc] sm:$0xf]
    %v2012 = vld [vmem:[%s1 + $0x10] sm:$0xf]
    %v2013 = vld [vmem:[%s1 + $0x14] sm:$0xf]
    %v2014 = vld [vmem:[%s1 + $0x18] sm:$0xf]
    %v2015 = vld [vmem:[%s1 + $0x1c] sm:$0xf]
    %v2016 = vld [vmem:[%s1 + $0x20] sm:$0xf]
    %v2017 = vld [vmem:[%s1 + $0x24] sm:$0xf]
    %v2018 = vld [vmem:[%s1 + $0x28] sm:$0xf]
    %v2019 = vld [vmem:[%s1 + $0x2c] sm:$0xf]
    %v2020 = vld [vmem:[%s1 + $0x30] sm:$0x1]
    %v2034 = vunpack.c.l.b16 %v2008
    %v2035 = vunpack.c.l.b16 %v2009
    %v2036 = vunpack.c.l.b16 %v2010
    %v2037 = vunpack.c.l.b16 %v2011
    %v2038 = vunpack.c.l.b16 %v2012
    %v2039 = vunpack.c.l.b16 %v2013
    %v2040 = vunpack.c.l.b16 %v2014
    %v2041 = vunpack.c.l.b16 %v2015
    %v2042 = vunpack.c.l.b16 %v2016
    %v2043 = vunpack.c.l.b16 %v2017
    %v2044 = vunpack.c.l.b16 %v2018
    %v2045 = vunpack.c.l.b16 %v2019
    %v2046 = vunpack.c.l.b16 %v2020
    %v2047 = vpack.c.b16 %v2035, %v2034
    %v2048 = vpack.c.b16 %v2037, %v2036
    %v2049 = vpack.c.b16 %v2039, %v2038
    %v2050 = vpack.c.b16 %v2041, %v2040
    %v2051 = vpack.c.b16 %v2043, %v2042
    %v2052 = vpack.c.b16 %v2045, %v2044
    %v2053 = vpack.c.b16 %v2046, %v2046
    %v2055 = vsel %vm257, %v2047, 0
    %v2058 = vsel %vm257, %v2048, 0
    %v2061 = vsel %vm257, %v2049, 0
    %v2064 = vsel %vm257, %v2050, 0
    %v2067 = vsel %vm257, %v2051, 0
    %v2070 = vsel %vm257, %v2052, 0
    %v2073 = vsel %vm257, %v2053, 0
    %v2076 = vsel %vm279, %v2007, 0
    %2078 = vmatpush.bf16.msra.mxu0 0
    %2079 = vmatpush.bf16.msra.mxu0 %v2076
    %2080 = vmatpush.bf16.msra.mxu0 %v2006
    %2081 = vmatpush.bf16.msra.mxu0 %v2005
    %2082 = vmatpush.bf16.msra.mxu0 %v2004
    %2083 = vmatpush.bf16.msra.mxu0 %v2003
    %2084 = vmatpush.bf16.msra.mxu0 %v2002
    %2085 = vmatpush.bf16.msra.mxu0 %v2001
    %2086 = vmatmul.bf16.gmra.mxu0 %v2055
    %v2087 = vpop.f32.mrf.mxu0
    %v2088 = vadd.f32 0.0, %v2087
    %v2089 = vpop.f32.mrf.mxu0
    %v2090 = vadd.f32 0.0, %v2089
    %2091 = vmatmul.bf16.gmra.mxu0 %v2058
    %v2092 = vpop.f32.mrf.mxu0
    %v2093 = vadd.f32 0.0, %v2092
    %v2094 = vpop.f32.mrf.mxu0
    %v2095 = vadd.f32 0.0, %v2094
    %2096 = vmatmul.bf16.gmra.mxu0 %v2061
    %v2097 = vpop.f32.mrf.mxu0
    %v2098 = vadd.f32 0.0, %v2097
    %v2099 = vpop.f32.mrf.mxu0
    %v2100 = vadd.f32 0.0, %v2099
    %2101 = vmatmul.bf16.gmra.mxu0 %v2064
    %v2102 = vpop.f32.mrf.mxu0
    %v2103 = vadd.f32 0.0, %v2102
    %v2104 = vpop.f32.mrf.mxu0
    %v2105 = vadd.f32 0.0, %v2104
    %2106 = vmatmul.bf16.gmra.mxu0 %v2067
    %v2107 = vpop.f32.mrf.mxu0
    %v2108 = vadd.f32 0.0, %v2107
    %v2109 = vpop.f32.mrf.mxu0
    %v2110 = vadd.f32 0.0, %v2109
    %2111 = vmatmul.bf16.gmra.mxu0 %v2070
    %v2112 = vpop.f32.mrf.mxu0
    %v2113 = vadd.f32 0.0, %v2112
    %v2114 = vpop.f32.mrf.mxu0
    %v2115 = vadd.f32 0.0, %v2114
    %2116 = vmatmul.bf16.gmra.mxu0 %v2073
    %v2117 = vpop.f32.mrf.mxu0
    %v2118 = vadd.f32 0.0, %v2117
    %v2119 = vpop.f32.mrf.mxu0
    %2120 = vdwg.mxu0
    %2121 = vst.msk [vmem:[#allocation4] sm:$0xff] %vm174, %v2088
    %2122 = vst.msk [vmem:[#allocation4 + $0x18] sm:$0xff] %vm174, %v2090
    %2123 = vst.msk [vmem:[#allocation4 + $0x30] sm:$0xff] %vm174, %v2093
    %2124 = vst.msk [vmem:[#allocation4 + $0x48] sm:$0xff] %vm174, %v2095
    %2125 = vst.msk [vmem:[#allocation4 + $0x60] sm:$0xff] %vm174, %v2098
    %2126 = vst.msk [vmem:[#allocation4 + $0x78] sm:$0xff] %vm174, %v2100
    %2127 = vst.msk [vmem:[#allocation4 + $0x90] sm:$0xff] %vm174, %v2103
    %2128 = vst.msk [vmem:[#allocation4 + $0xa8] sm:$0xff] %vm174, %v2105
    %2129 = vst.msk [vmem:[#allocation4 + $0xc0] sm:$0xff] %vm174, %v2108
    %2130 = vst.msk [vmem:[#allocation4 + $0xd8] sm:$0xff] %vm174, %v2110
    %2131 = vst.msk [vmem:[#allocation4 + $0xf0] sm:$0xff] %vm174, %v2113
    %2132 = vst.msk [vmem:[#allocation4 + $0x108] sm:$0xff] %vm174, %v2115
    %2133 = vst.msk [vmem:[#allocation4 + $0x120] sm:$0x3] %vm187, %v2118
    %v2134 = vld [vmem:[%s339] sm:$0xf]
    %v2135 = vld [vmem:[%s339 + $0x4] sm:$0xf]
    %v2136 = vld [vmem:[%s339 + $0x8] sm:$0xf]
    %v2137 = vld [vmem:[%s339 + $0xc] sm:$0xf]
    %v2138 = vld [vmem:[%s339 + $0x10] sm:$0xf]
    %v2139 = vld [vmem:[%s339 + $0x14] sm:$0xf]
    %v2140 = vld [vmem:[%s339 + $0x18] sm:$0xf]
    %v2141 = vld [vmem:[%s339 + $0x1c] sm:$0xf]
    %v2142 = vld [vmem:[%s339 + $0x20] sm:$0xf]
    %v2143 = vld [vmem:[%s339 + $0x24] sm:$0xf]
    %v2144 = vld [vmem:[%s339 + $0x28] sm:$0xf]
    %v2145 = vld [vmem:[%s339 + $0x2c] sm:$0xf]
    %v2146 = vld [vmem:[%s339 + $0x30] sm:$0x1]
    %v2160 = vunpack.c.l.b16 %v2134
    %v2161 = vunpack.c.l.b16 %v2135
    %v2162 = vunpack.c.l.b16 %v2136
    %v2163 = vunpack.c.l.b16 %v2137
    %v2164 = vunpack.c.l.b16 %v2138
    %v2165 = vunpack.c.l.b16 %v2139
    %v2166 = vunpack.c.l.b16 %v2140
    %v2167 = vunpack.c.l.b16 %v2141
    %v2168 = vunpack.c.l.b16 %v2142
    %v2169 = vunpack.c.l.b16 %v2143
    %v2170 = vunpack.c.l.b16 %v2144
    %v2171 = vunpack.c.l.b16 %v2145
    %v2172 = vunpack.c.l.b16 %v2146
    %v2173 = vpack.c.b16 %v2161, %v2160
    %v2174 = vpack.c.b16 %v2163, %v2162
    %v2175 = vpack.c.b16 %v2165, %v2164
    %v2176 = vpack.c.b16 %v2167, %v2166
    %v2177 = vpack.c.b16 %v2169, %v2168
    %v2178 = vpack.c.b16 %v2171, %v2170
    %v2179 = vpack.c.b16 %v2172, %v2172
    %v2181 = vsel %vm257, %v2173, 0
    %v2184 = vsel %vm257, %v2174, 0
    %v2187 = vsel %vm257, %v2175, 0
    %v2190 = vsel %vm257, %v2176, 0
    %v2193 = vsel %vm257, %v2177, 0
    %v2196 = vsel %vm257, %v2178, 0
    %v2199 = vsel %vm257, %v2179, 0
    %2201 = vmatpush.bf16.msra.mxu0 0
    %2202 = vmatpush.bf16.msra.mxu0 %v2076
    %2203 = vmatpush.bf16.msra.mxu0 %v2006
    %2204 = vmatpush.bf16.msra.mxu0 %v2005
    %2205 = vmatpush.bf16.msra.mxu0 %v2004
    %2206 = vmatpush.bf16.msra.mxu0 %v2003
    %2207 = vmatpush.bf16.msra.mxu0 %v2002
    %2208 = vmatpush.bf16.msra.mxu0 %v2001
    %2209 = vmatmul.bf16.gmra.mxu0 %v2181
    %v2210 = vpop.f32.mrf.mxu0
    %v2211 = vadd.f32 0.0, %v2210
    %v2212 = vpop.f32.mrf.mxu0
    %v2213 = vadd.f32 0.0, %v2212
    %2214 = vmatmul.bf16.gmra.mxu0 %v2184
    %v2215 = vpop.f32.mrf.mxu0
    %v2216 = vadd.f32 0.0, %v2215
    %v2217 = vpop.f32.mrf.mxu0
    %v2218 = vadd.f32 0.0, %v2217
    %2219 = vmatmul.bf16.gmra.mxu0 %v2187
    %v2220 = vpop.f32.mrf.mxu0
    %v2221 = vadd.f32 0.0, %v2220
    %v2222 = vpop.f32.mrf.mxu0
    %v2223 = vadd.f32 0.0, %v2222
    %2224 = vmatmul.bf16.gmra.mxu0 %v2190
    %v2225 = vpop.f32.mrf.mxu0
    %v2226 = vadd.f32 0.0, %v2225
    %v2227 = vpop.f32.mrf.mxu0
    %v2228 = vadd.f32 0.0, %v2227
    %2229 = vmatmul.bf16.gmra.mxu0 %v2193
    %v2230 = vpop.f32.mrf.mxu0
    %v2231 = vadd.f32 0.0, %v2230
    %v2232 = vpop.f32.mrf.mxu0
    %v2233 = vadd.f32 0.0, %v2232
    %2234 = vmatmul.bf16.gmra.mxu0 %v2196
    %v2235 = vpop.f32.mrf.mxu0
    %v2236 = vadd.f32 0.0, %v2235
    %v2237 = vpop.f32.mrf.mxu0
    %v2238 = vadd.f32 0.0, %v2237
    %2239 = vmatmul.bf16.gmra.mxu0 %v2199
    %v2240 = vpop.f32.mrf.mxu0
    %v2241 = vadd.f32 0.0, %v2240
    %v2242 = vpop.f32.mrf.mxu0
    %2243 = vdwg.mxu0
    %2257 = vrot.lane.b32.xlu0 %v2211, 32
    %v2258 = vpop.permute.xlu0 %2257
    %2259 = vrot.lane.b32.xlu0 %v2213, 32
    %v2260 = vpop.permute.xlu0 %2259
    %2261 = vrot.lane.b32.xlu0 %v2216, 32
    %v2262 = vpop.permute.xlu0 %2261
    %2263 = vrot.lane.b32.xlu0 %v2218, 32
    %v2264 = vpop.permute.xlu0 %2263
    %2265 = vrot.lane.b32.xlu0 %v2221, 32
    %v2266 = vpop.permute.xlu0 %2265
    %2267 = vrot.lane.b32.xlu0 %v2223, 32
    %v2268 = vpop.permute.xlu0 %2267
    %2269 = vrot.lane.b32.xlu0 %v2226, 32
    %v2270 = vpop.permute.xlu0 %2269
    %2271 = vrot.lane.b32.xlu0 %v2228, 32
    %v2272 = vpop.permute.xlu0 %2271
    %2273 = vrot.lane.b32.xlu0 %v2231, 32
    %v2274 = vpop.permute.xlu0 %2273
    %2275 = vrot.lane.b32.xlu0 %v2233, 32
    %v2276 = vpop.permute.xlu0 %2275
    %2277 = vrot.lane.b32.xlu0 %v2236, 32
    %v2278 = vpop.permute.xlu0 %2277
    %2279 = vrot.lane.b32.xlu0 %v2238, 32
    %v2280 = vpop.permute.xlu0 %2279
    %2281 = vrot.lane.b32.xlu0 %v2241, 32
    %v2282 = vpop.permute.xlu0 %2281
    %vm2296 = vcmask 523520
    %2297 = vst.msk [vmem:[#allocation4] sm:$0xff] %vm2296, %v2258
    %2298 = vst.msk [vmem:[#allocation4 + $0x18] sm:$0xff] %vm2296, %v2260
    %2299 = vst.msk [vmem:[#allocation4 + $0x30] sm:$0xff] %vm2296, %v2262
    %2300 = vst.msk [vmem:[#allocation4 + $0x48] sm:$0xff] %vm2296, %v2264
    %2301 = vst.msk [vmem:[#allocation4 + $0x60] sm:$0xff] %vm2296, %v2266
    %2302 = vst.msk [vmem:[#allocation4 + $0x78] sm:$0xff] %vm2296, %v2268
    %2303 = vst.msk [vmem:[#allocation4 + $0x90] sm:$0xff] %vm2296, %v2270
    %2304 = vst.msk [vmem:[#allocation4 + $0xa8] sm:$0xff] %vm2296, %v2272
    %2305 = vst.msk [vmem:[#allocation4 + $0xc0] sm:$0xff] %vm2296, %v2274
    %2306 = vst.msk [vmem:[#allocation4 + $0xd8] sm:$0xff] %vm2296, %v2276
    %2307 = vst.msk [vmem:[#allocation4 + $0xf0] sm:$0xff] %vm2296, %v2278
    %2308 = vst.msk [vmem:[#allocation4 + $0x108] sm:$0xff] %vm2296, %v2280
    %vm2309 = vcmask 517376
    %2310 = vst.msk [vmem:[#allocation4 + $0x120] sm:$0x3] %vm2309, %v2282
    %v2311 = vld [vmem:[%s517] sm:$0xf]
    %v2312 = vld [vmem:[%s517 + $0x4] sm:$0xf]
    %v2313 = vld [vmem:[%s517 + $0x8] sm:$0xf]
    %v2314 = vld [vmem:[%s517 + $0xc] sm:$0xf]
    %v2315 = vld [vmem:[%s517 + $0x10] sm:$0xf]
    %v2316 = vld [vmem:[%s517 + $0x14] sm:$0xf]
    %v2317 = vld [vmem:[%s517 + $0x18] sm:$0xf]
    %v2318 = vld [vmem:[%s517 + $0x1c] sm:$0xf]
    %v2319 = vld [vmem:[%s517 + $0x20] sm:$0xf]
    %v2320 = vld [vmem:[%s517 + $0x24] sm:$0xf]
    %v2321 = vld [vmem:[%s517 + $0x28] sm:$0xf]
    %v2322 = vld [vmem:[%s517 + $0x2c] sm:$0xf]
    %v2323 = vld [vmem:[%s517 + $0x30] sm:$0x1]
    %v2337 = vunpack.c.l.b16 %v2311
    %v2338 = vunpack.c.l.b16 %v2312
    %v2339 = vunpack.c.l.b16 %v2313
    %v2340 = vunpack.c.l.b16 %v2314
    %v2341 = vunpack.c.l.b16 %v2315
    %v2342 = vunpack.c.l.b16 %v2316
    %v2343 = vunpack.c.l.b16 %v2317
    %v2344 = vunpack.c.l.b16 %v2318
    %v2345 = vunpack.c.l.b16 %v2319
    %v2346 = vunpack.c.l.b16 %v2320
    %v2347 = vunpack.c.l.b16 %v2321
    %v2348 = vunpack.c.l.b16 %v2322
    %v2349 = vunpack.c.l.b16 %v2323
    %v2350 = vpack.c.b16 %v2338, %v2337
    %v2351 = vpack.c.b16 %v2340, %v2339
    %v2352 = vpack.c.b16 %v2342, %v2341
    %v2353 = vpack.c.b16 %v2344, %v2343
    %v2354 = vpack.c.b16 %v2346, %v2345
    %v2355 = vpack.c.b16 %v2348, %v2347
    %v2356 = vpack.c.b16 %v2349, %v2349
    %v2358 = vsel %vm257, %v2350, 0
    %v2361 = vsel %vm257, %v2351, 0
    %v2364 = vsel %vm257, %v2352, 0
    %v2367 = vsel %vm257, %v2353, 0
    %v2370 = vsel %vm257, %v2354, 0
    %v2373 = vsel %vm257, %v2355, 0
    %v2376 = vsel %vm257, %v2356, 0
    %2378 = vmatpush.bf16.msra.mxu0 0
    %2379 = vmatpush.bf16.msra.mxu0 %v2076
    %2380 = vmatpush.bf16.msra.mxu0 %v2006
    %2381 = vmatpush.bf16.msra.mxu0 %v2005
    %2382 = vmatpush.bf16.msra.mxu0 %v2004
    %2383 = vmatpush.bf16.msra.mxu0 %v2003
    %2384 = vmatpush.bf16.msra.mxu0 %v2002
    %2385 = vmatpush.bf16.msra.mxu0 %v2001
    %2386 = vmatmul.bf16.gmra.mxu0 %v2358
    %v2387 = vpop.f32.mrf.mxu0
    %v2388 = vadd.f32 0.0, %v2387
    %v2389 = vpop.f32.mrf.mxu0
    %v2390 = vadd.f32 0.0, %v2389
    %2391 = vmatmul.bf16.gmra.mxu0 %v2361
    %v2392 = vpop.f32.mrf.mxu0
    %v2393 = vadd.f32 0.0, %v2392
    %v2394 = vpop.f32.mrf.mxu0
    %v2395 = vadd.f32 0.0, %v2394
    %2396 = vmatmul.bf16.gmra.mxu0 %v2364
    %v2397 = vpop.f32.mrf.mxu0
    %v2398 = vadd.f32 0.0, %v2397
    %v2399 = vpop.f32.mrf.mxu0
    %v2400 = vadd.f32 0.0, %v2399
    %2401 = vmatmul.bf16.gmra.mxu0 %v2367
    %v2402 = vpop.f32.mrf.mxu0
    %v2403 = vadd.f32 0.0, %v2402
    %v2404 = vpop.f32.mrf.mxu0
    %v2405 = vadd.f32 0.0, %v2404
    %2406 = vmatmul.bf16.gmra.mxu0 %v2370
    %v2407 = vpop.f32.mrf.mxu0
    %v2408 = vadd.f32 0.0, %v2407
    %v2409 = vpop.f32.mrf.mxu0
    %v2410 = vadd.f32 0.0, %v2409
    %2411 = vmatmul.bf16.gmra.mxu0 %v2373
    %v2412 = vpop.f32.mrf.mxu0
    %v2413 = vadd.f32 0.0, %v2412
    %v2414 = vpop.f32.mrf.mxu0
    %v2415 = vadd.f32 0.0, %v2414
    %2416 = vmatmul.bf16.gmra.mxu0 %v2376
    %v2417 = vpop.f32.mrf.mxu0
    %v2418 = vadd.f32 0.0, %v2417
    %v2419 = vpop.f32.mrf.mxu0
    %2420 = vdwg.mxu0
    %2434 = vrot.lane.b32.xlu0 %v2388, 64
    %v2435 = vpop.permute.xlu0 %2434
    %2436 = vrot.lane.b32.xlu0 %v2390, 64
    %v2437 = vpop.permute.xlu0 %2436
    %2438 = vrot.lane.b32.xlu0 %v2393, 64
    %v2439 = vpop.permute.xlu0 %2438
    %2440 = vrot.lane.b32.xlu0 %v2395, 64
    %v2441 = vpop.permute.xlu0 %2440
    %2442 = vrot.lane.b32.xlu0 %v2398, 64
    %v2443 = vpop.permute.xlu0 %2442
    %2444 = vrot.lane.b32.xlu0 %v2400, 64
    %v2445 = vpop.permute.xlu0 %2444
    %2446 = vrot.lane.b32.xlu0 %v2403, 64
    %v2447 = vpop.permute.xlu0 %2446
    %2448 = vrot.lane.b32.xlu0 %v2405, 64
    %v2449 = vpop.permute.xlu0 %2448
    %2450 = vrot.lane.b32.xlu0 %v2408, 64
    %v2451 = vpop.permute.xlu0 %2450
    %2452 = vrot.lane.b32.xlu0 %v2410, 64
    %v2453 = vpop.permute.xlu0 %2452
    %2454 = vrot.lane.b32.xlu0 %v2413, 64
    %v2455 = vpop.permute.xlu0 %2454
    %2456 = vrot.lane.b32.xlu0 %v2415, 64
    %v2457 = vpop.permute.xlu0 %2456
    %2458 = vrot.lane.b32.xlu0 %v2418, 64
    %v2459 = vpop.permute.xlu0 %2458
    %vm2473 = vcmask 785920
    %2474 = vst.msk [vmem:[#allocation4] sm:$0xff] %vm2473, %v2435
    %2475 = vst.msk [vmem:[#allocation4 + $0x18] sm:$0xff] %vm2473, %v2437
    %2476 = vst.msk [vmem:[#allocation4 + $0x30] sm:$0xff] %vm2473, %v2439
    %2477 = vst.msk [vmem:[#allocation4 + $0x48] sm:$0xff] %vm2473, %v2441
    %2478 = vst.msk [vmem:[#allocation4 + $0x60] sm:$0xff] %vm2473, %v2443
    %2479 = vst.msk [vmem:[#allocation4 + $0x78] sm:$0xff] %vm2473, %v2445
    %2480 = vst.msk [vmem:[#allocation4 + $0x90] sm:$0xff] %vm2473, %v2447
    %2481 = vst.msk [vmem:[#allocation4 + $0xa8] sm:$0xff] %vm2473, %v2449
    %2482 = vst.msk [vmem:[#allocation4 + $0xc0] sm:$0xff] %vm2473, %v2451
    %2483 = vst.msk [vmem:[#allocation4 + $0xd8] sm:$0xff] %vm2473, %v2453
    %2484 = vst.msk [vmem:[#allocation4 + $0xf0] sm:$0xff] %vm2473, %v2455
    %2485 = vst.msk [vmem:[#allocation4 + $0x108] sm:$0xff] %vm2473, %v2457
    %vm2486 = vcmask 779776
    %2487 = vst.msk [vmem:[#allocation4 + $0x120] sm:$0x3] %vm2486, %v2459
    %v2488 = vld [vmem:[%s695] sm:$0xf]
    %v2489 = vld [vmem:[%s695 + $0x4] sm:$0xf]
    %v2490 = vld [vmem:[%s695 + $0x8] sm:$0xf]
    %v2491 = vld [vmem:[%s695 + $0xc] sm:$0xf]
    %v2492 = vld [vmem:[%s695 + $0x10] sm:$0xf]
    %v2493 = vld [vmem:[%s695 + $0x14] sm:$0xf]
    %v2494 = vld [vmem:[%s695 + $0x18] sm:$0xf]
    %v2495 = vld [vmem:[%s695 + $0x1c] sm:$0xf]
    %v2496 = vld [vmem:[%s695 + $0x20] sm:$0xf]
    %v2497 = vld [vmem:[%s695 + $0x24] sm:$0xf]
    %v2498 = vld [vmem:[%s695 + $0x28] sm:$0xf]
    %v2499 = vld [vmem:[%s695 + $0x2c] sm:$0xf]
    %v2500 = vld [vmem:[%s695 + $0x30] sm:$0x1]
    %v2514 = vunpack.c.l.b16 %v2488
    %v2515 = vunpack.c.l.b16 %v2489
    %v2516 = vunpack.c.l.b16 %v2490
    %v2517 = vunpack.c.l.b16 %v2491
    %v2518 = vunpack.c.l.b16 %v2492
    %v2519 = vunpack.c.l.b16 %v2493
    %v2520 = vunpack.c.l.b16 %v2494
    %v2521 = vunpack.c.l.b16 %v2495
    %v2522 = vunpack.c.l.b16 %v2496
    %v2523 = vunpack.c.l.b16 %v2497
    %v2524 = vunpack.c.l.b16 %v2498
    %v2525 = vunpack.c.l.b16 %v2499
    %v2526 = vunpack.c.l.b16 %v2500
    %v2527 = vpack.c.b16 %v2515, %v2514
    %v2528 = vpack.c.b16 %v2517, %v2516
    %v2529 = vpack.c.b16 %v2519, %v2518
    %v2530 = vpack.c.b16 %v2521, %v2520
    %v2531 = vpack.c.b16 %v2523, %v2522
    %v2532 = vpack.c.b16 %v2525, %v2524
    %v2533 = vpack.c.b16 %v2526, %v2526
    %v2535 = vsel %vm257, %v2527, 0
    %v2538 = vsel %vm257, %v2528, 0
    %v2541 = vsel %vm257, %v2529, 0
    %v2544 = vsel %vm257, %v2530, 0
    %v2547 = vsel %vm257, %v2531, 0
    %v2550 = vsel %vm257, %v2532, 0
    %v2553 = vsel %vm257, %v2533, 0
    %2555 = vmatpush.bf16.msra.mxu0 0
    %2556 = vmatpush.bf16.msra.mxu0 %v2076
    %2557 = vmatpush.bf16.msra.mxu0 %v2006
    %2558 = vmatpush.bf16.msra.mxu0 %v2005
    %2559 = vmatpush.bf16.msra.mxu0 %v2004
    %2560 = vmatpush.bf16.msra.mxu0 %v2003
    %2561 = vmatpush.bf16.msra.mxu0 %v2002
    %2562 = vmatpush.bf16.msra.mxu0 %v2001
    %2563 = vmatmul.bf16.gmra.mxu0 %v2535
    %v2564 = vpop.f32.mrf.mxu0
    %v2565 = vadd.f32 0.0, %v2564
    %v2566 = vpop.f32.mrf.mxu0
    %v2567 = vadd.f32 0.0, %v2566
    %2568 = vmatmul.bf16.gmra.mxu0 %v2538
    %v2569 = vpop.f32.mrf.mxu0
    %v2570 = vadd.f32 0.0, %v2569
    %v2571 = vpop.f32.mrf.mxu0
    %v2572 = vadd.f32 0.0, %v2571
    %2573 = vmatmul.bf16.gmra.mxu0 %v2541
    %v2574 = vpop.f32.mrf.mxu0
    %v2575 = vadd.f32 0.0, %v2574
    %v2576 = vpop.f32.mrf.mxu0
    %v2577 = vadd.f32 0.0, %v2576
    %2578 = vmatmul.bf16.gmra.mxu0 %v2544
    %v2579 = vpop.f32.mrf.mxu0
    %v2580 = vadd.f32 0.0, %v2579
    %v2581 = vpop.f32.mrf.mxu0
    %v2582 = vadd.f32 0.0, %v2581
    %2583 = vmatmul.bf16.gmra.mxu0 %v2547
    %v2584 = vpop.f32.mrf.mxu0
    %v2585 = vadd.f32 0.0, %v2584
    %v2586 = vpop.f32.mrf.mxu0
    %v2587 = vadd.f32 0.0, %v2586
    %2588 = vmatmul.bf16.gmra.mxu0 %v2550
    %v2589 = vpop.f32.mrf.mxu0
    %v2590 = vadd.f32 0.0, %v2589
    %v2591 = vpop.f32.mrf.mxu0
    %v2592 = vadd.f32 0.0, %v2591
    %2593 = vmatmul.bf16.gmra.mxu0 %v2553
    %v2594 = vpop.f32.mrf.mxu0
    %v2595 = vadd.f32 0.0, %v2594
    %v2596 = vpop.f32.mrf.mxu0
    %2597 = vdwg.mxu0
    %2611 = vrot.lane.b32.xlu0 %v2565, 96
    %v2612 = vpop.permute.xlu0 %2611
    %2613 = vrot.lane.b32.xlu0 %v2567, 96
    %v2614 = vpop.permute.xlu0 %2613
    %2615 = vrot.lane.b32.xlu0 %v2570, 96
    %v2616 = vpop.permute.xlu0 %2615
    %2617 = vrot.lane.b32.xlu0 %v2572, 96
    %v2618 = vpop.permute.xlu0 %2617
    %2619 = vrot.lane.b32.xlu0 %v2575, 96
    %v2620 = vpop.permute.xlu0 %2619
    %2621 = vrot.lane.b32.xlu0 %v2577, 96
    %v2622 = vpop.permute.xlu0 %2621
    %2623 = vrot.lane.b32.xlu0 %v2580, 96
    %v2624 = vpop.permute.xlu0 %2623
    %2625 = vrot.lane.b32.xlu0 %v2582, 96
    %v2626 = vpop.permute.xlu0 %2625
    %2627 = vrot.lane.b32.xlu0 %v2585, 96
    %v2628 = vpop.permute.xlu0 %2627
    %2629 = vrot.lane.b32.xlu0 %v2587, 96
    %v2630 = vpop.permute.xlu0 %2629
    %2631 = vrot.lane.b32.xlu0 %v2590, 96
    %v2632 = vpop.permute.xlu0 %2631
    %2633 = vrot.lane.b32.xlu0 %v2592, 96
    %v2634 = vpop.permute.xlu0 %2633
    %2635 = vrot.lane.b32.xlu0 %v2595, 96
    %v2636 = vpop.permute.xlu0 %2635
    %vm2650 = vcmask 1048320
    %2651 = vst.msk [vmem:[#allocation4] sm:$0xff] %vm2650, %v2612
    %2652 = vst.msk [vmem:[#allocation4 + $0x18] sm:$0xff] %vm2650, %v2614
    %2653 = vst.msk [vmem:[#allocation4 + $0x30] sm:$0xff] %vm2650, %v2616
    %2654 = vst.msk [vmem:[#allocation4 + $0x48] sm:$0xff] %vm2650, %v2618
    %2655 = vst.msk [vmem:[#allocation4 + $0x60] sm:$0xff] %vm2650, %v2620
    %2656 = vst.msk [vmem:[#allocation4 + $0x78] sm:$0xff] %vm2650, %v2622
    %2657 = vst.msk [vmem:[#allocation4 + $0x90] sm:$0xff] %vm2650, %v2624
    %2658 = vst.msk [vmem:[#allocation4 + $0xa8] sm:$0xff] %vm2650, %v2626
    %2659 = vst.msk [vmem:[#allocation4 + $0xc0] sm:$0xff] %vm2650, %v2628
    %2660 = vst.msk [vmem:[#allocation4 + $0xd8] sm:$0xff] %vm2650, %v2630
    %2661 = vst.msk [vmem:[#allocation4 + $0xf0] sm:$0xff] %vm2650, %v2632
    %2662 = vst.msk [vmem:[#allocation4 + $0x108] sm:$0xff] %vm2650, %v2634
    %vm2663 = vcmask 1042176
    %2664 = vst.msk [vmem:[#allocation4 + $0x120] sm:$0x3] %vm2663, %v2636
    %v2665 = vld [vmem:[%s873] sm:$0xf]
    %v2666 = vld [vmem:[%s873 + $0x4] sm:$0xf]
    %v2667 = vld [vmem:[%s873 + $0x8] sm:$0xf]
    %v2668 = vld [vmem:[%s873 + $0xc] sm:$0xf]
    %v2669 = vld [vmem:[%s873 + $0x10] sm:$0xf]
    %v2670 = vld [vmem:[%s873 + $0x14] sm:$0xf]
    %v2671 = vld [vmem:[%s873 + $0x18] sm:$0xf]
    %v2672 = vld [vmem:[%s873 + $0x1c] sm:$0xf]
    %v2673 = vld [vmem:[%s873 + $0x20] sm:$0xf]
    %v2674 = vld [vmem:[%s873 + $0x24] sm:$0xf]
    %v2675 = vld [vmem:[%s873 + $0x28] sm:$0xf]
    %v2676 = vld [vmem:[%s873 + $0x2c] sm:$0xf]
    %v2677 = vld [vmem:[%s873 + $0x30] sm:$0x1]
    %v2691 = vunpack.c.l.b16 %v2665
    %v2692 = vunpack.c.l.b16 %v2666
    %v2693 = vunpack.c.l.b16 %v2667
    %v2694 = vunpack.c.l.b16 %v2668
    %v2695 = vunpack.c.l.b16 %v2669
    %v2696 = vunpack.c.l.b16 %v2670
    %v2697 = vunpack.c.l.b16 %v2671
    %v2698 = vunpack.c.l.b16 %v2672
    %v2699 = vunpack.c.l.b16 %v2673
    %v2700 = vunpack.c.l.b16 %v2674
    %v2701 = vunpack.c.l.b16 %v2675
    %v2702 = vunpack.c.l.b16 %v2676
    %v2703 = vunpack.c.l.b16 %v2677
    %v2704 = vpack.c.b16 %v2692, %v2691
    %v2705 = vpack.c.b16 %v2694, %v2693
    %v2706 = vpack.c.b16 %v2696, %v2695
    %v2707 = vpack.c.b16 %v2698, %v2697
    %v2708 = vpack.c.b16 %v2700, %v2699
    %v2709 = vpack.c.b16 %v2702, %v2701
    %v2710 = vpack.c.b16 %v2703, %v2703
    %v2712 = vsel %vm257, %v2704, 0
    %v2715 = vsel %vm257, %v2705, 0
    %v2718 = vsel %vm257, %v2706, 0
    %v2721 = vsel %vm257, %v2707, 0
    %v2724 = vsel %vm257, %v2708, 0
    %v2727 = vsel %vm257, %v2709, 0
    %v2730 = vsel %vm257, %v2710, 0
    %2732 = vmatpush.bf16.msra.mxu0 0
    %2733 = vmatpush.bf16.msra.mxu0 %v2076
    %2734 = vmatpush.bf16.msra.mxu0 %v2006
    %2735 = vmatpush.bf16.msra.mxu0 %v2005
    %2736 = vmatpush.bf16.msra.mxu0 %v2004
    %2737 = vmatpush.bf16.msra.mxu0 %v2003
    %2738 = vmatpush.bf16.msra.mxu0 %v2002
    %2739 = vmatpush.bf16.msra.mxu0 %v2001
    %2740 = vmatmul.bf16.gmra.mxu0 %v2712
    %v2741 = vpop.f32.mrf.mxu0
    %v2742 = vadd.f32 0.0, %v2741
    %v2743 = vpop.f32.mrf.mxu0
    %v2744 = vadd.f32 0.0, %v2743
    %2745 = vmatmul.bf16.gmra.mxu0 %v2715
    %v2746 = vpop.f32.mrf.mxu0
    %v2747 = vadd.f32 0.0, %v2746
    %v2748 = vpop.f32.mrf.mxu0
    %v2749 = vadd.f32 0.0, %v2748
    %2750 = vmatmul.bf16.gmra.mxu0 %v2718
    %v2751 = vpop.f32.mrf.mxu0
    %v2752 = vadd.f32 0.0, %v2751
    %v2753 = vpop.f32.mrf.mxu0
    %v2754 = vadd.f32 0.0, %v2753
    %2755 = vmatmul.bf16.gmra.mxu0 %v2721
    %v2756 = vpop.f32.mrf.mxu0
    %v2757 = vadd.f32 0.0, %v2756
    %v2758 = vpop.f32.mrf.mxu0
    %v2759 = vadd.f32 0.0, %v2758
    %2760 = vmatmul.bf16.gmra.mxu0 %v2724
    %v2761 = vpop.f32.mrf.mxu0
    %v2762 = vadd.f32 0.0, %v2761
    %v2763 = vpop.f32.mrf.mxu0
    %v2764 = vadd.f32 0.0, %v2763
    %2765 = vmatmul.bf16.gmra.mxu0 %v2727
    %v2766 = vpop.f32.mrf.mxu0
    %v2767 = vadd.f32 0.0, %v2766
    %v2768 = vpop.f32.mrf.mxu0
    %v2769 = vadd.f32 0.0, %v2768
    %2770 = vmatmul.bf16.gmra.mxu0 %v2730
    %v2771 = vpop.f32.mrf.mxu0
    %v2772 = vadd.f32 0.0, %v2771
    %v2773 = vpop.f32.mrf.mxu0
    %2774 = vdwg.mxu0
    %2775 = vst.msk [vmem:[#allocation4 + $0x8] sm:$0xff] %vm174, %v2742
    %2776 = vst.msk [vmem:[#allocation4 + $0x20] sm:$0xff] %vm174, %v2744
    %2777 = vst.msk [vmem:[#allocation4 + $0x38] sm:$0xff] %vm174, %v2747
    %2778 = vst.msk [vmem:[#allocation4 + $0x50] sm:$0xff] %vm174, %v2749
    %2779 = vst.msk [vmem:[#allocation4 + $0x68] sm:$0xff] %vm174, %v2752
    %2780 = vst.msk [vmem:[#allocation4 + $0x80] sm:$0xff] %vm174, %v2754
    %2781 = vst.msk [vmem:[#allocation4 + $0x98] sm:$0xff] %vm174, %v2757
    %2782 = vst.msk [vmem:[#allocation4 + $0xb0] sm:$0xff] %vm174, %v2759
    %2783 = vst.msk [vmem:[#allocation4 + $0xc8] sm:$0xff] %vm174, %v2762
    %2784 = vst.msk [vmem:[#allocation4 + $0xe0] sm:$0xff] %vm174, %v2764
    %2785 = vst.msk [vmem:[#allocation4 + $0xf8] sm:$0xff] %vm174, %v2767
    %2786 = vst.msk [vmem:[#allocation4 + $0x110] sm:$0xff] %vm174, %v2769
    %2787 = vst.msk [vmem:[#allocation4 + $0x128] sm:$0x3] %vm187, %v2772
    %v2788 = vld [vmem:[%s1051] sm:$0xf]
    %v2789 = vld [vmem:[%s1051 + $0x4] sm:$0xf]
    %v2790 = vld [vmem:[%s1051 + $0x8] sm:$0xf]
    %v2791 = vld [vmem:[%s1051 + $0xc] sm:$0xf]
    %v2792 = vld [vmem:[%s1051 + $0x10] sm:$0xf]
    %v2793 = vld [vmem:[%s1051 + $0x14] sm:$0xf]
    %v2794 = vld [vmem:[%s1051 + $0x18] sm:$0xf]
    %v2795 = vld [vmem:[%s1051 + $0x1c] sm:$0xf]
    %v2796 = vld [vmem:[%s1051 + $0x20] sm:$0xf]
    %v2797 = vld [vmem:[%s1051 + $0x24] sm:$0xf]
    %v2798 = vld [vmem:[%s1051 + $0x28] sm:$0xf]
    %v2799 = vld [vmem:[%s1051 + $0x2c] sm:$0xf]
    %v2800 = vld [vmem:[%s1051 + $0x30] sm:$0x1]
    %v2814 = vunpack.c.l.b16 %v2788
    %v2815 = vunpack.c.l.b16 %v2789
    %v2816 = vunpack.c.l.b16 %v2790
    %v2817 = vunpack.c.l.b16 %v2791
    %v2818 = vunpack.c.l.b16 %v2792
    %v2819 = vunpack.c.l.b16 %v2793
    %v2820 = vunpack.c.l.b16 %v2794
    %v2821 = vunpack.c.l.b16 %v2795
    %v2822 = vunpack.c.l.b16 %v2796
    %v2823 = vunpack.c.l.b16 %v2797
    %v2824 = vunpack.c.l.b16 %v2798
    %v2825 = vunpack.c.l.b16 %v2799
    %v2826 = vunpack.c.l.b16 %v2800
    %v2827 = vpack.c.b16 %v2815, %v2814
    %v2828 = vpack.c.b16 %v2817, %v2816
    %v2829 = vpack.c.b16 %v2819, %v2818
    %v2830 = vpack.c.b16 %v2821, %v2820
    %v2831 = vpack.c.b16 %v2823, %v2822
    %v2832 = vpack.c.b16 %v2825, %v2824
    %v2833 = vpack.c.b16 %v2826, %v2826
    %v2835 = vsel %vm257, %v2827, 0
    %v2838 = vsel %vm257, %v2828, 0
    %v2841 = vsel %vm257, %v2829, 0
    %v2844 = vsel %vm257, %v2830, 0
    %v2847 = vsel %vm257, %v2831, 0
    %v2850 = vsel %vm257, %v2832, 0
    %v2853 = vsel %vm257, %v2833, 0
    %2855 = vmatpush.bf16.msra.mxu0 0
    %2856 = vmatpush.bf16.msra.mxu0 %v2076
    %2857 = vmatpush.bf16.msra.mxu0 %v2006
    %2858 = vmatpush.bf16.msra.mxu0 %v2005
    %2859 = vmatpush.bf16.msra.mxu0 %v2004
    %2860 = vmatpush.bf16.msra.mxu0 %v2003
    %2861 = vmatpush.bf16.msra.mxu0 %v2002
    %2862 = vmatpush.bf16.msra.mxu0 %v2001
    %2863 = vmatmul.bf16.gmra.mxu0 %v2835
    %v2864 = vpop.f32.mrf.mxu0
    %v2865 = vadd.f32 0.0, %v2864
    %v2866 = vpop.f32.mrf.mxu0
    %v2867 = vadd.f32 0.0, %v2866
    %2868 = vmatmul.bf16.gmra.mxu0 %v2838
    %v2869 = vpop.f32.mrf.mxu0
    %v2870 = vadd.f32 0.0, %v2869
    %v2871 = vpop.f32.mrf.mxu0
    %v2872 = vadd.f32 0.0, %v2871
    %2873 = vmatmul.bf16.gmra.mxu0 %v2841
    %v2874 = vpop.f32.mrf.mxu0
    %v2875 = vadd.f32 0.0, %v2874
    %v2876 = vpop.f32.mrf.mxu0
    %v2877 = vadd.f32 0.0, %v2876
    %2878 = vmatmul.bf16.gmra.mxu0 %v2844
    %v2879 = vpop.f32.mrf.mxu0
    %v2880 = vadd.f32 0.0, %v2879
    %v2881 = vpop.f32.mrf.mxu0
    %v2882 = vadd.f32 0.0, %v2881
    %2883 = vmatmul.bf16.gmra.mxu0 %v2847
    %v2884 = vpop.f32.mrf.mxu0
    %v2885 = vadd.f32 0.0, %v2884
    %v2886 = vpop.f32.mrf.mxu0
    %v2887 = vadd.f32 0.0, %v2886
    %2888 = vmatmul.bf16.gmra.mxu0 %v2850
    %v2889 = vpop.f32.mrf.mxu0
    %v2890 = vadd.f32 0.0, %v2889
    %v2891 = vpop.f32.mrf.mxu0
    %v2892 = vadd.f32 0.0, %v2891
    %2893 = vmatmul.bf16.gmra.mxu0 %v2853
    %v2894 = vpop.f32.mrf.mxu0
    %v2895 = vadd.f32 0.0, %v2894
    %v2896 = vpop.f32.mrf.mxu0
    %2897 = vdwg.mxu0
    %2911 = vrot.lane.b32.xlu0 %v2865, 32
    %v2912 = vpop.permute.xlu0 %2911
    %2913 = vrot.lane.b32.xlu0 %v2867, 32
    %v2914 = vpop.permute.xlu0 %2913
    %2915 = vrot.lane.b32.xlu0 %v2870, 32
    %v2916 = vpop.permute.xlu0 %2915
    %2917 = vrot.lane.b32.xlu0 %v2872, 32
    %v2918 = vpop.permute.xlu0 %2917
    %2919 = vrot.lane.b32.xlu0 %v2875, 32
    %v2920 = vpop.permute.xlu0 %2919
    %2921 = vrot.lane.b32.xlu0 %v2877, 32
    %v2922 = vpop.permute.xlu0 %2921
    %2923 = vrot.lane.b32.xlu0 %v2880, 32
    %v2924 = vpop.permute.xlu0 %2923
    %2925 = vrot.lane.b32.xlu0 %v2882, 32
    %v2926 = vpop.permute.xlu0 %2925
    %2927 = vrot.lane.b32.xlu0 %v2885, 32
    %v2928 = vpop.permute.xlu0 %2927
    %2929 = vrot.lane.b32.xlu0 %v2887, 32
    %v2930 = vpop.permute.xlu0 %2929
    %2931 = vrot.lane.b32.xlu0 %v2890, 32
    %v2932 = vpop.permute.xlu0 %2931
    %2933 = vrot.lane.b32.xlu0 %v2892, 32
    %v2934 = vpop.permute.xlu0 %2933
    %2935 = vrot.lane.b32.xlu0 %v2895, 32
    %v2936 = vpop.permute.xlu0 %2935
    %2950 = vst.msk [vmem:[#allocation4 + $0x8] sm:$0xff] %vm2296, %v2912
    %2951 = vst.msk [vmem:[#allocation4 + $0x20] sm:$0xff] %vm2296, %v2914
    %2952 = vst.msk [vmem:[#allocation4 + $0x38] sm:$0xff] %vm2296, %v2916
    %2953 = vst.msk [vmem:[#allocation4 + $0x50] sm:$0xff] %vm2296, %v2918
    %2954 = vst.msk [vmem:[#allocation4 + $0x68] sm:$0xff] %vm2296, %v2920
    %2955 = vst.msk [vmem:[#allocation4 + $0x80] sm:$0xff] %vm2296, %v2922
    %2956 = vst.msk [vmem:[#allocation4 + $0x98] sm:$0xff] %vm2296, %v2924
    %2957 = vst.msk [vmem:[#allocation4 + $0xb0] sm:$0xff] %vm2296, %v2926
    %2958 = vst.msk [vmem:[#allocation4 + $0xc8] sm:$0xff] %vm2296, %v2928
    %2959 = vst.msk [vmem:[#allocation4 + $0xe0] sm:$0xff] %vm2296, %v2930
    %2960 = vst.msk [vmem:[#allocation4 + $0xf8] sm:$0xff] %vm2296, %v2932
    %2961 = vst.msk [vmem:[#allocation4 + $0x110] sm:$0xff] %vm2296, %v2934
    %2962 = vst.msk [vmem:[#allocation4 + $0x128] sm:$0x3] %vm2309, %v2936
    %v2963 = vld [vmem:[%s1229] sm:$0xf]
    %v2964 = vld [vmem:[%s1229 + $0x4] sm:$0xf]
    %v2965 = vld [vmem:[%s1229 + $0x8] sm:$0xf]
    %v2966 = vld [vmem:[%s1229 + $0xc] sm:$0xf]
    %v2967 = vld [vmem:[%s1229 + $0x10] sm:$0xf]
    %v2968 = vld [vmem:[%s1229 + $0x14] sm:$0xf]
    %v2969 = vld [vmem:[%s1229 + $0x18] sm:$0xf]
    %v2970 = vld [vmem:[%s1229 + $0x1c] sm:$0xf]
    %v2971 = vld [vmem:[%s1229 + $0x20] sm:$0xf]
    %v2972 = vld [vmem:[%s1229 + $0x24] sm:$0xf]
    %v2973 = vld [vmem:[%s1229 + $0x28] sm:$0xf]
    %v2974 = vld [vmem:[%s1229 + $0x2c] sm:$0xf]
    %v2975 = vld [vmem:[%s1229 + $0x30] sm:$0x1]
    %v2989 = vunpack.c.l.b16 %v2963
    %v2990 = vunpack.c.l.b16 %v2964
    %v2991 = vunpack.c.l.b16 %v2965
    %v2992 = vunpack.c.l.b16 %v2966
    %v2993 = vunpack.c.l.b16 %v2967
    %v2994 = vunpack.c.l.b16 %v2968
    %v2995 = vunpack.c.l.b16 %v2969
    %v2996 = vunpack.c.l.b16 %v2970
    %v2997 = vunpack.c.l.b16 %v2971
    %v2998 = vunpack.c.l.b16 %v2972
    %v2999 = vunpack.c.l.b16 %v2973
    %v3000 = vunpack.c.l.b16 %v2974
    %v3001 = vunpack.c.l.b16 %v2975
    %v3002 = vpack.c.b16 %v2990, %v2989
    %v3003 = vpack.c.b16 %v2992, %v2991
    %v3004 = vpack.c.b16 %v2994, %v2993
    %v3005 = vpack.c.b16 %v2996, %v2995
    %v3006 = vpack.c.b16 %v2998, %v2997
    %v3007 = vpack.c.b16 %v3000, %v2999
    %v3008 = vpack.c.b16 %v3001, %v3001
    %v3010 = vsel %vm257, %v3002, 0
    %v3013 = vsel %vm257, %v3003, 0
    %v3016 = vsel %vm257, %v3004, 0
    %v3019 = vsel %vm257, %v3005, 0
    %v3022 = vsel %vm257, %v3006, 0
    %v3025 = vsel %vm257, %v3007, 0
    %v3028 = vsel %vm257, %v3008, 0
    %3030 = vmatpush.bf16.msra.mxu0 0
    %3031 = vmatpush.bf16.msra.mxu0 %v2076
    %3032 = vmatpush.bf16.msra.mxu0 %v2006
    %3033 = vmatpush.bf16.msra.mxu0 %v2005
    %3034 = vmatpush.bf16.msra.mxu0 %v2004
    %3035 = vmatpush.bf16.msra.mxu0 %v2003
    %3036 = vmatpush.bf16.msra.mxu0 %v2002
    %3037 = vmatpush.bf16.msra.mxu0 %v2001
    %3038 = vmatmul.bf16.gmra.mxu0 %v3010
    %v3039 = vpop.f32.mrf.mxu0
    %v3040 = vadd.f32 0.0, %v3039
    %v3041 = vpop.f32.mrf.mxu0
    %v3042 = vadd.f32 0.0, %v3041
    %3043 = vmatmul.bf16.gmra.mxu0 %v3013
    %v3044 = vpop.f32.mrf.mxu0
    %v3045 = vadd.f32 0.0, %v3044
    %v3046 = vpop.f32.mrf.mxu0
    %v3047 = vadd.f32 0.0, %v3046
    %3048 = vmatmul.bf16.gmra.mxu0 %v3016
    %v3049 = vpop.f32.mrf.mxu0
    %v3050 = vadd.f32 0.0, %v3049
    %v3051 = vpop.f32.mrf.mxu0
    %v3052 = vadd.f32 0.0, %v3051
    %3053 = vmatmul.bf16.gmra.mxu0 %v3019
    %v3054 = vpop.f32.mrf.mxu0
    %v3055 = vadd.f32 0.0, %v3054
    %v3056 = vpop.f32.mrf.mxu0
    %v3057 = vadd.f32 0.0, %v3056
    %3058 = vmatmul.bf16.gmra.mxu0 %v3022
    %v3059 = vpop.f32.mrf.mxu0
    %v3060 = vadd.f32 0.0, %v3059
    %v3061 = vpop.f32.mrf.mxu0
    %v3062 = vadd.f32 0.0, %v3061
    %3063 = vmatmul.bf16.gmra.mxu0 %v3025
    %v3064 = vpop.f32.mrf.mxu0
    %v3065 = vadd.f32 0.0, %v3064
    %v3066 = vpop.f32.mrf.mxu0
    %v3067 = vadd.f32 0.0, %v3066
    %3068 = vmatmul.bf16.gmra.mxu0 %v3028
    %v3069 = vpop.f32.mrf.mxu0
    %v3070 = vadd.f32 0.0, %v3069
    %v3071 = vpop.f32.mrf.mxu0
    %3072 = vdwg.mxu0
    %3086 = vrot.lane.b32.xlu0 %v3040, 64
    %v3087 = vpop.permute.xlu0 %3086
    %3088 = vrot.lane.b32.xlu0 %v3042, 64
    %v3089 = vpop.permute.xlu0 %3088
    %3090 = vrot.lane.b32.xlu0 %v3045, 64
    %v3091 = vpop.permute.xlu0 %3090
    %3092 = vrot.lane.b32.xlu0 %v3047, 64
    %v3093 = vpop.permute.xlu0 %3092
    %3094 = vrot.lane.b32.xlu0 %v3050, 64
    %v3095 = vpop.permute.xlu0 %3094
    %3096 = vrot.lane.b32.xlu0 %v3052, 64
    %v3097 = vpop.permute.xlu0 %3096
    %3098 = vrot.lane.b32.xlu0 %v3055, 64
    %v3099 = vpop.permute.xlu0 %3098
    %3100 = vrot.lane.b32.xlu0 %v3057, 64
    %v3101 = vpop.permute.xlu0 %3100
    %3102 = vrot.lane.b32.xlu0 %v3060, 64
    %v3103 = vpop.permute.xlu0 %3102
    %3104 = vrot.lane.b32.xlu0 %v3062, 64
    %v3105 = vpop.permute.xlu0 %3104
    %3106 = vrot.lane.b32.xlu0 %v3065, 64
    %v3107 = vpop.permute.xlu0 %3106
    %3108 = vrot.lane.b32.xlu0 %v3067, 64
    %v3109 = vpop.permute.xlu0 %3108
    %3110 = vrot.lane.b32.xlu0 %v3070, 64
    %v3111 = vpop.permute.xlu0 %3110
    %3125 = vst.msk [vmem:[#allocation4 + $0x8] sm:$0xff] %vm2473, %v3087
    %3126 = vst.msk [vmem:[#allocation4 + $0x20] sm:$0xff] %vm2473, %v3089
    %3127 = vst.msk [vmem:[#allocation4 + $0x38] sm:$0xff] %vm2473, %v3091
    %3128 = vst.msk [vmem:[#allocation4 + $0x50] sm:$0xff] %vm2473, %v3093
    %3129 = vst.msk [vmem:[#allocation4 + $0x68] sm:$0xff] %vm2473, %v3095
    %3130 = vst.msk [vmem:[#allocation4 + $0x80] sm:$0xff] %vm2473, %v3097
    %3131 = vst.msk [vmem:[#allocation4 + $0x98] sm:$0xff] %vm2473, %v3099
    %3132 = vst.msk [vmem:[#allocation4 + $0xb0] sm:$0xff] %vm2473, %v3101
    %3133 = vst.msk [vmem:[#allocation4 + $0xc8] sm:$0xff] %vm2473, %v3103
    %3134 = vst.msk [vmem:[#allocation4 + $0xe0] sm:$0xff] %vm2473, %v3105
    %3135 = vst.msk [vmem:[#allocation4 + $0xf8] sm:$0xff] %vm2473, %v3107
    %3136 = vst.msk [vmem:[#allocation4 + $0x110] sm:$0xff] %vm2473, %v3109
    %3137 = vst.msk [vmem:[#allocation4 + $0x128] sm:$0x3] %vm2486, %v3111
    %v3138 = vld [vmem:[%s1407] sm:$0xf]
    %v3139 = vld [vmem:[%s1407 + $0x4] sm:$0xf]
    %v3140 = vld [vmem:[%s1407 + $0x8] sm:$0xf]
    %v3141 = vld [vmem:[%s1407 + $0xc] sm:$0xf]
    %v3142 = vld [vmem:[%s1407 + $0x10] sm:$0xf]
    %v3143 = vld [vmem:[%s1407 + $0x14] sm:$0xf]
    %v3144 = vld [vmem:[%s1407 + $0x18] sm:$0xf]
    %v3145 = vld [vmem:[%s1407 + $0x1c] sm:$0xf]
    %v3146 = vld [vmem:[%s1407 + $0x20] sm:$0xf]
    %v3147 = vld [vmem:[%s1407 + $0x24] sm:$0xf]
    %v3148 = vld [vmem:[%s1407 + $0x28] sm:$0xf]
    %v3149 = vld [vmem:[%s1407 + $0x2c] sm:$0xf]
    %v3150 = vld [vmem:[%s1407 + $0x30] sm:$0x1]
    %v3164 = vunpack.c.l.b16 %v3138
    %v3165 = vunpack.c.l.b16 %v3139
    %v3166 = vunpack.c.l.b16 %v3140
    %v3167 = vunpack.c.l.b16 %v3141
    %v3168 = vunpack.c.l.b16 %v3142
    %v3169 = vunpack.c.l.b16 %v3143
    %v3170 = vunpack.c.l.b16 %v3144
    %v3171 = vunpack.c.l.b16 %v3145
    %v3172 = vunpack.c.l.b16 %v3146
    %v3173 = vunpack.c.l.b16 %v3147
    %v3174 = vunpack.c.l.b16 %v3148
    %v3175 = vunpack.c.l.b16 %v3149
    %v3176 = vunpack.c.l.b16 %v3150
    %v3177 = vpack.c.b16 %v3165, %v3164
    %v3178 = vpack.c.b16 %v3167, %v3166
    %v3179 = vpack.c.b16 %v3169, %v3168
    %v3180 = vpack.c.b16 %v3171, %v3170
    %v3181 = vpack.c.b16 %v3173, %v3172
    %v3182 = vpack.c.b16 %v3175, %v3174
    %v3183 = vpack.c.b16 %v3176, %v3176
    %v3185 = vsel %vm257, %v3177, 0
    %v3188 = vsel %vm257, %v3178, 0
    %v3191 = vsel %vm257, %v3179, 0
    %v3194 = vsel %vm257, %v3180, 0
    %v3197 = vsel %vm257, %v3181, 0
    %v3200 = vsel %vm257, %v3182, 0
    %v3203 = vsel %vm257, %v3183, 0
    %3205 = vmatpush.bf16.msra.mxu0 0
    %3206 = vmatpush.bf16.msra.mxu0 %v2076
    %3207 = vmatpush.bf16.msra.mxu0 %v2006
    %3208 = vmatpush.bf16.msra.mxu0 %v2005
    %3209 = vmatpush.bf16.msra.mxu0 %v2004
    %3210 = vmatpush.bf16.msra.mxu0 %v2003
    %3211 = vmatpush.bf16.msra.mxu0 %v2002
    %3212 = vmatpush.bf16.msra.mxu0 %v2001
    %3213 = vmatmul.bf16.gmra.mxu0 %v3185
    %v3214 = vpop.f32.mrf.mxu0
    %v3215 = vadd.f32 0.0, %v3214
    %v3216 = vpop.f32.mrf.mxu0
    %v3217 = vadd.f32 0.0, %v3216
    %3218 = vmatmul.bf16.gmra.mxu0 %v3188
    %v3219 = vpop.f32.mrf.mxu0
    %v3220 = vadd.f32 0.0, %v3219
    %v3221 = vpop.f32.mrf.mxu0
    %v3222 = vadd.f32 0.0, %v3221
    %3223 = vmatmul.bf16.gmra.mxu0 %v3191
    %v3224 = vpop.f32.mrf.mxu0
    %v3225 = vadd.f32 0.0, %v3224
    %v3226 = vpop.f32.mrf.mxu0
    %v3227 = vadd.f32 0.0, %v3226
    %3228 = vmatmul.bf16.gmra.mxu0 %v3194
    %v3229 = vpop.f32.mrf.mxu0
    %v3230 = vadd.f32 0.0, %v3229
    %v3231 = vpop.f32.mrf.mxu0
    %v3232 = vadd.f32 0.0, %v3231
    %3233 = vmatmul.bf16.gmra.mxu0 %v3197
    %v3234 = vpop.f32.mrf.mxu0
    %v3235 = vadd.f32 0.0, %v3234
    %v3236 = vpop.f32.mrf.mxu0
    %v3237 = vadd.f32 0.0, %v3236
    %3238 = vmatmul.bf16.gmra.mxu0 %v3200
    %v3239 = vpop.f32.mrf.mxu0
    %v3240 = vadd.f32 0.0, %v3239
    %v3241 = vpop.f32.mrf.mxu0
    %v3242 = vadd.f32 0.0, %v3241
    %3243 = vmatmul.bf16.gmra.mxu0 %v3203
    %v3244 = vpop.f32.mrf.mxu0
    %v3245 = vadd.f32 0.0, %v3244
    %v3246 = vpop.f32.mrf.mxu0
    %3247 = vdwg.mxu0
    %3261 = vrot.lane.b32.xlu0 %v3215, 96
    %v3262 = vpop.permute.xlu0 %3261
    %3263 = vrot.lane.b32.xlu0 %v3217, 96
    %v3264 = vpop.permute.xlu0 %3263
    %3265 = vrot.lane.b32.xlu0 %v3220, 96
    %v3266 = vpop.permute.xlu0 %3265
    %3267 = vrot.lane.b32.xlu0 %v3222, 96
    %v3268 = vpop.permute.xlu0 %3267
    %3269 = vrot.lane.b32.xlu0 %v3225, 96
    %v3270 = vpop.permute.xlu0 %3269
    %3271 = vrot.lane.b32.xlu0 %v3227, 96
    %v3272 = vpop.permute.xlu0 %3271
    %3273 = vrot.lane.b32.xlu0 %v3230, 96
    %v3274 = vpop.permute.xlu0 %3273
    %3275 = vrot.lane.b32.xlu0 %v3232, 96
    %v3276 = vpop.permute.xlu0 %3275
    %3277 = vrot.lane.b32.xlu0 %v3235, 96
    %v3278 = vpop.permute.xlu0 %3277
    %3279 = vrot.lane.b32.xlu0 %v3237, 96
    %v3280 = vpop.permute.xlu0 %3279
    %3281 = vrot.lane.b32.xlu0 %v3240, 96
    %v3282 = vpop.permute.xlu0 %3281
    %3283 = vrot.lane.b32.xlu0 %v3242, 96
    %v3284 = vpop.permute.xlu0 %3283
    %3285 = vrot.lane.b32.xlu0 %v3245, 96
    %v3286 = vpop.permute.xlu0 %3285
    %3300 = vst.msk [vmem:[#allocation4 + $0x8] sm:$0xff] %vm2650, %v3262
    %3301 = vst.msk [vmem:[#allocation4 + $0x20] sm:$0xff] %vm2650, %v3264
    %3302 = vst.msk [vmem:[#allocation4 + $0x38] sm:$0xff] %vm2650, %v3266
    %3303 = vst.msk [vmem:[#allocation4 + $0x50] sm:$0xff] %vm2650, %v3268
    %3304 = vst.msk [vmem:[#allocation4 + $0x68] sm:$0xff] %vm2650, %v3270
    %3305 = vst.msk [vmem:[#allocation4 + $0x80] sm:$0xff] %vm2650, %v3272
    %3306 = vst.msk [vmem:[#allocation4 + $0x98] sm:$0xff] %vm2650, %v3274
    %3307 = vst.msk [vmem:[#allocation4 + $0xb0] sm:$0xff] %vm2650, %v3276
    %3308 = vst.msk [vmem:[#allocation4 + $0xc8] sm:$0xff] %vm2650, %v3278
    %3309 = vst.msk [vmem:[#allocation4 + $0xe0] sm:$0xff] %vm2650, %v3280
    %3310 = vst.msk [vmem:[#allocation4 + $0xf8] sm:$0xff] %vm2650, %v3282
    %3311 = vst.msk [vmem:[#allocation4 + $0x110] sm:$0xff] %vm2650, %v3284
    %3312 = vst.msk [vmem:[#allocation4 + $0x128] sm:$0x3] %vm2663, %v3286
    %v3313 = vld [vmem:[%s1585] sm:$0xf]
    %v3314 = vld [vmem:[%s1585 + $0x4] sm:$0xf]
    %v3315 = vld [vmem:[%s1585 + $0x8] sm:$0xf]
    %v3316 = vld [vmem:[%s1585 + $0xc] sm:$0xf]
    %v3317 = vld [vmem:[%s1585 + $0x10] sm:$0xf]
    %v3318 = vld [vmem:[%s1585 + $0x14] sm:$0xf]
    %v3319 = vld [vmem:[%s1585 + $0x18] sm:$0xf]
    %v3320 = vld [vmem:[%s1585 + $0x1c] sm:$0xf]
    %v3321 = vld [vmem:[%s1585 + $0x20] sm:$0xf]
    %v3322 = vld [vmem:[%s1585 + $0x24] sm:$0xf]
    %v3323 = vld [vmem:[%s1585 + $0x28] sm:$0xf]
    %v3324 = vld [vmem:[%s1585 + $0x2c] sm:$0xf]
    %v3325 = vld [vmem:[%s1585 + $0x30] sm:$0x1]
    %v3339 = vunpack.c.l.b16 %v3313
    %v3340 = vunpack.c.l.b16 %v3314
    %v3341 = vunpack.c.l.b16 %v3315
    %v3342 = vunpack.c.l.b16 %v3316
    %v3343 = vunpack.c.l.b16 %v3317
    %v3344 = vunpack.c.l.b16 %v3318
    %v3345 = vunpack.c.l.b16 %v3319
    %v3346 = vunpack.c.l.b16 %v3320
    %v3347 = vunpack.c.l.b16 %v3321
    %v3348 = vunpack.c.l.b16 %v3322
    %v3349 = vunpack.c.l.b16 %v3323
    %v3350 = vunpack.c.l.b16 %v3324
    %v3351 = vunpack.c.l.b16 %v3325
    %v3352 = vpack.c.b16 %v3340, %v3339
    %v3353 = vpack.c.b16 %v3342, %v3341
    %v3354 = vpack.c.b16 %v3344, %v3343
    %v3355 = vpack.c.b16 %v3346, %v3345
    %v3356 = vpack.c.b16 %v3348, %v3347
    %v3357 = vpack.c.b16 %v3350, %v3349
    %v3358 = vpack.c.b16 %v3351, %v3351
    %v3360 = vsel %vm257, %v3352, 0
    %v3363 = vsel %vm257, %v3353, 0
    %v3366 = vsel %vm257, %v3354, 0
    %v3369 = vsel %vm257, %v3355, 0
    %v3372 = vsel %vm257, %v3356, 0
    %v3375 = vsel %vm257, %v3357, 0
    %v3378 = vsel %vm257, %v3358, 0
    %3380 = vmatpush.bf16.msra.mxu0 0
    %3381 = vmatpush.bf16.msra.mxu0 %v2076
    %3382 = vmatpush.bf16.msra.mxu0 %v2006
    %3383 = vmatpush.bf16.msra.mxu0 %v2005
    %3384 = vmatpush.bf16.msra.mxu0 %v2004
    %3385 = vmatpush.bf16.msra.mxu0 %v2003
    %3386 = vmatpush.bf16.msra.mxu0 %v2002
    %3387 = vmatpush.bf16.msra.mxu0 %v2001
    %3388 = vmatmul.bf16.gmra.mxu0 %v3360
    %v3389 = vpop.f32.mrf.mxu0
    %v3390 = vadd.f32 0.0, %v3389
    %v3391 = vpop.f32.mrf.mxu0
    %v3392 = vadd.f32 0.0, %v3391
    %3393 = vmatmul.bf16.gmra.mxu0 %v3363
    %v3394 = vpop.f32.mrf.mxu0
    %v3395 = vadd.f32 0.0, %v3394
    %v3396 = vpop.f32.mrf.mxu0
    %v3397 = vadd.f32 0.0, %v3396
    %3398 = vmatmul.bf16.gmra.mxu0 %v3366
    %v3399 = vpop.f32.mrf.mxu0
    %v3400 = vadd.f32 0.0, %v3399
    %v3401 = vpop.f32.mrf.mxu0
    %v3402 = vadd.f32 0.0, %v3401
    %3403 = vmatmul.bf16.gmra.mxu0 %v3369
    %v3404 = vpop.f32.mrf.mxu0
    %v3405 = vadd.f32 0.0, %v3404
    %v3406 = vpop.f32.mrf.mxu0
    %v3407 = vadd.f32 0.0, %v3406
    %3408 = vmatmul.bf16.gmra.mxu0 %v3372
    %v3409 = vpop.f32.mrf.mxu0
    %v3410 = vadd.f32 0.0, %v3409
    %v3411 = vpop.f32.mrf.mxu0
    %v3412 = vadd.f32 0.0, %v3411
    %3413 = vmatmul.bf16.gmra.mxu0 %v3375
    %v3414 = vpop.f32.mrf.mxu0
    %v3415 = vadd.f32 0.0, %v3414
    %v3416 = vpop.f32.mrf.mxu0
    %v3417 = vadd.f32 0.0, %v3416
    %3418 = vmatmul.bf16.gmra.mxu0 %v3378
    %v3419 = vpop.f32.mrf.mxu0
    %v3420 = vadd.f32 0.0, %v3419
    %v3421 = vpop.f32.mrf.mxu0
    %3422 = vdwg.mxu0
    %3423 = vst.msk [vmem:[#allocation4 + $0x10] sm:$0xff] %vm174, %v3390
    %3424 = vst.msk [vmem:[#allocation4 + $0x28] sm:$0xff] %vm174, %v3392
    %3425 = vst.msk [vmem:[#allocation4 + $0x40] sm:$0xff] %vm174, %v3395
    %3426 = vst.msk [vmem:[#allocation4 + $0x58] sm:$0xff] %vm174, %v3397
    %3427 = vst.msk [vmem:[#allocation4 + $0x70] sm:$0xff] %vm174, %v3400
    %3428 = vst.msk [vmem:[#allocation4 + $0x88] sm:$0xff] %vm174, %v3402
    %3429 = vst.msk [vmem:[#allocation4 + $0xa0] sm:$0xff] %vm174, %v3405
    %3430 = vst.msk [vmem:[#allocation4 + $0xb8] sm:$0xff] %vm174, %v3407
    %3431 = vst.msk [vmem:[#allocation4 + $0xd0] sm:$0xff] %vm174, %v3410
    %3432 = vst.msk [vmem:[#allocation4 + $0xe8] sm:$0xff] %vm174, %v3412
    %3433 = vst.msk [vmem:[#allocation4 + $0x100] sm:$0xff] %vm174, %v3415
    %3434 = vst.msk [vmem:[#allocation4 + $0x118] sm:$0xff] %vm174, %v3417
    %3435 = vst.msk [vmem:[#allocation4 + $0x130] sm:$0x3] %vm187, %v3420
    %v3436 = vld [vmem:[#allocation4] sm:$0xff]
    %v3437 = vld [vmem:[#allocation4 + $0x8] sm:$0xff]
    %v3438 = vld [vmem:[#allocation4 + $0x10] sm:$0xff]
    %v3439 = vld [vmem:[#allocation4 + $0x18] sm:$0xff]
    %v3440 = vld [vmem:[#allocation4 + $0x20] sm:$0xff]
    %v3441 = vld [vmem:[#allocation4 + $0x28] sm:$0xff]
    %v3442 = vld [vmem:[#allocation4 + $0x30] sm:$0xff]
    %v3443 = vld [vmem:[#allocation4 + $0x38] sm:$0xff]
    %v3444 = vld [vmem:[#allocation4 + $0x40] sm:$0xff]
    %v3445 = vld [vmem:[#allocation4 + $0x48] sm:$0xff]
    %v3446 = vld [vmem:[#allocation4 + $0x50] sm:$0xff]
    %v3447 = vld [vmem:[#allocation4 + $0x58] sm:$0xff]
    %v3448 = vld [vmem:[#allocation4 + $0x60] sm:$0xff]
    %v3449 = vld [vmem:[#allocation4 + $0x68] sm:$0xff]
    %v3450 = vld [vmem:[#allocation4 + $0x70] sm:$0xff]
    %v3451 = vld [vmem:[#allocation4 + $0x78] sm:$0xff]
    %v3452 = vld [vmem:[#allocation4 + $0x80] sm:$0xff]
    %v3453 = vld [vmem:[#allocation4 + $0x88] sm:$0xff]
    %v3454 = vld [vmem:[#allocation4 + $0x90] sm:$0xff]
    %v3455 = vld [vmem:[#allocation4 + $0x98] sm:$0xff]
    %v3456 = vld [vmem:[#allocation4 + $0xa0] sm:$0xff]
    %v3457 = vld [vmem:[#allocation4 + $0xa8] sm:$0xff]
    %v3458 = vld [vmem:[#allocation4 + $0xb0] sm:$0xff]
    %v3459 = vld [vmem:[#allocation4 + $0xb8] sm:$0xff]
    %v3460 = vld [vmem:[#allocation4 + $0xc0] sm:$0xff]
    %v3461 = vld [vmem:[#allocation4 + $0xc8] sm:$0xff]
    %v3462 = vld [vmem:[#allocation4 + $0xd0] sm:$0xff]
    %v3463 = vld [vmem:[#allocation4 + $0xd8] sm:$0xff]
    %v3464 = vld [vmem:[#allocation4 + $0xe0] sm:$0xff]
    %v3465 = vld [vmem:[#allocation4 + $0xe8] sm:$0xff]
    %v3466 = vld [vmem:[#allocation4 + $0xf0] sm:$0xff]
    %v3467 = vld [vmem:[#allocation4 + $0xf8] sm:$0xff]
    %v3468 = vld [vmem:[#allocation4 + $0x100] sm:$0xff]
    %v3469 = vld [vmem:[#allocation4 + $0x108] sm:$0xff]
    %v3470 = vld [vmem:[#allocation4 + $0x110] sm:$0xff]
    %v3471 = vld [vmem:[#allocation4 + $0x118] sm:$0xff]
    %v3472 = vld [vmem:[#allocation4 + $0x120] sm:$0x3]
    %v3473 = vld [vmem:[#allocation4 + $0x128] sm:$0x3]
    %v3474 = vld [vmem:[#allocation4 + $0x130] sm:$0x3]
    %v3475 = vld [vmem:[%s7] sm:$0xff]
    %v3476 = vld [vmem:[%s7 + $0x8] sm:$0xff]
    %v3477 = vld [vmem:[%s7 + $0x10] sm:$0xff]
    %v3478 = vld [vmem:[%s7 + $0x18] sm:$0xff]
    %v3479 = vld [vmem:[%s7 + $0x20] sm:$0xff]
    %v3480 = vld [vmem:[%s7 + $0x28] sm:$0xff]
    %v3481 = vld [vmem:[%s7 + $0x30] sm:$0xff]
    %v3482 = vld [vmem:[%s7 + $0x38] sm:$0xff]
    %v3483 = vld [vmem:[%s7 + $0x40] sm:$0xff]
    %v3484 = vld [vmem:[%s7 + $0x48] sm:$0xff]
    %v3485 = vld [vmem:[%s7 + $0x50] sm:$0xff]
    %v3486 = vld [vmem:[%s7 + $0x58] sm:$0xff]
    %v3487 = vld [vmem:[%s7 + $0x60] sm:$0xff]
    %v3488 = vld [vmem:[%s7 + $0x68] sm:$0xff]
    %v3489 = vld [vmem:[%s7 + $0x70] sm:$0xff]
    %v3490 = vld [vmem:[%s7 + $0x78] sm:$0xff]
    %v3491 = vld [vmem:[%s7 + $0x80] sm:$0xff]
    %v3492 = vld [vmem:[%s7 + $0x88] sm:$0xff]
    %v3493 = vld [vmem:[%s7 + $0x90] sm:$0xff]
    %v3494 = vld [vmem:[%s7 + $0x98] sm:$0xff]
    %v3495 = vld [vmem:[%s7 + $0xa0] sm:$0xff]
    %v3496 = vld [vmem:[%s7 + $0xa8] sm:$0xff]
    %v3497 = vld [vmem:[%s7 + $0xb0] sm:$0xff]
    %v3498 = vld [vmem:[%s7 + $0xb8] sm:$0xff]
    %v3499 = vld [vmem:[%s7 + $0xc0] sm:$0xff]
    %v3500 = vld [vmem:[%s7 + $0xc8] sm:$0xff]
    %v3501 = vld [vmem:[%s7 + $0xd0] sm:$0xff]
    %v3502 = vld [vmem:[%s7 + $0xd8] sm:$0xff]
    %v3503 = vld [vmem:[%s7 + $0xe0] sm:$0xff]
    %v3504 = vld [vmem:[%s7 + $0xe8] sm:$0xff]
    %v3505 = vld [vmem:[%s7 + $0xf0] sm:$0xff]
    %v3506 = vld [vmem:[%s7 + $0xf8] sm:$0xff]
    %v3507 = vld [vmem:[%s7 + $0x100] sm:$0xff]
    %v3508 = vld [vmem:[%s7 + $0x108] sm:$0xff]
    %v3509 = vld [vmem:[%s7 + $0x110] sm:$0xff]
    %v3510 = vld [vmem:[%s7 + $0x118] sm:$0xff]
    %v3511 = vld [vmem:[%s8] sm:$0x1]
    %v3513 = vperm.slane %v3511, 0
    %v3516 = vsel %vm174, %v3438, 0
    %v3519 = vsel %vm174, %v3441, 0
    %v3522 = vsel %vm174, %v3444, 0
    %v3525 = vsel %vm174, %v3447, 0
    %v3528 = vsel %vm174, %v3450, 0
    %v3531 = vsel %vm174, %v3453, 0
    %v3534 = vsel %vm174, %v3456, 0
    %v3537 = vsel %vm174, %v3459, 0
    %v3540 = vsel %vm174, %v3462, 0
    %v3543 = vsel %vm174, %v3465, 0
    %v3546 = vsel %vm174, %v3468, 0
    %v3549 = vsel %vm174, %v3471, 0
    %v3552 = vsel %vm174, %v3474, 0
    %3554 = vmatpush.msra.mxu0 %v3490
    %3555 = vmatpush.msra.mxu0 %v3489
    %3556 = vmatpush.msra.mxu0 %v3488
    %3557 = vmatpush.msra.mxu0 %v3487
    %3558 = vmatpush.msra.mxu0 %v3486
    %3559 = vmatpush.msra.mxu0 %v3485
    %3560 = vmatpush.msra.mxu0 %v3484
    %3561 = vmatpush.msra.mxu0 %v3483
    %3562 = vmatpush.msra.mxu0 %v3482
    %3563 = vmatpush.msra.mxu0 %v3481
    %3564 = vmatpush.msra.mxu0 %v3480
    %3565 = vmatpush.msra.mxu0 %v3479
    %3566 = vmatpush.msra.mxu0 %v3478
    %3567 = vmatpush.msra.mxu0 %v3477
    %3568 = vmatpush.msra.mxu0 %v3476
    %3569 = vmatpush.msra.mxu0 %v3475
    %3570 = vmatmul.f32.gmra.mxu0 %v3436
    %v3571 = vpop.f32.mrf.mxu0
    %v3572 = vadd.f32 %v3513, %v3571
    %3573 = vmatmul.f32.gmra.mxu0 %v3439
    %v3574 = vpop.f32.mrf.mxu0
    %v3575 = vadd.f32 %v3513, %v3574
    %3576 = vmatmul.f32.gmra.mxu0 %v3442
    %v3577 = vpop.f32.mrf.mxu0
    %v3578 = vadd.f32 %v3513, %v3577
    %3579 = vmatmul.f32.gmra.mxu0 %v3445
    %v3580 = vpop.f32.mrf.mxu0
    %v3581 = vadd.f32 %v3513, %v3580
    %3582 = vmatmul.f32.gmra.mxu0 %v3448
    %v3583 = vpop.f32.mrf.mxu0
    %v3584 = vadd.f32 %v3513, %v3583
    %3585 = vmatmul.f32.gmra.mxu0 %v3451
    %v3586 = vpop.f32.mrf.mxu0
    %v3587 = vadd.f32 %v3513, %v3586
    %3588 = vmatmul.f32.gmra.mxu0 %v3454
    %v3589 = vpop.f32.mrf.mxu0
    %v3590 = vadd.f32 %v3513, %v3589
    %3591 = vmatmul.f32.gmra.mxu0 %v3457
    %v3592 = vpop.f32.mrf.mxu0
    %v3593 = vadd.f32 %v3513, %v3592
    %3594 = vmatmul.f32.gmra.mxu0 %v3460
    %v3595 = vpop.f32.mrf.mxu0
    %v3596 = vadd.f32 %v3513, %v3595
    %3597 = vmatmul.f32.gmra.mxu0 %v3463
    %v3598 = vpop.f32.mrf.mxu0
    %v3599 = vadd.f32 %v3513, %v3598
    %3600 = vmatmul.f32.gmra.mxu0 %v3466
    %v3601 = vpop.f32.mrf.mxu0
    %v3602 = vadd.f32 %v3513, %v3601
    %3603 = vmatmul.f32.gmra.mxu0 %v3469
    %v3604 = vpop.f32.mrf.mxu0
    %v3605 = vadd.f32 %v3513, %v3604
    %3606 = vmatmul.f32.gmra.mxu0 %v3472
    %v3607 = vpop.f32.mrf.mxu0
    %v3608 = vadd.f32 %v3513, %v3607
    %3609 = vdwg.mxu0
    %3610 = vmatpush.msra.mxu0 %v3506
    %3611 = vmatpush.msra.mxu0 %v3505
    %3612 = vmatpush.msra.mxu0 %v3504
    %3613 = vmatpush.msra.mxu0 %v3503
    %3614 = vmatpush.msra.mxu0 %v3502
    %3615 = vmatpush.msra.mxu0 %v3501
    %3616 = vmatpush.msra.mxu0 %v3500
    %3617 = vmatpush.msra.mxu0 %v3499
    %3618 = vmatpush.msra.mxu0 %v3498
    %3619 = vmatpush.msra.mxu0 %v3497
    %3620 = vmatpush.msra.mxu0 %v3496
    %3621 = vmatpush.msra.mxu0 %v3495
    %3622 = vmatpush.msra.mxu0 %v3494
    %3623 = vmatpush.msra.mxu0 %v3493
    %3624 = vmatpush.msra.mxu0 %v3492
    %3625 = vmatpush.msra.mxu0 %v3491
    %3626 = vmatmul.f32.gmra.mxu0 %v3437
    %v3627 = vpop.f32.mrf.mxu0
    %v3628 = vadd.f32 %v3572, %v3627
    %3629 = vmatmul.f32.gmra.mxu0 %v3440
    %v3630 = vpop.f32.mrf.mxu0
    %v3631 = vadd.f32 %v3575, %v3630
    %3632 = vmatmul.f32.gmra.mxu0 %v3443
    %v3633 = vpop.f32.mrf.mxu0
    %v3634 = vadd.f32 %v3578, %v3633
    %3635 = vmatmul.f32.gmra.mxu0 %v3446
    %v3636 = vpop.f32.mrf.mxu0
    %v3637 = vadd.f32 %v3581, %v3636
    %3638 = vmatmul.f32.gmra.mxu0 %v3449
    %v3639 = vpop.f32.mrf.mxu0
    %v3640 = vadd.f32 %v3584, %v3639
    %3641 = vmatmul.f32.gmra.mxu0 %v3452
    %v3642 = vpop.f32.mrf.mxu0
    %v3643 = vadd.f32 %v3587, %v3642
    %3644 = vmatmul.f32.gmra.mxu0 %v3455
    %v3645 = vpop.f32.mrf.mxu0
    %v3646 = vadd.f32 %v3590, %v3645
    %3647 = vmatmul.f32.gmra.mxu0 %v3458
    %v3648 = vpop.f32.mrf.mxu0
    %v3649 = vadd.f32 %v3593, %v3648
    %3650 = vmatmul.f32.gmra.mxu0 %v3461
    %v3651 = vpop.f32.mrf.mxu0
    %v3652 = vadd.f32 %v3596, %v3651
    %3653 = vmatmul.f32.gmra.mxu0 %v3464
    %v3654 = vpop.f32.mrf.mxu0
    %v3655 = vadd.f32 %v3599, %v3654
    %3656 = vmatmul.f32.gmra.mxu0 %v3467
    %v3657 = vpop.f32.mrf.mxu0
    %v3658 = vadd.f32 %v3602, %v3657
    %3659 = vmatmul.f32.gmra.mxu0 %v3470
    %v3660 = vpop.f32.mrf.mxu0
    %v3661 = vadd.f32 %v3605, %v3660
    %3662 = vmatmul.f32.gmra.mxu0 %v3473
    %v3663 = vpop.f32.mrf.mxu0
    %v3664 = vadd.f32 %v3608, %v3663
    %3665 = vdwg.mxu0
    %3666 = vmatpush.msra.mxu0 0.0
    %3667 = vmatpush.msra.mxu0 0.0
    %3668 = vmatpush.msra.mxu0 0.0
    %3669 = vmatpush.msra.mxu0 0.0
    %3670 = vmatpush.msra.mxu0 0.0
    %3671 = vmatpush.msra.mxu0 0.0
    %3672 = vmatpush.msra.mxu0 0.0
    %3673 = vmatpush.msra.mxu0 0.0
    %3674 = vmatpush.msra.mxu0 0.0
    %3675 = vmatpush.msra.mxu0 0.0
    %3676 = vmatpush.msra.mxu0 0.0
    %3677 = vmatpush.msra.mxu0 0.0
    %3678 = vmatpush.msra.mxu0 %v3510
    %3679 = vmatpush.msra.mxu0 %v3509
    %3680 = vmatpush.msra.mxu0 %v3508
    %3681 = vmatpush.msra.mxu0 %v3507
    %3682 = vmatmul.f32.gmra.mxu0 %v3516
    %v3683 = vpop.f32.mrf.mxu0
    %v3684 = vadd.f32 %v3628, %v3683
    %3685 = vmatmul.f32.gmra.mxu0 %v3519
    %v3686 = vpop.f32.mrf.mxu0
    %v3687 = vadd.f32 %v3631, %v3686
    %3688 = vmatmul.f32.gmra.mxu0 %v3522
    %v3689 = vpop.f32.mrf.mxu0
    %v3690 = vadd.f32 %v3634, %v3689
    %3691 = vmatmul.f32.gmra.mxu0 %v3525
    %v3692 = vpop.f32.mrf.mxu0
    %v3693 = vadd.f32 %v3637, %v3692
    %3694 = vmatmul.f32.gmra.mxu0 %v3528
    %v3695 = vpop.f32.mrf.mxu0
    %v3696 = vadd.f32 %v3640, %v3695
    %3697 = vmatmul.f32.gmra.mxu0 %v3531
    %v3698 = vpop.f32.mrf.mxu0
    %v3699 = vadd.f32 %v3643, %v3698
    %3700 = vmatmul.f32.gmra.mxu0 %v3534
    %v3701 = vpop.f32.mrf.mxu0
    %v3702 = vadd.f32 %v3646, %v3701
    %3703 = vmatmul.f32.gmra.mxu0 %v3537
    %v3704 = vpop.f32.mrf.mxu0
    %v3705 = vadd.f32 %v3649, %v3704
    %3706 = vmatmul.f32.gmra.mxu0 %v3540
    %v3707 = vpop.f32.mrf.mxu0
    %v3708 = vadd.f32 %v3652, %v3707
    %3709 = vmatmul.f32.gmra.mxu0 %v3543
    %v3710 = vpop.f32.mrf.mxu0
    %v3711 = vadd.f32 %v3655, %v3710
    %3712 = vmatmul.f32.gmra.mxu0 %v3546
    %v3713 = vpop.f32.mrf.mxu0
    %v3714 = vadd.f32 %v3658, %v3713
    %3715 = vmatmul.f32.gmra.mxu0 %v3549
    %v3716 = vpop.f32.mrf.mxu0
    %v3717 = vadd.f32 %v3661, %v3716
    %3718 = vmatmul.f32.gmra.mxu0 %v3552
    %v3719 = vpop.f32.mrf.mxu0
    %v3720 = vadd.f32 %v3664, %v3719
    %3721 = vdwg.mxu0
    %v3722 = vmax.f32 %v3684, 0.0
    %v3723 = vmax.f32 %v3687, 0.0
    %v3724 = vmax.f32 %v3690, 0.0
    %v3725 = vmax.f32 %v3693, 0.0
    %v3726 = vmax.f32 %v3696, 0.0
    %v3727 = vmax.f32 %v3699, 0.0
    %v3728 = vmax.f32 %v3702, 0.0
    %v3729 = vmax.f32 %v3705, 0.0
    %v3730 = vmax.f32 %v3708, 0.0
    %v3731 = vmax.f32 %v3711, 0.0
    %v3732 = vmax.f32 %v3714, 0.0
    %v3733 = vmax.f32 %v3717, 0.0
    %v3734 = vmax.f32 %v3720, 0.0
    %3748 = vrot.lane.b32.xlu0 %v3722, 24
    %v3749 = vpop.permute.xlu0 %3748
    %3750 = vrot.lane.b32.xlu0 %v3723, 24
    %v3751 = vpop.permute.xlu0 %3750
    %3752 = vrot.lane.b32.xlu0 %v3724, 24
    %v3753 = vpop.permute.xlu0 %3752
    %3754 = vrot.lane.b32.xlu0 %v3725, 24
    %v3755 = vpop.permute.xlu0 %3754
    %3756 = vrot.lane.b32.xlu0 %v3726, 24
    %v3757 = vpop.permute.xlu0 %3756
    %3758 = vrot.lane.b32.xlu0 %v3727, 24
    %v3759 = vpop.permute.xlu0 %3758
    %3760 = vrot.lane.b32.xlu0 %v3728, 24
    %v3761 = vpop.permute.xlu0 %3760
    %3762 = vrot.lane.b32.xlu0 %v3729, 24
    %v3763 = vpop.permute.xlu0 %3762
    %3764 = vrot.lane.b32.xlu0 %v3730, 24
    %v3765 = vpop.permute.xlu0 %3764
    %3766 = vrot.lane.b32.xlu0 %v3731, 24
    %v3767 = vpop.permute.xlu0 %3766
    %3768 = vrot.lane.b32.xlu0 %v3732, 24
    %v3769 = vpop.permute.xlu0 %3768
    %3770 = vrot.lane.b32.xlu0 %v3733, 24
    %v3771 = vpop.permute.xlu0 %3770
    %3772 = vrot.lane.b32.xlu0 %v3734, 24
    %v3773 = vpop.permute.xlu0 %3772
    %vm3787 = vcmask 261312
    %3788 = vst.msk [vmem:[#allocation2] sm:$0xff] %vm3787, %v3749
    %3789 = vst.msk [vmem:[#allocation2 + $0x8] sm:$0xff] %vm3787, %v3751
    %3790 = vst.msk [vmem:[#allocation2 + $0x10] sm:$0xff] %vm3787, %v3753
    %3791 = vst.msk [vmem:[#allocation2 + $0x18] sm:$0xff] %vm3787, %v3755
    %3792 = vst.msk [vmem:[#allocation2 + $0x20] sm:$0xff] %vm3787, %v3757
    %3793 = vst.msk [vmem:[#allocation2 + $0x28] sm:$0xff] %vm3787, %v3759
    %3794 = vst.msk [vmem:[#allocation2 + $0x30] sm:$0xff] %vm3787, %v3761
    %3795 = vst.msk [vmem:[#allocation2 + $0x38] sm:$0xff] %vm3787, %v3763
    %3796 = vst.msk [vmem:[#allocation2 + $0x40] sm:$0xff] %vm3787, %v3765
    %3797 = vst.msk [vmem:[#allocation2 + $0x48] sm:$0xff] %vm3787, %v3767
    %3798 = vst.msk [vmem:[#allocation2 + $0x50] sm:$0xff] %vm3787, %v3769
    %3799 = vst.msk [vmem:[#allocation2 + $0x58] sm:$0xff] %vm3787, %v3771
    %vm3800 = vcmask 255168
    %3801 = vst.msk [vmem:[#allocation2 + $0x60] sm:$0x3] %vm3800, %v3773
    %v3802 = vld [vmem:[#allocation2] sm:$0xff]
    %v3803 = vld [vmem:[#allocation2 + $0x8] sm:$0xff]
    %v3804 = vld [vmem:[#allocation2 + $0x10] sm:$0xff]
    %v3805 = vld [vmem:[#allocation2 + $0x18] sm:$0xff]
    %v3806 = vld [vmem:[#allocation2 + $0x20] sm:$0xff]
    %v3807 = vld [vmem:[#allocation2 + $0x28] sm:$0xff]
    %v3808 = vld [vmem:[#allocation2 + $0x30] sm:$0xff]
    %v3809 = vld [vmem:[#allocation2 + $0x38] sm:$0xff]
    %v3810 = vld [vmem:[#allocation2 + $0x40] sm:$0xff]
    %v3811 = vld [vmem:[#allocation2 + $0x48] sm:$0xff]
    %v3812 = vld [vmem:[#allocation2 + $0x50] sm:$0xff]
    %v3813 = vld [vmem:[#allocation2 + $0x58] sm:$0xff]
    %v3814 = vld [vmem:[#allocation2 + $0x60] sm:$0x3]
    %v3815 = vld [vmem:[%s9] sm:$0x1]
    %v3817 = vperm.slane %v3815, 0
    %v3819 = vmul.f32 %v3802, %v3817
    %v3820 = vmul.f32 %v3803, %v3817
    %v3821 = vmul.f32 %v3804, %v3817
    %v3822 = vmul.f32 %v3805, %v3817
    %v3823 = vmul.f32 %v3806, %v3817
    %v3824 = vmul.f32 %v3807, %v3817
    %v3825 = vmul.f32 %v3808, %v3817
    %v3826 = vmul.f32 %v3809, %v3817
    %v3827 = vmul.f32 %v3810, %v3817
    %v3828 = vmul.f32 %v3811, %v3817
    %v3829 = vmul.f32 %v3812, %v3817
    %v3830 = vmul.f32 %v3813, %v3817
    %v3831 = vmul.f32 %v3814, %v3817
    %v3832 = vld [vmem:[%s10] sm:$0x1]
    %v3834 = vperm.slane %v3832, 0
    %v3836 = vadd.f32 %v3819, %v3834
    %v3837 = vadd.f32 %v3820, %v3834
    %v3838 = vadd.f32 %v3821, %v3834
    %v3839 = vadd.f32 %v3822, %v3834
    %v3840 = vadd.f32 %v3823, %v3834
    %v3841 = vadd.f32 %v3824, %v3834
    %v3842 = vadd.f32 %v3825, %v3834
    %v3843 = vadd.f32 %v3826, %v3834
    %v3844 = vadd.f32 %v3827, %v3834
    %v3845 = vadd.f32 %v3828, %v3834
    %v3846 = vadd.f32 %v3829, %v3834
    %v3847 = vadd.f32 %v3830, %v3834
    %v3848 = vadd.f32 %v3831, %v3834
    %v3849 = vmax.f32 %v3836, 0.0
    %v3850 = vmax.f32 %v3837, 0.0
    %v3851 = vmax.f32 %v3838, 0.0
    %v3852 = vmax.f32 %v3839, 0.0
    %v3853 = vmax.f32 %v3840, 0.0
    %v3854 = vmax.f32 %v3841, 0.0
    %v3855 = vmax.f32 %v3842, 0.0
    %v3856 = vmax.f32 %v3843, 0.0
    %v3857 = vmax.f32 %v3844, 0.0
    %v3858 = vmax.f32 %v3845, 0.0
    %v3859 = vmax.f32 %v3846, 0.0
    %v3860 = vmax.f32 %v3847, 0.0
    %v3861 = vmax.f32 %v3848, 0.0
    %v3862 = vld [vmem:[%s2] sm:$0x3]
    %v3864 = vsel %vm257, %v3862, 0
    %vm3866 = vcmask 1041408
    %v3868 = vsel %vm3866, %v3861, 0
    %3870 = vmatpush.msra.mxu0 0.0
    %3871 = vmatpush.msra.mxu0 0.0
    %3872 = vmatpush.msra.mxu0 0.0
    %3873 = vmatpush.msra.mxu0 %v3868
    %3874 = vmatpush.msra.mxu0 %v3860
    %3875 = vmatpush.msra.mxu0 %v3859
    %3876 = vmatpush.msra.mxu0 %v3858
    %3877 = vmatpush.msra.mxu0 %v3857
    %3878 = vmatpush.msra.mxu0 %v3856
    %3879 = vmatpush.msra.mxu0 %v3855
    %3880 = vmatpush.msra.mxu0 %v3854
    %3881 = vmatpush.msra.mxu0 %v3853
    %3882 = vmatpush.msra.mxu0 %v3852
    %3883 = vmatpush.msra.mxu0 %v3851
    %3884 = vmatpush.msra.mxu0 %v3850
    %3885 = vmatpush.msra.mxu0 %v3849
    %3886 = vmatmul.f32.gmra.mxu0 %v3864
    %v3887 = vpop.f32.mrf.mxu0
    %v3888 = vadd.f32 0.0, %v3887
    %3889 = vdwg.mxu0
    %3890 = vst.msk [vmem:[#allocation5] sm:$0x3] %vm187, %v3888
    // Predicated region
    $region46: #{encoder_forward.1} parent=1 // pred_check
      _
    $region47: #{encoder_forward.1} parent=1 // pred_check_branch
      %3892 = sbr.rel (0) target = $region49
    $region48: #{encoder_forward.1} parent=1 // pred_region
      %3894 = vsyncadd [#allocation6], 0
      %s3896 = sshll.u32 [#allocation5], 4
      %s3897 = int_to_ptr.vmem [resolvable:$true] %s3896
      %s3898 = sshll.u32 %s11, 4
      %s3899 = int_to_ptr.hbm [resolvable:$true] %s3898
      %3901 = dma.vmem_to_hbm [thread:$0]  %s3897, 32, %s3899, [#allocation6]
    $region49: #{encoder_forward.1} parent=1 // pred_fallthru
      _
    // Predicated region
    $region50: #{encoder_forward.1} parent=1 // pred_check
      _
    $region51: #{encoder_forward.1} parent=1 // pred_check_branch
      %3903 = sbr.rel (0) target = $region53
    $region52: #{encoder_forward.1} parent=1 // pred_region
      %3905 = dma.done [#allocation6], 32
    $region53: #{encoder_forward.1} parent=1 // pred_fallthru
      _
    %3906 = vsyncpa [#allocation6], 1

</llo_original>
